<compile_context>
chip_gen: v7x
topology: tpu7x:2x2x1
jax: 0.10.0
libtpu: 0.0.40
codegen_flags: <defaults>
</compile_context>

<pallas_src>
import functools

import jax
import jax.numpy as jnp
from jax.experimental import pallas as pl
from jax.experimental.pallas import tpu as pltpu


def _lca_kernel(x_ref, w_ref, watt_ref, o_ref, *, H, W, bf16_shift):
    """One grid step == one lane-packed group of S samples.

    x_ref    : (1, HW, Cp) f32   S lane-packed samples, lane = s*C + c
    w_ref    : (9*Cp, Cp)  bf16  3x3 conv taps (t = ky*3 + kx), block-diagonal per sample,
                                 stacked along K for a single fused MXU contraction
    watt_ref : (2*Cp, Cp)  f32   folded conv_att centre tap: rows [max-part; avg-part],
                                 column j only sums lanes of j's sample segment
    o_ref    : (1, HW, Cp) f32
    """
    x = x_ref[0]                                            # (HW, Cp) f32
    HW, Cp = x.shape
    # Hoisted cast (fast path): one f32->bf16 conversion instead of nine.
    xs = x.astype(jnp.bfloat16) if bf16_shift else x

    # Flattened position / column index of every sublane row.  The row index is recovered
    # with an exact f32 floor-divide (margin 0.5/W >> fp error), so there is no integer
    # div/mod in-kernel and no precomputed colidx operand (saves an (HW,Cp) i32 DMA).
    pos = jax.lax.broadcasted_iota(jnp.int32, (HW, Cp), 0)
    row = jnp.floor((pos.astype(jnp.float32) + 0.5) * (1.0 / W)).astype(jnp.int32)
    col = pos - row * W

    # Source-side validity masks implementing the conv's zero padding.
    keep_up = pos < (H - 1) * W          # dy = -1: source row H-1 is never read
    keep_dn = pos >= W                   # dy = +1: source row 0   is never read
    keep_lt = col < (W - 1)              # dx = -1: source col W-1 is never read
    keep_rt = col > 0                    # dx = +1: source col 0   is never read

    def tap_mask(dy, dx):                # merged mask -> at most one select per tap
        m = None
        if dy == -1:
            m = keep_up
        elif dy == 1:
            m = keep_dn
        if dx == -1:
            m = keep_lt if m is None else jnp.logical_and(m, keep_lt)
        elif dx == 1:
            m = keep_rt if m is None else jnp.logical_and(m, keep_rt)
        return m

    # Build the nine shifted+masked slabs and contract them with all taps in ONE matmul.
    slabs = []
    for ky in range(3):
        for kx in range(3):
            dy, dx = ky - 1, kx - 1
            m = tap_mask(dy, dx)
            src = xs if m is None else jnp.where(m, xs, 0.0)
            s = dy * W + dx                                 # out[p] reads src[p + s]
            if s != 0:
                src = pltpu.roll(src, shift=(-s) % HW, axis=0)
            slabs.append(src)
    x_cat = jnp.concatenate(slabs, axis=1)                  # (HW, 9*Cp)
    if not bf16_shift:
        x_cat = x_cat.astype(jnp.bfloat16)                  # single cast (safe path)
    conv = jnp.dot(x_cat, w_ref[...],
                   preferred_element_type=jnp.float32)      # (HW, Cp) f32, MXU-accumulated

    # Adaptive max / avg pool over all spatial positions (per lane == per sample-channel).
    c_max = jnp.max(conv, axis=0, keepdims=True)            # (1, Cp)
    c_avg = jnp.sum(conv, axis=0, keepdims=True) * (1.0 / HW)

    # conv_att centre tap folded into one f32 matmul; column j only sums lanes belonging
    # to j's sample, so the result is already the per-lane (per-sample) attention logit.
    pooled = jnp.concatenate([c_max, c_avg], axis=1)        # (1, 2*Cp) f32
    logit = jnp.dot(pooled, watt_ref[...],
                    preferred_element_type=jnp.float32)     # (1, Cp)
    gate = jax.nn.sigmoid(logit)                            # per-lane gate

    o_ref[0] = x * gate


def _pack_params(N, C):
    """Samples-per-lane-group S, group channels Cg, padded lanes Cp, grid size Nb."""
    if C < 128 and 128 % C == 0:
        S = 128 // C                      # lane-pack S samples into the 128 lanes
    else:
        S = 1
    Cg = S * C
    Cp = ((Cg + 127) // 128) * 128
    Nb = -(-N // S)
    return S, Cg, Cp, Nb


@functools.partial(jax.jit, static_argnames=("fast",))
def lca_forward(x_nchw, conv_w, conv_att_w, fast=True):
    """LCA forward. x_nchw: (N,C,H,W) f32, conv_w: (C,C,3,3), conv_att_w: (1,2C,3,3)."""
    N, C, H, W = x_nchw.shape
    HW = H * W
    S, Cg, Cp, Nb = _pack_params(N, C)
    pad_c = Cp - Cg

    # --- pack x: NCHW -> channels-last, S samples per 128-lane group (lane = s*C + c) ---
    x = jnp.transpose(x_nchw, (0, 2, 3, 1)).reshape(N, HW, C)
    x = jnp.pad(x, ((0, Nb * S - N), (0, 0), (0, 0)))        # zero batch-pad samples -> dropped
    x = x.reshape(Nb, S, HW, C).transpose(0, 2, 1, 3).reshape(Nb, HW, Cg)
    x = jnp.pad(x, ((0, 0), (0, 0), (0, pad_c)))             # padded lanes must stay exactly 0

    # --- conv taps: (Cout, Cin, 3, 3) -> block-diagonal per sample -> stacked (9*Cp, Cp) ---
    eye_s = jnp.eye(S, dtype=conv_w.dtype)
    taps = []
    for ky in range(3):
        for kx in range(3):
            wt = jnp.kron(eye_s, conv_w[:, :, ky, kx].T)      # (Cg, Cg), (Cin, Cout) blocks
            taps.append(jnp.pad(wt, ((0, pad_c), (0, pad_c))))
    w_cat = jnp.concatenate(taps, axis=0).astype(jnp.bfloat16)    # (9*Cp, Cp)

    # --- conv_att on a 1x1 map with padding=1: only the centre tap [:, :, 1, 1] matters.
    #     Fold it into a segment-summing matrix so the logit comes out per lane.        ---
    w_center = conv_att_w[0, :, 1, 1]                         # (2C,)
    seg = jnp.arange(Cg, dtype=jnp.int32) // C
    same = seg[:, None] == seg[None, :]                       # same-sample lane mask (Cg, Cg)
    w_max = jnp.where(same, jnp.tile(w_center[:C], S)[:, None], 0.0)
    w_avg = jnp.where(same, jnp.tile(w_center[C:], S)[:, None], 0.0)
    w_att = jnp.concatenate(
        [jnp.pad(w_max, ((0, pad_c), (0, pad_c))),
         jnp.pad(w_avg, ((0, pad_c), (0, pad_c)))], axis=0).astype(jnp.float32)  # (2*Cp, Cp)

    # Grid-constant operands: single-buffer on the fast path (their index_map is constant).
    const_mode = pl.Buffered(1) if fast else None
    const_spec = lambda shape: pl.BlockSpec(
        shape, lambda b: (0,) * len(shape), pipeline_mode=const_mode)

    compiler_kwargs = dict(dimension_semantics=("parallel",))
    vmem_est = (4 * HW * Cp * 4                                  # x + out, double-buffered
                + 2 * (9 * Cp * Cp * 2 + 2 * Cp * Cp * 4)        # constant operands
                + 20 * HW * Cp * 2 + 4 * HW * Cp * 4)            # slabs / concat / conv / masks
    if vmem_est > 30 * 1024 * 1024:
        compiler_kwargs["vmem_limit_bytes"] = min(vmem_est + (8 << 20), 120 << 20)

    out = pl.pallas_call(
        functools.partial(_lca_kernel, H=H, W=W, bf16_shift=fast),
        grid=(Nb,),
        in_specs=[
            pl.BlockSpec((1, HW, Cp), lambda b: (b, 0, 0)),   # one lane-packed group / step
            const_spec((9 * Cp, Cp)),                         # fused conv taps (grid-constant)
            const_spec((2 * Cp, Cp)),                         # folded attention matrix
        ],
        out_specs=pl.BlockSpec((1, HW, Cp), lambda b: (b, 0, 0)),
        out_shape=jax.ShapeDtypeStruct((Nb, HW, Cp), jnp.float32),
        input_output_aliases={0: 0},                          # packed x temp is dead afterwards
        compiler_params=pltpu.CompilerParams(**compiler_kwargs),
    )(x, w_cat, w_att)

    # --- unpack: drop padded lanes / padded samples, back to NCHW ---
    out = out[:, :, :Cg].reshape(Nb, HW, S, C).transpose(0, 2, 1, 3)
    out = out.reshape(Nb * S, HW, C)[:N].reshape(N, H, W, C)
    return jnp.transpose(out, (0, 3, 1, 2))


_FAST_OK = [True]


def run_lca(x, conv_w, conv_att_w):
    """Run the kernel; if this JAX/Mosaic build rejects the fast-path features
    (bf16 sublane roll / pl.Buffered(1)), fall back to the safe f32 lowering."""
    if _FAST_OK[0]:
        try:
            out = lca_forward(x, conv_w, conv_att_w, fast=True)
            jax.block_until_ready(out)
            return out
        except Exception:
            _FAST_OK[0] = False
    out = lca_forward(x, conv_w, conv_att_w, fast=False)
    jax.block_until_ready(out)
    return out


def _lca_reference(x, conv_w, conv_att_w):
    """Pure-JAX f32 reference matching the PyTorch module."""
    hi = jax.lax.Precision.HIGHEST
    xc = jax.lax.conv_general_dilated(
        x, conv_w, window_strides=(1, 1), padding=((1, 1), (1, 1)),
        dimension_numbers=("NCHW", "OIHW", "NCHW"), precision=hi)
    x_max = jnp.max(xc, axis=(2, 3), keepdims=True)
    x_avg = jnp.mean(xc, axis=(2, 3), keepdims=True)
    x_att = jnp.concatenate([x_max, x_avg], axis=1)            # (N, 2C, 1, 1)
    att = jax.lax.conv_general_dilated(
        x_att, conv_att_w, window_strides=(1, 1), padding=((1, 1), (1, 1)),
        dimension_numbers=("NCHW", "OIHW", "NCHW"), precision=hi)
    return x * jax.nn.sigmoid(att)                             # per-sample scalar gate


if __name__ == "__main__":
    base = jax.random.PRNGKey(0)

    # (N, C, H, W): lane-packed S=8 / single grid step; lane-packed S=4 / 2 grid steps with
    # batch padding and non-pow2 W; generic non-packed path (C=96 -> channel pad to 128).
    cases = [(2, 16, 16, 16), (5, 32, 8, 12), (1, 96, 8, 8)]
    for idx, (N, C, H, W) in enumerate(cases):
        kx, kw1, kw2 = jax.random.split(jax.random.fold_in(base, idx), 3)
        x = jax.random.normal(kx, (N, C, H, W), jnp.float32)
        conv_w = 0.1 * jax.random.normal(kw1, (C, C, 3, 3), jnp.float32)
        conv_att_w = 0.1 * jax.random.normal(kw2, (1, 2 * C, 3, 3), jnp.float32)

        out = run_lca(x, conv_w, conv_att_w)
        assert out.shape == (N, C, H, W) and out.dtype == jnp.float32

        ref = _lca_reference(x, conv_w, conv_att_w)
        if not bool(jnp.allclose(out, ref, atol=2.5e-2, rtol=2.5e-2)):
            raise AssertionError(
                f"case {(N, C, H, W)}: mismatch vs reference, max abs err = "
                f"{float(jnp.max(jnp.abs(out - ref)))}")

    print("KERNEL_OK")
</pallas_src>

<mosaic_0001>
module attributes {stable_mosaic.version = 11 : i64} {
  func.func @_lca_kernel(%arg0: i32, %arg1: memref<1x256x128xf32, #tpu.memory_space<vmem>>, %arg2: memref<1152x128xbf16, #tpu.memory_space<vmem>>, %arg3: memref<256x128xf32, #tpu.memory_space<vmem>>, %arg4: memref<1x256x128xf32, #tpu.memory_space<vmem>>) attributes {dimension_semantics = [#tpu.dimension_semantics<parallel>], iteration_bounds = array<i64: 1>, scalar_prefetch = 0 : i64, scratch_operands = 0 : i64, tpu.core_type = #tpu.core_type<tc>, window_params = [{transform_indices = @transform_0, window_bounds = array<i64: 1, 256, 128>}, {pipeline_mode = #tpu.pipeline_mode<synchronous>, transform_indices = @transform_1, window_bounds = array<i64: 1152, 128>}, {pipeline_mode = #tpu.pipeline_mode<synchronous>, transform_indices = @transform_2, window_bounds = array<i64: 256, 128>}, {transform_indices = @transform_3, window_bounds = array<i64: 1, 256, 128>}]} {
    %c0 = arith.constant 0 : index
    %c0_0 = arith.constant 0 : index
    %c0_1 = arith.constant 0 : index
    %0 = vector.load %arg1[%c0, %c0_0, %c0_1] : memref<1x256x128xf32, #tpu.memory_space<vmem>>, vector<1x256x128xf32>
    %1 = vector.shape_cast %0 : vector<1x256x128xf32> to vector<256x128xf32>
    %2 = arith.truncf %1 : vector<256x128xf32> to vector<256x128xbf16>
    %3 = tpu.iota {dimensions = array<i32: 0>} : vector<256x128xi32>
    %4 = arith.sitofp %3 : vector<256x128xi32> to vector<256x128xf32>
    %cst = arith.constant 5.000000e-01 : f32
    %5 = vector.broadcast %cst : f32 to vector<256x128xf32>
    %6 = arith.addf %4, %5 : vector<256x128xf32>
    %cst_2 = arith.constant 6.250000e-02 : f32
    %7 = vector.broadcast %cst_2 : f32 to vector<256x128xf32>
    %8 = arith.mulf %6, %7 : vector<256x128xf32>
    %9 = math.floor %8 : vector<256x128xf32>
    %10 = arith.fptosi %9 : vector<256x128xf32> to vector<256x128xi32>
    %c16_i32 = arith.constant 16 : i32
    %11 = vector.broadcast %c16_i32 : i32 to vector<256x128xi32>
    %12 = arith.muli %10, %11 : vector<256x128xi32>
    %13 = arith.subi %3, %12 : vector<256x128xi32>
    %c240_i32 = arith.constant 240 : i32
    %14 = vector.broadcast %c240_i32 : i32 to vector<256x128xi32>
    %15 = arith.cmpi slt, %3, %14 : vector<256x128xi32>
    %c16_i32_3 = arith.constant 16 : i32
    %16 = vector.broadcast %c16_i32_3 : i32 to vector<256x128xi32>
    %17 = arith.cmpi sge, %3, %16 : vector<256x128xi32>
    %c15_i32 = arith.constant 15 : i32
    %18 = vector.broadcast %c15_i32 : i32 to vector<256x128xi32>
    %19 = arith.cmpi slt, %13, %18 : vector<256x128xi32>
    %c0_i32 = arith.constant 0 : i32
    %20 = vector.broadcast %c0_i32 : i32 to vector<256x128xi32>
    %21 = arith.cmpi sgt, %13, %20 : vector<256x128xi32>
    %22 = arith.andi %15, %19 : vector<256x128xi1>
    %cst_4 = arith.constant 0.000000e+00 : f32
    %23 = arith.truncf %cst_4 : f32 to bf16
    %24 = vector.broadcast %23 : bf16 to vector<256x128xbf16>
    %25 = arith.select %22, %2, %24 : vector<256x128xi1>, vector<256x128xbf16>
    %c17_i32 = arith.constant 17 : i32
    %26 = tpu.dynamic_rotate %25 by %c17_i32 dim 0 : vector<256x128xbf16>, i32 -> vector<256x128xbf16>
    %cst_5 = arith.constant 0.000000e+00 : f32
    %27 = arith.truncf %cst_5 : f32 to bf16
    %28 = vector.broadcast %27 : bf16 to vector<256x128xbf16>
    %29 = arith.select %15, %2, %28 : vector<256x128xi1>, vector<256x128xbf16>
    %c16_i32_6 = arith.constant 16 : i32
    %30 = tpu.dynamic_rotate %29 by %c16_i32_6 dim 0 : vector<256x128xbf16>, i32 -> vector<256x128xbf16>
    %31 = arith.andi %15, %21 : vector<256x128xi1>
    %cst_7 = arith.constant 0.000000e+00 : f32
    %32 = arith.truncf %cst_7 : f32 to bf16
    %33 = vector.broadcast %32 : bf16 to vector<256x128xbf16>
    %34 = arith.select %31, %2, %33 : vector<256x128xi1>, vector<256x128xbf16>
    %c15_i32_8 = arith.constant 15 : i32
    %35 = tpu.dynamic_rotate %34 by %c15_i32_8 dim 0 : vector<256x128xbf16>, i32 -> vector<256x128xbf16>
    %cst_9 = arith.constant 0.000000e+00 : f32
    %36 = arith.truncf %cst_9 : f32 to bf16
    %37 = vector.broadcast %36 : bf16 to vector<256x128xbf16>
    %38 = arith.select %19, %2, %37 : vector<256x128xi1>, vector<256x128xbf16>
    %c1_i32 = arith.constant 1 : i32
    %39 = tpu.dynamic_rotate %38 by %c1_i32 dim 0 : vector<256x128xbf16>, i32 -> vector<256x128xbf16>
    %cst_10 = arith.constant 0.000000e+00 : f32
    %40 = arith.truncf %cst_10 : f32 to bf16
    %41 = vector.broadcast %40 : bf16 to vector<256x128xbf16>
    %42 = arith.select %21, %2, %41 : vector<256x128xi1>, vector<256x128xbf16>
    %c255_i32 = arith.constant 255 : i32
    %43 = tpu.dynamic_rotate %42 by %c255_i32 dim 0 : vector<256x128xbf16>, i32 -> vector<256x128xbf16>
    %44 = arith.andi %17, %19 : vector<256x128xi1>
    %cst_11 = arith.constant 0.000000e+00 : f32
    %45 = arith.truncf %cst_11 : f32 to bf16
    %46 = vector.broadcast %45 : bf16 to vector<256x128xbf16>
    %47 = arith.select %44, %2, %46 : vector<256x128xi1>, vector<256x128xbf16>
    %c241_i32 = arith.constant 241 : i32
    %48 = tpu.dynamic_rotate %47 by %c241_i32 dim 0 : vector<256x128xbf16>, i32 -> vector<256x128xbf16>
    %cst_12 = arith.constant 0.000000e+00 : f32
    %49 = arith.truncf %cst_12 : f32 to bf16
    %50 = vector.broadcast %49 : bf16 to vector<256x128xbf16>
    %51 = arith.select %17, %2, %50 : vector<256x128xi1>, vector<256x128xbf16>
    %c240_i32_13 = arith.constant 240 : i32
    %52 = tpu.dynamic_rotate %51 by %c240_i32_13 dim 0 : vector<256x128xbf16>, i32 -> vector<256x128xbf16>
    %53 = arith.andi %17, %21 : vector<256x128xi1>
    %cst_14 = arith.constant 0.000000e+00 : f32
    %54 = arith.truncf %cst_14 : f32 to bf16
    %55 = vector.broadcast %54 : bf16 to vector<256x128xbf16>
    %56 = arith.select %53, %2, %55 : vector<256x128xi1>, vector<256x128xbf16>
    %c239_i32 = arith.constant 239 : i32
    %57 = tpu.dynamic_rotate %56 by %c239_i32 dim 0 : vector<256x128xbf16>, i32 -> vector<256x128xbf16>
    %58 = tpu.concatenate %26, %30, %35, %39, %2, %43, %48, %52, %57 in 1 : vector<256x128xbf16>, vector<256x128xbf16>, vector<256x128xbf16>, vector<256x128xbf16>, vector<256x128xbf16>, vector<256x128xbf16>, vector<256x128xbf16>, vector<256x128xbf16>, vector<256x128xbf16> -> vector<256x1152xbf16>
    %c0_15 = arith.constant 0 : index
    %c0_16 = arith.constant 0 : index
    %59 = vector.load %arg2[%c0_15, %c0_16] : memref<1152x128xbf16, #tpu.memory_space<vmem>>, vector<1152x128xbf16>
    %cst_17 = arith.constant dense<0.000000e+00> : vector<256x128xf32>
    %60 = tpu.matmul %58, %59, %cst_17 {dimension_numbers = #tpu.dot_dimension_numbers<[1], [0], [0], [1], [0, 0, 1, 1], [], []>} : vector<256x1152xbf16>, vector<1152x128xbf16>, vector<256x128xf32> -> vector<256x128xf32>
    %cst_18 = arith.constant dense<0xFF800000> : vector<128xf32>
    %61 = vector.multi_reduction <maximumf>, %60, %cst_18 [0] : vector<256x128xf32> to vector<128xf32>
    %62 = vector.shape_cast %61 : vector<128xf32> to vector<1x128xf32>
    %cst_19 = arith.constant dense<0.000000e+00> : vector<128xf32>
    %63 = vector.multi_reduction <add>, %60, %cst_19 [0] : vector<256x128xf32> to vector<128xf32>
    %64 = vector.shape_cast %63 : vector<128xf32> to vector<1x128xf32>
    %cst_20 = arith.constant 3.906250e-03 : f32
    %65 = vector.broadcast %cst_20 : f32 to vector<1x128xf32>
    %66 = arith.mulf %64, %65 : vector<1x128xf32>
    %67 = tpu.concatenate %62, %66 in 1 : vector<1x128xf32>, vector<1x128xf32> -> vector<1x256xf32>
    %c0_21 = arith.constant 0 : index
    %c0_22 = arith.constant 0 : index
    %68 = vector.load %arg3[%c0_21, %c0_22] : memref<256x128xf32, #tpu.memory_space<vmem>>, vector<256x128xf32>
    %cst_23 = arith.constant dense<0.000000e+00> : vector<1x128xf32>
    %69 = tpu.matmul %67, %68, %cst_23 {dimension_numbers = #tpu.dot_dimension_numbers<[1], [0], [0], [1], [0, 0, 1, 1], [], []>} : vector<1x256xf32>, vector<256x128xf32>, vector<1x128xf32> -> vector<1x128xf32>
    %70 = arith.negf %69 : vector<1x128xf32>
    %71 = math.exp %70 : vector<1x128xf32>
    %cst_24 = arith.constant 1.000000e+00 : f32
    %72 = vector.broadcast %cst_24 : f32 to vector<1x128xf32>
    %73 = arith.addf %72, %71 : vector<1x128xf32>
    %74 = arith.divf %72, %73 : vector<1x128xf32>
    %75 = vector.broadcast %74 : vector<1x128xf32> to vector<256x128xf32>
    %76 = arith.mulf %1, %75 : vector<256x128xf32>
    %c0_25 = arith.constant 0 : index
    %c0_26 = arith.constant 0 : index
    %c0_27 = arith.constant 0 : index
    %77 = vector.load %arg4[%c0_25, %c0_26, %c0_27] : memref<1x256x128xf32, #tpu.memory_space<vmem>>, vector<1x256x128xf32>
    %78 = vector.shape_cast %77 : vector<1x256x128xf32> to vector<256x128xf32>
    %79 = vector.shape_cast %76 : vector<256x128xf32> to vector<1x256x128xf32>
    tpu.vector_store %arg4[%c0_25, %c0_26, %c0_27], %79 {strides = array<i32>} : memref<1x256x128xf32, #tpu.memory_space<vmem>>, vector<1x256x128xf32>,
    return
  }
  func.func @transform_0(%arg0: i32) -> (i32, i32, i32) {
    %c0_i32 = arith.constant 0 : i32
    %c0_i32_0 = arith.constant 0 : i32
    %c0_i32_1 = arith.constant 0 : i32
    return %arg0, %c0_i32, %c0_i32_0 : i32, i32, i32
  }
  func.func @transform_1(%arg0: i32) -> (i32, i32) {
    %c0_i32 = arith.constant 0 : i32
    %c0_i32_0 = arith.constant 0 : i32
    %c0_i32_1 = arith.constant 0 : i32
    return %c0_i32, %c0_i32_0 : i32, i32
  }
  func.func @transform_2(%arg0: i32) -> (i32, i32) {
    %c0_i32 = arith.constant 0 : i32
    %c0_i32_0 = arith.constant 0 : i32
    %c0_i32_1 = arith.constant 0 : i32
    return %c0_i32, %c0_i32_0 : i32, i32
  }
  func.func @transform_3(%arg0: i32) -> (i32, i32, i32) {
    %c0_i32 = arith.constant 0 : i32
    %c0_i32_0 = arith.constant 0 : i32
    %c0_i32_1 = arith.constant 0 : i32
    return %arg0, %c0_i32, %c0_i32_0 : i32, i32, i32
  }
}

module attributes {stable_mosaic.version = 11 : i64} {
  func.func @_lca_kernel(%arg0: i32, %arg1: memref<1x256x128xf32, #tpu.memory_space<vmem>>, %arg2: memref<1152x128xbf16, #tpu.memory_space<vmem>>, %arg3: memref<256x128xf32, #tpu.memory_space<vmem>>, %arg4: memref<1x256x128xf32, #tpu.memory_space<vmem>>) attributes {dimension_semantics = [#tpu.dimension_semantics<parallel>], iteration_bounds = array<i64: 1>, scalar_prefetch = 0 : i64, scratch_operands = 0 : i64, tpu.core_type = #tpu.core_type<tc>, window_params = [{transform_indices = @transform_0, window_bounds = array<i64: 1, 256, 128>}, {pipeline_mode = #tpu.pipeline_mode<synchronous>, transform_indices = @transform_1, window_bounds = array<i64: 1152, 128>}, {pipeline_mode = #tpu.pipeline_mode<synchronous>, transform_indices = @transform_2, window_bounds = array<i64: 256, 128>}, {transform_indices = @transform_3, window_bounds = array<i64: 1, 256, 128>}]} {
    %c0 = arith.constant 0 : index
    %c0_0 = arith.constant 0 : index
    %c0_1 = arith.constant 0 : index
    %0 = vector.load %arg1[%c0, %c0_0, %c0_1] : memref<1x256x128xf32, #tpu.memory_space<vmem>>, vector<1x256x128xf32>
    %1 = vector.shape_cast %0 : vector<1x256x128xf32> to vector<256x128xf32>
    %2 = tpu.iota {dimensions = array<i32: 0>} : vector<256x128xi32>
    %3 = arith.sitofp %2 : vector<256x128xi32> to vector<256x128xf32>
    %cst = arith.constant 5.000000e-01 : f32
    %4 = vector.broadcast %cst : f32 to vector<256x128xf32>
    %5 = arith.addf %3, %4 : vector<256x128xf32>
    %cst_2 = arith.constant 6.250000e-02 : f32
    %6 = vector.broadcast %cst_2 : f32 to vector<256x128xf32>
    %7 = arith.mulf %5, %6 : vector<256x128xf32>
    %8 = math.floor %7 : vector<256x128xf32>
    %9 = arith.fptosi %8 : vector<256x128xf32> to vector<256x128xi32>
    %c16_i32 = arith.constant 16 : i32
    %10 = vector.broadcast %c16_i32 : i32 to vector<256x128xi32>
    %11 = arith.muli %9, %10 : vector<256x128xi32>
    %12 = arith.subi %2, %11 : vector<256x128xi32>
    %c240_i32 = arith.constant 240 : i32
    %13 = vector.broadcast %c240_i32 : i32 to vector<256x128xi32>
    %14 = arith.cmpi slt, %2, %13 : vector<256x128xi32>
    %c16_i32_3 = arith.constant 16 : i32
    %15 = vector.broadcast %c16_i32_3 : i32 to vector<256x128xi32>
    %16 = arith.cmpi sge, %2, %15 : vector<256x128xi32>
    %c15_i32 = arith.constant 15 : i32
    %17 = vector.broadcast %c15_i32 : i32 to vector<256x128xi32>
    %18 = arith.cmpi slt, %12, %17 : vector<256x128xi32>
    %c0_i32 = arith.constant 0 : i32
    %19 = vector.broadcast %c0_i32 : i32 to vector<256x128xi32>
    %20 = arith.cmpi sgt, %12, %19 : vector<256x128xi32>
    %21 = arith.andi %14, %18 : vector<256x128xi1>
    %cst_4 = arith.constant 0.000000e+00 : f32
    %22 = vector.broadcast %cst_4 : f32 to vector<256x128xf32>
    %23 = arith.select %21, %1, %22 : vector<256x128xi1>, vector<256x128xf32>
    %c17_i32 = arith.constant 17 : i32
    %24 = tpu.dynamic_rotate %23 by %c17_i32 dim 0 : vector<256x128xf32>, i32 -> vector<256x128xf32>
    %cst_5 = arith.constant 0.000000e+00 : f32
    %25 = vector.broadcast %cst_5 : f32 to vector<256x128xf32>
    %26 = arith.select %14, %1, %25 : vector<256x128xi1>, vector<256x128xf32>
    %c16_i32_6 = arith.constant 16 : i32
    %27 = tpu.dynamic_rotate %26 by %c16_i32_6 dim 0 : vector<256x128xf32>, i32 -> vector<256x128xf32>
    %28 = arith.andi %14, %20 : vector<256x128xi1>
    %cst_7 = arith.constant 0.000000e+00 : f32
    %29 = vector.broadcast %cst_7 : f32 to vector<256x128xf32>
    %30 = arith.select %28, %1, %29 : vector<256x128xi1>, vector<256x128xf32>
    %c15_i32_8 = arith.constant 15 : i32
    %31 = tpu.dynamic_rotate %30 by %c15_i32_8 dim 0 : vector<256x128xf32>, i32 -> vector<256x128xf32>
    %cst_9 = arith.constant 0.000000e+00 : f32
    %32 = vector.broadcast %cst_9 : f32 to vector<256x128xf32>
    %33 = arith.select %18, %1, %32 : vector<256x128xi1>, vector<256x128xf32>
    %c1_i32 = arith.constant 1 : i32
    %34 = tpu.dynamic_rotate %33 by %c1_i32 dim 0 : vector<256x128xf32>, i32 -> vector<256x128xf32>
    %cst_10 = arith.constant 0.000000e+00 : f32
    %35 = vector.broadcast %cst_10 : f32 to vector<256x128xf32>
    %36 = arith.select %20, %1, %35 : vector<256x128xi1>, vector<256x128xf32>
    %c255_i32 = arith.constant 255 : i32
    %37 = tpu.dynamic_rotate %36 by %c255_i32 dim 0 : vector<256x128xf32>, i32 -> vector<256x128xf32>
    %38 = arith.andi %16, %18 : vector<256x128xi1>
    %cst_11 = arith.constant 0.000000e+00 : f32
    %39 = vector.broadcast %cst_11 : f32 to vector<256x128xf32>
    %40 = arith.select %38, %1, %39 : vector<256x128xi1>, vector<256x128xf32>
    %c241_i32 = arith.constant 241 : i32
    %41 = tpu.dynamic_rotate %40 by %c241_i32 dim 0 : vector<256x128xf32>, i32 -> vector<256x128xf32>
    %cst_12 = arith.constant 0.000000e+00 : f32
    %42 = vector.broadcast %cst_12 : f32 to vector<256x128xf32>
    %43 = arith.select %16, %1, %42 : vector<256x128xi1>, vector<256x128xf32>
    %c240_i32_13 = arith.constant 240 : i32
    %44 = tpu.dynamic_rotate %43 by %c240_i32_13 dim 0 : vector<256x128xf32>, i32 -> vector<256x128xf32>
    %45 = arith.andi %16, %20 : vector<256x128xi1>
    %cst_14 = arith.constant 0.000000e+00 : f32
    %46 = vector.broadcast %cst_14 : f32 to vector<256x128xf32>
    %47 = arith.select %45, %1, %46 : vector<256x128xi1>, vector<256x128xf32>
    %c239_i32 = arith.constant 239 : i32
    %48 = tpu.dynamic_rotate %47 by %c239_i32 dim 0 : vector<256x128xf32>, i32 -> vector<256x128xf32>
    %49 = tpu.concatenate %24, %27, %31, %34, %1, %37, %41, %44, %48 in 1 : vector<256x128xf32>, vector<256x128xf32>, vector<256x128xf32>, vector<256x128xf32>, vector<256x128xf32>, vector<256x128xf32>, vector<256x128xf32>, vector<256x128xf32>, vector<256x128xf32> -> vector<256x1152xf32>
    %50 = arith.truncf %49 : vector<256x1152xf32> to vector<256x1152xbf16>
    %c0_15 = arith.constant 0 : index
    %c0_16 = arith.constant 0 : index
    %51 = vector.load %arg2[%c0_15, %c0_16] : memref<1152x128xbf16, #tpu.memory_space<vmem>>, vector<1152x128xbf16>
    %cst_17 = arith.constant dense<0.000000e+00> : vector<256x128xf32>
    %52 = tpu.matmul %50, %51, %cst_17 {dimension_numbers = #tpu.dot_dimension_numbers<[1], [0], [0], [1], [0, 0, 1, 1], [], []>} : vector<256x1152xbf16>, vector<1152x128xbf16>, vector<256x128xf32> -> vector<256x128xf32>
    %cst_18 = arith.constant dense<0xFF800000> : vector<128xf32>
    %53 = vector.multi_reduction <maximumf>, %52, %cst_18 [0] : vector<256x128xf32> to vector<128xf32>
    %54 = vector.shape_cast %53 : vector<128xf32> to vector<1x128xf32>
    %cst_19 = arith.constant dense<0.000000e+00> : vector<128xf32>
    %55 = vector.multi_reduction <add>, %52, %cst_19 [0] : vector<256x128xf32> to vector<128xf32>
    %56 = vector.shape_cast %55 : vector<128xf32> to vector<1x128xf32>
    %cst_20 = arith.constant 3.906250e-03 : f32
    %57 = vector.broadcast %cst_20 : f32 to vector<1x128xf32>
    %58 = arith.mulf %56, %57 : vector<1x128xf32>
    %59 = tpu.concatenate %54, %58 in 1 : vector<1x128xf32>, vector<1x128xf32> -> vector<1x256xf32>
    %c0_21 = arith.constant 0 : index
    %c0_22 = arith.constant 0 : index
    %60 = vector.load %arg3[%c0_21, %c0_22] : memref<256x128xf32, #tpu.memory_space<vmem>>, vector<256x128xf32>
    %cst_23 = arith.constant dense<0.000000e+00> : vector<1x128xf32>
    %61 = tpu.matmul %59, %60, %cst_23 {dimension_numbers = #tpu.dot_dimension_numbers<[1], [0], [0], [1], [0, 0, 1, 1], [], []>} : vector<1x256xf32>, vector<256x128xf32>, vector<1x128xf32> -> vector<1x128xf32>
    %62 = arith.negf %61 : vector<1x128xf32>
    %63 = math.exp %62 : vector<1x128xf32>
    %cst_24 = arith.constant 1.000000e+00 : f32
    %64 = vector.broadcast %cst_24 : f32 to vector<1x128xf32>
    %65 = arith.addf %64, %63 : vector<1x128xf32>
    %66 = arith.divf %64, %65 : vector<1x128xf32>
    %67 = vector.broadcast %66 : vector<1x128xf32> to vector<256x128xf32>
    %68 = arith.mulf %1, %67 : vector<256x128xf32>
    %c0_25 = arith.constant 0 : index
    %c0_26 = arith.constant 0 : index
    %c0_27 = arith.constant 0 : index
    %69 = vector.load %arg4[%c0_25, %c0_26, %c0_27] : memref<1x256x128xf32, #tpu.memory_space<vmem>>, vector<1x256x128xf32>
    %70 = vector.shape_cast %69 : vector<1x256x128xf32> to vector<256x128xf32>
    %71 = vector.shape_cast %68 : vector<256x128xf32> to vector<1x256x128xf32>
    tpu.vector_store %arg4[%c0_25, %c0_26, %c0_27], %71 {strides = array<i32>} : memref<1x256x128xf32, #tpu.memory_space<vmem>>, vector<1x256x128xf32>,
    return
  }
  func.func @transform_0(%arg0: i32) -> (i32, i32, i32) {
    %c0_i32 = arith.constant 0 : i32
    %c0_i32_0 = arith.constant 0 : i32
    %c0_i32_1 = arith.constant 0 : i32
    return %arg0, %c0_i32, %c0_i32_0 : i32, i32, i32
  }
  func.func @transform_1(%arg0: i32) -> (i32, i32) {
    %c0_i32 = arith.constant 0 : i32
    %c0_i32_0 = arith.constant 0 : i32
    %c0_i32_1 = arith.constant 0 : i32
    return %c0_i32, %c0_i32_0 : i32, i32
  }
  func.func @transform_2(%arg0: i32) -> (i32, i32) {
    %c0_i32 = arith.constant 0 : i32
    %c0_i32_0 = arith.constant 0 : i32
    %c0_i32_1 = arith.constant 0 : i32
    return %c0_i32, %c0_i32_0 : i32, i32
  }
  func.func @transform_3(%arg0: i32) -> (i32, i32, i32) {
    %c0_i32 = arith.constant 0 : i32
    %c0_i32_0 = arith.constant 0 : i32
    %c0_i32_1 = arith.constant 0 : i32
    return %arg0, %c0_i32, %c0_i32_0 : i32, i32, i32
  }
}

</mosaic_0001>

<llo_original>
// kernel: tile.18
$region0: #{tile.18}
  #allocation0 [shape = 's32[1]{0}', space=sflag, size = 0x4, scoped, tag = 'scoped memory for tile.18']
  %s0 = inlined_call_operand.vmem [shape: f32[16], index: 0, kind: input, shape index: {}]
  %s1 = inlined_call_operand.vmem [shape: f32[8,16], index: 1, kind: output, shape index: {}]
  // Predicated region
  $region2: #{tile.18} parent=0 // pred_check
    _
  $region3: #{tile.18} parent=0 // pred_check_branch
    %3 = sbr.rel (0) target = $region5
  $region4: #{tile.18} parent=0 // pred_region
    _
  $region5: #{tile.18} parent=0 // pred_fallthru
    _
  %v4 = vld [vmem:[%s0] ss:$0 sm:$0xff]
  %5 = vst [vmem:[%s1] sm:$0xff] %v4

// kernel: tile.18
$region0: #{tile.18}
  #allocation0 [shape = 's32[1]{0}', space=sflag, size = 0x4, scoped, tag = 'scoped memory for tile.18']
  %s0 = inlined_call_operand.vmem [shape: f32[16], index: 0, kind: input, shape index: {}]
  %s1 = inlined_call_operand.vmem [shape: f32[8,16], index: 1, kind: output, shape index: {}]
  // Predicated region
  $region2: #{tile.18} parent=0 // pred_check
    _
  $region3: #{tile.18} parent=0 // pred_check_branch
    %3 = sbr.rel (0) target = $region5
  $region4: #{tile.18} parent=0 // pred_region
    _
  $region5: #{tile.18} parent=0 // pred_fallthru
    _
  %v4 = vld [vmem:[%s0] ss:$0 sm:$0xff]
  %5 = vst [vmem:[%s1] sm:$0xff] %v4

// kernel: lca_forward.1
$region0: #{lca_forward.1}
  #allocation0 [shape = 'u32[]', space=smem, size = 0x4, offset = 0x4, fixed_abs, tag = 'smem constant byte address 0x4 - core index']
  #allocation1 [shape = 'u32[144,128]{1,0:T(1,128)}', space=vmem, size = 0x12000, scoped, tag = 'internal scratch']
  %s0 = inlined_call_operand.vmem [shape: f32[1,256,128], index: 0, kind: input, shape index: {}, may-alias: {0,3}]
  %s1 = inlined_call_operand.vmem [shape: bf16[1152,128], index: 1, kind: input, shape index: {}]
  %s2 = inlined_call_operand.vmem [shape: f32[256,128], index: 2, kind: input, shape index: {}]
  %s3 = inlined_call_operand.vmem [shape: f32[1,256,128], index: 3, kind: output, shape index: {}, may-alias: {0,3}]
  %s4 = sld [smem:[#allocation0]]
  $region22: #{lca_forward.1} parent=0
    _
  %s6 = ssub.s32 1, %s4
  %s7 = scalar_select 0, %s6, %s4
  // Predicated region
  $region2: #{lca_forward.1} parent=0 // pred_check
    _
  $region3: #{lca_forward.1} parent=0 // pred_check_branch
    %9 = sbr.rel (0) target = $region5
  $region4: #{lca_forward.1} parent=0 // pred_region
    _
  $region5: #{lca_forward.1} parent=0 // pred_fallthru
    _
  // Predicated region
  $region6: #{lca_forward.1} parent=0 // pred_check
    _
  $region7: #{lca_forward.1} parent=0 // pred_check_branch
    %11 = sbr.rel (0) target = $region9
  $region8: #{lca_forward.1} parent=0 // pred_region
    _
  $region9: #{lca_forward.1} parent=0 // pred_fallthru
    _
  // Predicated region
  $region10: #{lca_forward.1} parent=0 // pred_check
    _
  $region11: #{lca_forward.1} parent=0 // pred_check_branch
    %13 = sbr.rel (0) target = $region13
  $region12: #{lca_forward.1} parent=0 // pred_region
    _
  $region13: #{lca_forward.1} parent=0 // pred_fallthru
    _
  %v15 = vld [vmem:[%s0] sm:$0xff]
  %v16 = vld [vmem:[%s0 + $0x8] sm:$0xff]
  %v17 = vld [vmem:[%s0 + $0x10] sm:$0xff]
  %v18 = vld [vmem:[%s0 + $0x18] sm:$0xff]
  %v19 = vld [vmem:[%s0 + $0x20] sm:$0xff]
  %v20 = vld [vmem:[%s0 + $0x28] sm:$0xff]
  %v21 = vld [vmem:[%s0 + $0x30] sm:$0xff]
  %v22 = vld [vmem:[%s0 + $0x38] sm:$0xff]
  %v23 = vld [vmem:[%s0 + $0x40] sm:$0xff]
  %v24 = vld [vmem:[%s0 + $0x48] sm:$0xff]
  %v25 = vld [vmem:[%s0 + $0x50] sm:$0xff]
  %v26 = vld [vmem:[%s0 + $0x58] sm:$0xff]
  %v27 = vld [vmem:[%s0 + $0x60] sm:$0xff]
  %v28 = vld [vmem:[%s0 + $0x68] sm:$0xff]
  %v29 = vld [vmem:[%s0 + $0x70] sm:$0xff]
  %v30 = vld [vmem:[%s0 + $0x78] sm:$0xff]
  %v31 = vld [vmem:[%s0 + $0x80] sm:$0xff]
  %v32 = vld [vmem:[%s0 + $0x88] sm:$0xff]
  %v33 = vld [vmem:[%s0 + $0x90] sm:$0xff]
  %v34 = vld [vmem:[%s0 + $0x98] sm:$0xff]
  %v35 = vld [vmem:[%s0 + $0xa0] sm:$0xff]
  %v36 = vld [vmem:[%s0 + $0xa8] sm:$0xff]
  %v37 = vld [vmem:[%s0 + $0xb0] sm:$0xff]
  %v38 = vld [vmem:[%s0 + $0xb8] sm:$0xff]
  %v39 = vld [vmem:[%s0 + $0xc0] sm:$0xff]
  %v40 = vld [vmem:[%s0 + $0xc8] sm:$0xff]
  %v41 = vld [vmem:[%s0 + $0xd0] sm:$0xff]
  %v42 = vld [vmem:[%s0 + $0xd8] sm:$0xff]
  %v43 = vld [vmem:[%s0 + $0xe0] sm:$0xff]
  %v44 = vld [vmem:[%s0 + $0xe8] sm:$0xff]
  %v45 = vld [vmem:[%s0 + $0xf0] sm:$0xff]
  %v46 = vld [vmem:[%s0 + $0xf8] sm:$0xff]
  %v47 = vlaneseq
  %v48 = vshrl.u32 %v47, 7
  %v49 = vadd.s32 %v48, 8
  %v50 = vadd.s32 %v48, 16
  %v51 = vadd.s32 %v48, 24
  %v52 = vadd.s32 %v48, 32
  %v53 = vadd.s32 %v48, 40
  %v54 = vadd.s32 %v48, 48
  %v55 = vadd.s32 %v48, 56
  %v56 = vadd.s32 %v48, 64
  %v57 = vadd.s32 %v48, 72
  %v58 = vadd.s32 %v48, 80
  %v59 = vadd.s32 %v48, 88
  %v60 = vadd.s32 %v48, 96
  %v61 = vadd.s32 %v48, 104
  %v62 = vadd.s32 %v48, 112
  %v63 = vadd.s32 %v48, 120
  %v64 = vadd.s32 %v48, 128
  %v65 = vadd.s32 %v48, 136
  %v66 = vadd.s32 %v48, 144
  %v67 = vadd.s32 %v48, 152
  %v68 = vadd.s32 %v48, 160
  %v69 = vadd.s32 %v48, 168
  %v70 = vadd.s32 %v48, 176
  %v71 = vadd.s32 %v48, 184
  %v72 = vadd.s32 %v48, 192
  %v73 = vadd.s32 %v48, 200
  %v74 = vadd.s32 %v48, 208
  %v75 = vadd.s32 %v48, 216
  %v76 = vadd.s32 %v48, 224
  %v77 = vadd.s32 %v48, 232
  %v78 = vadd.s32 %v48, 240
  %v79 = vadd.s32 %v48, 248
  %v80 = vcvt.s32.f32 %v48
  %v81 = vcvt.s32.f32 %v49
  %v82 = vcvt.s32.f32 %v50
  %v83 = vcvt.s32.f32 %v51
  %v84 = vcvt.s32.f32 %v52
  %v85 = vcvt.s32.f32 %v53
  %v86 = vcvt.s32.f32 %v54
  %v87 = vcvt.s32.f32 %v55
  %v88 = vcvt.s32.f32 %v56
  %v89 = vcvt.s32.f32 %v57
  %v90 = vcvt.s32.f32 %v58
  %v91 = vcvt.s32.f32 %v59
  %v92 = vcvt.s32.f32 %v60
  %v93 = vcvt.s32.f32 %v61
  %v94 = vcvt.s32.f32 %v62
  %v95 = vcvt.s32.f32 %v63
  %v96 = vcvt.s32.f32 %v64
  %v97 = vcvt.s32.f32 %v65
  %v98 = vcvt.s32.f32 %v66
  %v99 = vcvt.s32.f32 %v67
  %v100 = vcvt.s32.f32 %v68
  %v101 = vcvt.s32.f32 %v69
  %v102 = vcvt.s32.f32 %v70
  %v103 = vcvt.s32.f32 %v71
  %v104 = vcvt.s32.f32 %v72
  %v105 = vcvt.s32.f32 %v73
  %v106 = vcvt.s32.f32 %v74
  %v107 = vcvt.s32.f32 %v75
  %v108 = vcvt.s32.f32 %v76
  %v109 = vcvt.s32.f32 %v77
  %v110 = vcvt.s32.f32 %v78
  %v111 = vcvt.s32.f32 %v79
  %v112 = vadd.f32 %v80, 0.5
  %v113 = vadd.f32 %v81, 0.5
  %v114 = vadd.f32 %v82, 0.5
  %v115 = vadd.f32 %v83, 0.5
  %v116 = vadd.f32 %v84, 0.5
  %v117 = vadd.f32 %v85, 0.5
  %v118 = vadd.f32 %v86, 0.5
  %v119 = vadd.f32 %v87, 0.5
  %v120 = vadd.f32 %v88, 0.5
  %v121 = vadd.f32 %v89, 0.5
  %v122 = vadd.f32 %v90, 0.5
  %v123 = vadd.f32 %v91, 0.5
  %v124 = vadd.f32 %v92, 0.5
  %v125 = vadd.f32 %v93, 0.5
  %v126 = vadd.f32 %v94, 0.5
  %v127 = vadd.f32 %v95, 0.5
  %v128 = vadd.f32 %v96, 0.5
  %v129 = vadd.f32 %v97, 0.5
  %v130 = vadd.f32 %v98, 0.5
  %v131 = vadd.f32 %v99, 0.5
  %v132 = vadd.f32 %v100, 0.5
  %v133 = vadd.f32 %v101, 0.5
  %v134 = vadd.f32 %v102, 0.5
  %v135 = vadd.f32 %v103, 0.5
  %v136 = vadd.f32 %v104, 0.5
  %v137 = vadd.f32 %v105, 0.5
  %v138 = vadd.f32 %v106, 0.5
  %v139 = vadd.f32 %v107, 0.5
  %v140 = vadd.f32 %v108, 0.5
  %v141 = vadd.f32 %v109, 0.5
  %v142 = vadd.f32 %v110, 0.5
  %v143 = vadd.f32 %v111, 0.5
  %v144 = vmul.f32 %v112, 0.0625
  %v145 = vmul.f32 %v113, 0.0625
  %v146 = vmul.f32 %v114, 0.0625
  %v147 = vmul.f32 %v115, 0.0625
  %v148 = vmul.f32 %v116, 0.0625
  %v149 = vmul.f32 %v117, 0.0625
  %v150 = vmul.f32 %v118, 0.0625
  %v151 = vmul.f32 %v119, 0.0625
  %v152 = vmul.f32 %v120, 0.0625
  %v153 = vmul.f32 %v121, 0.0625
  %v154 = vmul.f32 %v122, 0.0625
  %v155 = vmul.f32 %v123, 0.0625
  %v156 = vmul.f32 %v124, 0.0625
  %v157 = vmul.f32 %v125, 0.0625
  %v158 = vmul.f32 %v126, 0.0625
  %v159 = vmul.f32 %v127, 0.0625
  %v160 = vmul.f32 %v128, 0.0625
  %v161 = vmul.f32 %v129, 0.0625
  %v162 = vmul.f32 %v130, 0.0625
  %v163 = vmul.f32 %v131, 0.0625
  %v164 = vmul.f32 %v132, 0.0625
  %v165 = vmul.f32 %v133, 0.0625
  %v166 = vmul.f32 %v134, 0.0625
  %v167 = vmul.f32 %v135, 0.0625
  %v168 = vmul.f32 %v136, 0.0625
  %v169 = vmul.f32 %v137, 0.0625
  %v170 = vmul.f32 %v138, 0.0625
  %v171 = vmul.f32 %v139, 0.0625
  %v172 = vmul.f32 %v140, 0.0625
  %v173 = vmul.f32 %v141, 0.0625
  %v174 = vmul.f32 %v142, 0.0625
  %v175 = vmul.f32 %v143, 0.0625
  %v176 = vfloor.f32 %v144
  %v177 = vfloor.f32 %v145
  %v178 = vfloor.f32 %v146
  %v179 = vfloor.f32 %v147
  %v180 = vfloor.f32 %v148
  %v181 = vfloor.f32 %v149
  %v182 = vfloor.f32 %v150
  %v183 = vfloor.f32 %v151
  %v184 = vfloor.f32 %v152
  %v185 = vfloor.f32 %v153
  %v186 = vfloor.f32 %v154
  %v187 = vfloor.f32 %v155
  %v188 = vfloor.f32 %v156
  %v189 = vfloor.f32 %v157
  %v190 = vfloor.f32 %v158
  %v191 = vfloor.f32 %v159
  %v192 = vfloor.f32 %v160
  %v193 = vfloor.f32 %v161
  %v194 = vfloor.f32 %v162
  %v195 = vfloor.f32 %v163
  %v196 = vfloor.f32 %v164
  %v197 = vfloor.f32 %v165
  %v198 = vfloor.f32 %v166
  %v199 = vfloor.f32 %v167
  %v200 = vfloor.f32 %v168
  %v201 = vfloor.f32 %v169
  %v202 = vfloor.f32 %v170
  %v203 = vfloor.f32 %v171
  %v204 = vfloor.f32 %v172
  %v205 = vfloor.f32 %v173
  %v206 = vfloor.f32 %v174
  %v207 = vfloor.f32 %v175
  %v208 = vcvt.f32.s32.to.zero.pseudo %v176
  %v209 = vcvt.f32.s32.to.zero.pseudo %v177
  %v210 = vcvt.f32.s32.to.zero.pseudo %v178
  %v211 = vcvt.f32.s32.to.zero.pseudo %v179
  %v212 = vcvt.f32.s32.to.zero.pseudo %v180
  %v213 = vcvt.f32.s32.to.zero.pseudo %v181
  %v214 = vcvt.f32.s32.to.zero.pseudo %v182
  %v215 = vcvt.f32.s32.to.zero.pseudo %v183
  %v216 = vcvt.f32.s32.to.zero.pseudo %v184
  %v217 = vcvt.f32.s32.to.zero.pseudo %v185
  %v218 = vcvt.f32.s32.to.zero.pseudo %v186
  %v219 = vcvt.f32.s32.to.zero.pseudo %v187
  %v220 = vcvt.f32.s32.to.zero.pseudo %v188
  %v221 = vcvt.f32.s32.to.zero.pseudo %v189
  %v222 = vcvt.f32.s32.to.zero.pseudo %v190
  %v223 = vcvt.f32.s32.to.zero.pseudo %v191
  %v224 = vcvt.f32.s32.to.zero.pseudo %v192
  %v225 = vcvt.f32.s32.to.zero.pseudo %v193
  %v226 = vcvt.f32.s32.to.zero.pseudo %v194
  %v227 = vcvt.f32.s32.to.zero.pseudo %v195
  %v228 = vcvt.f32.s32.to.zero.pseudo %v196
  %v229 = vcvt.f32.s32.to.zero.pseudo %v197
  %v230 = vcvt.f32.s32.to.zero.pseudo %v198
  %v231 = vcvt.f32.s32.to.zero.pseudo %v199
  %v232 = vcvt.f32.s32.to.zero.pseudo %v200
  %v233 = vcvt.f32.s32.to.zero.pseudo %v201
  %v234 = vcvt.f32.s32.to.zero.pseudo %v202
  %v235 = vcvt.f32.s32.to.zero.pseudo %v203
  %v236 = vcvt.f32.s32.to.zero.pseudo %v204
  %v237 = vcvt.f32.s32.to.zero.pseudo %v205
  %v238 = vcvt.f32.s32.to.zero.pseudo %v206
  %v239 = vcvt.f32.s32.to.zero.pseudo %v207
  %v240 = vmul.u32 %v208, 16
  %v241 = vmul.u32 %v209, 16
  %v242 = vmul.u32 %v210, 16
  %v243 = vmul.u32 %v211, 16
  %v244 = vmul.u32 %v212, 16
  %v245 = vmul.u32 %v213, 16
  %v246 = vmul.u32 %v214, 16
  %v247 = vmul.u32 %v215, 16
  %v248 = vmul.u32 %v216, 16
  %v249 = vmul.u32 %v217, 16
  %v250 = vmul.u32 %v218, 16
  %v251 = vmul.u32 %v219, 16
  %v252 = vmul.u32 %v220, 16
  %v253 = vmul.u32 %v221, 16
  %v254 = vmul.u32 %v222, 16
  %v255 = vmul.u32 %v223, 16
  %v256 = vmul.u32 %v224, 16
  %v257 = vmul.u32 %v225, 16
  %v258 = vmul.u32 %v226, 16
  %v259 = vmul.u32 %v227, 16
  %v260 = vmul.u32 %v228, 16
  %v261 = vmul.u32 %v229, 16
  %v262 = vmul.u32 %v230, 16
  %v263 = vmul.u32 %v231, 16
  %v264 = vmul.u32 %v232, 16
  %v265 = vmul.u32 %v233, 16
  %v266 = vmul.u32 %v234, 16
  %v267 = vmul.u32 %v235, 16
  %v268 = vmul.u32 %v236, 16
  %v269 = vmul.u32 %v237, 16
  %v270 = vmul.u32 %v238, 16
  %v271 = vmul.u32 %v239, 16
  %v272 = vsub.s32 %v48, %v240
  %v273 = vsub.s32 %v49, %v241
  %v274 = vsub.s32 %v50, %v242
  %v275 = vsub.s32 %v51, %v243
  %v276 = vsub.s32 %v52, %v244
  %v277 = vsub.s32 %v53, %v245
  %v278 = vsub.s32 %v54, %v246
  %v279 = vsub.s32 %v55, %v247
  %v280 = vsub.s32 %v56, %v248
  %v281 = vsub.s32 %v57, %v249
  %v282 = vsub.s32 %v58, %v250
  %v283 = vsub.s32 %v59, %v251
  %v284 = vsub.s32 %v60, %v252
  %v285 = vsub.s32 %v61, %v253
  %v286 = vsub.s32 %v62, %v254
  %v287 = vsub.s32 %v63, %v255
  %v288 = vsub.s32 %v64, %v256
  %v289 = vsub.s32 %v65, %v257
  %v290 = vsub.s32 %v66, %v258
  %v291 = vsub.s32 %v67, %v259
  %v292 = vsub.s32 %v68, %v260
  %v293 = vsub.s32 %v69, %v261
  %v294 = vsub.s32 %v70, %v262
  %v295 = vsub.s32 %v71, %v263
  %v296 = vsub.s32 %v72, %v264
  %v297 = vsub.s32 %v73, %v265
  %v298 = vsub.s32 %v74, %v266
  %v299 = vsub.s32 %v75, %v267
  %v300 = vsub.s32 %v76, %v268
  %v301 = vsub.s32 %v77, %v269
  %v302 = vsub.s32 %v78, %v270
  %v303 = vsub.s32 %v79, %v271
  %vm304 = vcmp.lt.s32.totalorder %v48, 240
  %vm305 = vcmp.lt.s32.totalorder %v49, 240
  %vm306 = vcmp.lt.s32.totalorder %v50, 240
  %vm307 = vcmp.lt.s32.totalorder %v51, 240
  %vm308 = vcmp.lt.s32.totalorder %v52, 240
  %vm309 = vcmp.lt.s32.totalorder %v53, 240
  %vm310 = vcmp.lt.s32.totalorder %v54, 240
  %vm311 = vcmp.lt.s32.totalorder %v55, 240
  %vm312 = vcmp.lt.s32.totalorder %v56, 240
  %vm313 = vcmp.lt.s32.totalorder %v57, 240
  %vm314 = vcmp.lt.s32.totalorder %v58, 240
  %vm315 = vcmp.lt.s32.totalorder %v59, 240
  %vm316 = vcmp.lt.s32.totalorder %v60, 240
  %vm317 = vcmp.lt.s32.totalorder %v61, 240
  %vm318 = vcmp.lt.s32.totalorder %v62, 240
  %vm319 = vcmp.lt.s32.totalorder %v63, 240
  %vm320 = vcmp.lt.s32.totalorder %v64, 240
  %vm321 = vcmp.lt.s32.totalorder %v65, 240
  %vm322 = vcmp.lt.s32.totalorder %v66, 240
  %vm323 = vcmp.lt.s32.totalorder %v67, 240
  %vm324 = vcmp.lt.s32.totalorder %v68, 240
  %vm325 = vcmp.lt.s32.totalorder %v69, 240
  %vm326 = vcmp.lt.s32.totalorder %v70, 240
  %vm327 = vcmp.lt.s32.totalorder %v71, 240
  %vm328 = vcmp.lt.s32.totalorder %v72, 240
  %vm329 = vcmp.lt.s32.totalorder %v73, 240
  %vm330 = vcmp.lt.s32.totalorder %v74, 240
  %vm331 = vcmp.lt.s32.totalorder %v75, 240
  %vm332 = vcmp.lt.s32.totalorder %v76, 240
  %vm333 = vcmp.lt.s32.totalorder %v77, 240
  %vm334 = vcmp.lt.s32.totalorder %v78, 240
  %vm335 = vcmp.lt.s32.totalorder %v79, 240
  %vm336 = vcmp.ge.s32.totalorder %v48, 16
  %vm337 = vcmp.ge.s32.totalorder %v49, 16
  %vm338 = vcmp.ge.s32.totalorder %v50, 16
  %vm339 = vcmp.ge.s32.totalorder %v51, 16
  %vm340 = vcmp.ge.s32.totalorder %v52, 16
  %vm341 = vcmp.ge.s32.totalorder %v53, 16
  %vm342 = vcmp.ge.s32.totalorder %v54, 16
  %vm343 = vcmp.ge.s32.totalorder %v55, 16
  %vm344 = vcmp.ge.s32.totalorder %v56, 16
  %vm345 = vcmp.ge.s32.totalorder %v57, 16
  %vm346 = vcmp.ge.s32.totalorder %v58, 16
  %vm347 = vcmp.ge.s32.totalorder %v59, 16
  %vm348 = vcmp.ge.s32.totalorder %v60, 16
  %vm349 = vcmp.ge.s32.totalorder %v61, 16
  %vm350 = vcmp.ge.s32.totalorder %v62, 16
  %vm351 = vcmp.ge.s32.totalorder %v63, 16
  %vm352 = vcmp.ge.s32.totalorder %v64, 16
  %vm353 = vcmp.ge.s32.totalorder %v65, 16
  %vm354 = vcmp.ge.s32.totalorder %v66, 16
  %vm355 = vcmp.ge.s32.totalorder %v67, 16
  %vm356 = vcmp.ge.s32.totalorder %v68, 16
  %vm357 = vcmp.ge.s32.totalorder %v69, 16
  %vm358 = vcmp.ge.s32.totalorder %v70, 16
  %vm359 = vcmp.ge.s32.totalorder %v71, 16
  %vm360 = vcmp.ge.s32.totalorder %v72, 16
  %vm361 = vcmp.ge.s32.totalorder %v73, 16
  %vm362 = vcmp.ge.s32.totalorder %v74, 16
  %vm363 = vcmp.ge.s32.totalorder %v75, 16
  %vm364 = vcmp.ge.s32.totalorder %v76, 16
  %vm365 = vcmp.ge.s32.totalorder %v77, 16
  %vm366 = vcmp.ge.s32.totalorder %v78, 16
  %vm367 = vcmp.ge.s32.totalorder %v79, 16
  %vm368 = vcmp.lt.s32.totalorder %v272, 15
  %vm369 = vcmp.lt.s32.totalorder %v273, 15
  %vm370 = vcmp.lt.s32.totalorder %v274, 15
  %vm371 = vcmp.lt.s32.totalorder %v275, 15
  %vm372 = vcmp.lt.s32.totalorder %v276, 15
  %vm373 = vcmp.lt.s32.totalorder %v277, 15
  %vm374 = vcmp.lt.s32.totalorder %v278, 15
  %vm375 = vcmp.lt.s32.totalorder %v279, 15
  %vm376 = vcmp.lt.s32.totalorder %v280, 15
  %vm377 = vcmp.lt.s32.totalorder %v281, 15
  %vm378 = vcmp.lt.s32.totalorder %v282, 15
  %vm379 = vcmp.lt.s32.totalorder %v283, 15
  %vm380 = vcmp.lt.s32.totalorder %v284, 15
  %vm381 = vcmp.lt.s32.totalorder %v285, 15
  %vm382 = vcmp.lt.s32.totalorder %v286, 15
  %vm383 = vcmp.lt.s32.totalorder %v287, 15
  %vm384 = vcmp.lt.s32.totalorder %v288, 15
  %vm385 = vcmp.lt.s32.totalorder %v289, 15
  %vm386 = vcmp.lt.s32.totalorder %v290, 15
  %vm387 = vcmp.lt.s32.totalorder %v291, 15
  %vm388 = vcmp.lt.s32.totalorder %v292, 15
  %vm389 = vcmp.lt.s32.totalorder %v293, 15
  %vm390 = vcmp.lt.s32.totalorder %v294, 15
  %vm391 = vcmp.lt.s32.totalorder %v295, 15
  %vm392 = vcmp.lt.s32.totalorder %v296, 15
  %vm393 = vcmp.lt.s32.totalorder %v297, 15
  %vm394 = vcmp.lt.s32.totalorder %v298, 15
  %vm395 = vcmp.lt.s32.totalorder %v299, 15
  %vm396 = vcmp.lt.s32.totalorder %v300, 15
  %vm397 = vcmp.lt.s32.totalorder %v301, 15
  %vm398 = vcmp.lt.s32.totalorder %v302, 15
  %vm399 = vcmp.lt.s32.totalorder %v303, 15
  %vm400 = vcmp.gt.s32.totalorder %v272, 0
  %vm401 = vcmp.gt.s32.totalorder %v273, 0
  %vm402 = vcmp.gt.s32.totalorder %v274, 0
  %vm403 = vcmp.gt.s32.totalorder %v275, 0
  %vm404 = vcmp.gt.s32.totalorder %v276, 0
  %vm405 = vcmp.gt.s32.totalorder %v277, 0
  %vm406 = vcmp.gt.s32.totalorder %v278, 0
  %vm407 = vcmp.gt.s32.totalorder %v279, 0
  %vm408 = vcmp.gt.s32.totalorder %v280, 0
  %vm409 = vcmp.gt.s32.totalorder %v281, 0
  %vm410 = vcmp.gt.s32.totalorder %v282, 0
  %vm411 = vcmp.gt.s32.totalorder %v283, 0
  %vm412 = vcmp.gt.s32.totalorder %v284, 0
  %vm413 = vcmp.gt.s32.totalorder %v285, 0
  %vm414 = vcmp.gt.s32.totalorder %v286, 0
  %vm415 = vcmp.gt.s32.totalorder %v287, 0
  %vm416 = vcmp.gt.s32.totalorder %v288, 0
  %vm417 = vcmp.gt.s32.totalorder %v289, 0
  %vm418 = vcmp.gt.s32.totalorder %v290, 0
  %vm419 = vcmp.gt.s32.totalorder %v291, 0
  %vm420 = vcmp.gt.s32.totalorder %v292, 0
  %vm421 = vcmp.gt.s32.totalorder %v293, 0
  %vm422 = vcmp.gt.s32.totalorder %v294, 0
  %vm423 = vcmp.gt.s32.totalorder %v295, 0
  %vm424 = vcmp.gt.s32.totalorder %v296, 0
  %vm425 = vcmp.gt.s32.totalorder %v297, 0
  %vm426 = vcmp.gt.s32.totalorder %v298, 0
  %vm427 = vcmp.gt.s32.totalorder %v299, 0
  %vm428 = vcmp.gt.s32.totalorder %v300, 0
  %vm429 = vcmp.gt.s32.totalorder %v301, 0
  %vm430 = vcmp.gt.s32.totalorder %v302, 0
  %vm431 = vcmp.gt.s32.totalorder %v303, 0
  %vm432 = vmand %vm304, %vm368
  %vm433 = vmand %vm305, %vm369
  %vm434 = vmand %vm306, %vm370
  %vm435 = vmand %vm307, %vm371
  %vm436 = vmand %vm308, %vm372
  %vm437 = vmand %vm309, %vm373
  %vm438 = vmand %vm310, %vm374
  %vm439 = vmand %vm311, %vm375
  %vm440 = vmand %vm312, %vm376
  %vm441 = vmand %vm313, %vm377
  %vm442 = vmand %vm314, %vm378
  %vm443 = vmand %vm315, %vm379
  %vm444 = vmand %vm316, %vm380
  %vm445 = vmand %vm317, %vm381
  %vm446 = vmand %vm318, %vm382
  %vm447 = vmand %vm319, %vm383
  %vm448 = vmand %vm320, %vm384
  %vm449 = vmand %vm321, %vm385
  %vm450 = vmand %vm322, %vm386
  %vm451 = vmand %vm323, %vm387
  %vm452 = vmand %vm324, %vm388
  %vm453 = vmand %vm325, %vm389
  %vm454 = vmand %vm326, %vm390
  %vm455 = vmand %vm327, %vm391
  %vm456 = vmand %vm328, %vm392
  %vm457 = vmand %vm329, %vm393
  %vm458 = vmand %vm330, %vm394
  %vm459 = vmand %vm331, %vm395
  %vm460 = vmand %vm332, %vm396
  %vm461 = vmand %vm333, %vm397
  %vm462 = vmand %vm334, %vm398
  %vm463 = vmand %vm335, %vm399
  %v464 = vsel %vm432, %v15, 0.0
  %v465 = vsel %vm433, %v16, 0.0
  %v466 = vsel %vm434, %v17, 0.0
  %v467 = vsel %vm435, %v18, 0.0
  %v468 = vsel %vm436, %v19, 0.0
  %v469 = vsel %vm437, %v20, 0.0
  %v470 = vsel %vm438, %v21, 0.0
  %v471 = vsel %vm439, %v22, 0.0
  %v472 = vsel %vm440, %v23, 0.0
  %v473 = vsel %vm441, %v24, 0.0
  %v474 = vsel %vm442, %v25, 0.0
  %v475 = vsel %vm443, %v26, 0.0
  %v476 = vsel %vm444, %v27, 0.0
  %v477 = vsel %vm445, %v28, 0.0
  %v478 = vsel %vm446, %v29, 0.0
  %v479 = vsel %vm447, %v30, 0.0
  %v480 = vsel %vm448, %v31, 0.0
  %v481 = vsel %vm449, %v32, 0.0
  %v482 = vsel %vm450, %v33, 0.0
  %v483 = vsel %vm451, %v34, 0.0
  %v484 = vsel %vm452, %v35, 0.0
  %v485 = vsel %vm453, %v36, 0.0
  %v486 = vsel %vm454, %v37, 0.0
  %v487 = vsel %vm455, %v38, 0.0
  %v488 = vsel %vm456, %v39, 0.0
  %v489 = vsel %vm457, %v40, 0.0
  %v490 = vsel %vm458, %v41, 0.0
  %v491 = vsel %vm459, %v42, 0.0
  %v492 = vsel %vm460, %v43, 0.0
  %v493 = vsel %vm461, %v44, 0.0
  %v494 = vsel %vm462, %v45, 0.0
  %v495 = vsel %vm463, %v46, 0.0
  %v496 = vrot.slane %v464, 7
  %v497 = vrot.slane %v465, 7
  %v498 = vrot.slane %v466, 7
  %v499 = vrot.slane %v467, 7
  %v500 = vrot.slane %v468, 7
  %v501 = vrot.slane %v469, 7
  %v502 = vrot.slane %v470, 7
  %v503 = vrot.slane %v471, 7
  %v504 = vrot.slane %v472, 7
  %v505 = vrot.slane %v473, 7
  %v506 = vrot.slane %v474, 7
  %v507 = vrot.slane %v475, 7
  %v508 = vrot.slane %v476, 7
  %v509 = vrot.slane %v477, 7
  %v510 = vrot.slane %v478, 7
  %v511 = vrot.slane %v479, 7
  %v512 = vrot.slane %v480, 7
  %v513 = vrot.slane %v481, 7
  %v514 = vrot.slane %v482, 7
  %v515 = vrot.slane %v483, 7
  %v516 = vrot.slane %v484, 7
  %v517 = vrot.slane %v485, 7
  %v518 = vrot.slane %v486, 7
  %v519 = vrot.slane %v487, 7
  %v520 = vrot.slane %v488, 7
  %v521 = vrot.slane %v489, 7
  %v522 = vrot.slane %v490, 7
  %v523 = vrot.slane %v491, 7
  %v524 = vrot.slane %v492, 7
  %v525 = vrot.slane %v493, 7
  %v526 = vrot.slane %v494, 7
  %v527 = vrot.slane %v495, 7
  %vm528 = vcmp.lt.s32.totalorder %v48, 1
  %v529 = vsel %vm528, %v526, %v527
  %v530 = vsel %vm528, %v525, %v526
  %v531 = vsel %vm528, %v524, %v525
  %v532 = vsel %vm528, %v523, %v524
  %v533 = vsel %vm528, %v522, %v523
  %v534 = vsel %vm528, %v521, %v522
  %v535 = vsel %vm528, %v520, %v521
  %v536 = vsel %vm528, %v519, %v520
  %v537 = vsel %vm528, %v518, %v519
  %v538 = vsel %vm528, %v517, %v518
  %v539 = vsel %vm528, %v516, %v517
  %v540 = vsel %vm528, %v515, %v516
  %v541 = vsel %vm528, %v514, %v515
  %v542 = vsel %vm528, %v513, %v514
  %v543 = vsel %vm528, %v512, %v513
  %v544 = vsel %vm528, %v511, %v512
  %v545 = vsel %vm528, %v510, %v511
  %v546 = vsel %vm528, %v509, %v510
  %v547 = vsel %vm528, %v508, %v509
  %v548 = vsel %vm528, %v507, %v508
  %v549 = vsel %vm528, %v506, %v507
  %v550 = vsel %vm528, %v505, %v506
  %v551 = vsel %vm528, %v504, %v505
  %v552 = vsel %vm528, %v503, %v504
  %v553 = vsel %vm528, %v502, %v503
  %v554 = vsel %vm528, %v501, %v502
  %v555 = vsel %vm528, %v500, %v501
  %v556 = vsel %vm528, %v499, %v500
  %v557 = vsel %vm528, %v498, %v499
  %v558 = vsel %vm528, %v497, %v498
  %v559 = vsel %vm528, %v496, %v497
  %v560 = vsel %vm528, %v527, %v496
  %v561 = vsel %vm304, %v15, 0.0
  %v562 = vsel %vm305, %v16, 0.0
  %v563 = vsel %vm306, %v17, 0.0
  %v564 = vsel %vm307, %v18, 0.0
  %v565 = vsel %vm308, %v19, 0.0
  %v566 = vsel %vm309, %v20, 0.0
  %v567 = vsel %vm310, %v21, 0.0
  %v568 = vsel %vm311, %v22, 0.0
  %v569 = vsel %vm312, %v23, 0.0
  %v570 = vsel %vm313, %v24, 0.0
  %v571 = vsel %vm314, %v25, 0.0
  %v572 = vsel %vm315, %v26, 0.0
  %v573 = vsel %vm316, %v27, 0.0
  %v574 = vsel %vm317, %v28, 0.0
  %v575 = vsel %vm318, %v29, 0.0
  %v576 = vsel %vm319, %v30, 0.0
  %v577 = vsel %vm320, %v31, 0.0
  %v578 = vsel %vm321, %v32, 0.0
  %v579 = vsel %vm322, %v33, 0.0
  %v580 = vsel %vm323, %v34, 0.0
  %v581 = vsel %vm324, %v35, 0.0
  %v582 = vsel %vm325, %v36, 0.0
  %v583 = vsel %vm326, %v37, 0.0
  %v584 = vsel %vm327, %v38, 0.0
  %v585 = vsel %vm328, %v39, 0.0
  %v586 = vsel %vm329, %v40, 0.0
  %v587 = vsel %vm330, %v41, 0.0
  %v588 = vsel %vm331, %v42, 0.0
  %v589 = vsel %vm332, %v43, 0.0
  %v590 = vsel %vm333, %v44, 0.0
  %v591 = vsel %vm334, %v45, 0.0
  %v592 = vsel %vm335, %v46, 0.0
  %vm593 = vmand %vm304, %vm400
  %vm594 = vmand %vm305, %vm401
  %vm595 = vmand %vm306, %vm402
  %vm596 = vmand %vm307, %vm403
  %vm597 = vmand %vm308, %vm404
  %vm598 = vmand %vm309, %vm405
  %vm599 = vmand %vm310, %vm406
  %vm600 = vmand %vm311, %vm407
  %vm601 = vmand %vm312, %vm408
  %vm602 = vmand %vm313, %vm409
  %vm603 = vmand %vm314, %vm410
  %vm604 = vmand %vm315, %vm411
  %vm605 = vmand %vm316, %vm412
  %vm606 = vmand %vm317, %vm413
  %vm607 = vmand %vm318, %vm414
  %vm608 = vmand %vm319, %vm415
  %vm609 = vmand %vm320, %vm416
  %vm610 = vmand %vm321, %vm417
  %vm611 = vmand %vm322, %vm418
  %vm612 = vmand %vm323, %vm419
  %vm613 = vmand %vm324, %vm420
  %vm614 = vmand %vm325, %vm421
  %vm615 = vmand %vm326, %vm422
  %vm616 = vmand %vm327, %vm423
  %vm617 = vmand %vm328, %vm424
  %vm618 = vmand %vm329, %vm425
  %vm619 = vmand %vm330, %vm426
  %vm620 = vmand %vm331, %vm427
  %vm621 = vmand %vm332, %vm428
  %vm622 = vmand %vm333, %vm429
  %vm623 = vmand %vm334, %vm430
  %vm624 = vmand %vm335, %vm431
  %v625 = vsel %vm593, %v15, 0.0
  %v626 = vsel %vm594, %v16, 0.0
  %v627 = vsel %vm595, %v17, 0.0
  %v628 = vsel %vm596, %v18, 0.0
  %v629 = vsel %vm597, %v19, 0.0
  %v630 = vsel %vm598, %v20, 0.0
  %v631 = vsel %vm599, %v21, 0.0
  %v632 = vsel %vm600, %v22, 0.0
  %v633 = vsel %vm601, %v23, 0.0
  %v634 = vsel %vm602, %v24, 0.0
  %v635 = vsel %vm603, %v25, 0.0
  %v636 = vsel %vm604, %v26, 0.0
  %v637 = vsel %vm605, %v27, 0.0
  %v638 = vsel %vm606, %v28, 0.0
  %v639 = vsel %vm607, %v29, 0.0
  %v640 = vsel %vm608, %v30, 0.0
  %v641 = vsel %vm609, %v31, 0.0
  %v642 = vsel %vm610, %v32, 0.0
  %v643 = vsel %vm611, %v33, 0.0
  %v644 = vsel %vm612, %v34, 0.0
  %v645 = vsel %vm613, %v35, 0.0
  %v646 = vsel %vm614, %v36, 0.0
  %v647 = vsel %vm615, %v37, 0.0
  %v648 = vsel %vm616, %v38, 0.0
  %v649 = vsel %vm617, %v39, 0.0
  %v650 = vsel %vm618, %v40, 0.0
  %v651 = vsel %vm619, %v41, 0.0
  %v652 = vsel %vm620, %v42, 0.0
  %v653 = vsel %vm621, %v43, 0.0
  %v654 = vsel %vm622, %v44, 0.0
  %v655 = vsel %vm623, %v45, 0.0
  %v656 = vsel %vm624, %v46, 0.0
  %v657 = vrot.slane %v625, 1
  %v658 = vrot.slane %v626, 1
  %v659 = vrot.slane %v627, 1
  %v660 = vrot.slane %v628, 1
  %v661 = vrot.slane %v629, 1
  %v662 = vrot.slane %v630, 1
  %v663 = vrot.slane %v631, 1
  %v664 = vrot.slane %v632, 1
  %v665 = vrot.slane %v633, 1
  %v666 = vrot.slane %v634, 1
  %v667 = vrot.slane %v635, 1
  %v668 = vrot.slane %v636, 1
  %v669 = vrot.slane %v637, 1
  %v670 = vrot.slane %v638, 1
  %v671 = vrot.slane %v639, 1
  %v672 = vrot.slane %v640, 1
  %v673 = vrot.slane %v641, 1
  %v674 = vrot.slane %v642, 1
  %v675 = vrot.slane %v643, 1
  %v676 = vrot.slane %v644, 1
  %v677 = vrot.slane %v645, 1
  %v678 = vrot.slane %v646, 1
  %v679 = vrot.slane %v647, 1
  %v680 = vrot.slane %v648, 1
  %v681 = vrot.slane %v649, 1
  %v682 = vrot.slane %v650, 1
  %v683 = vrot.slane %v651, 1
  %v684 = vrot.slane %v652, 1
  %v685 = vrot.slane %v653, 1
  %v686 = vrot.slane %v654, 1
  %v687 = vrot.slane %v655, 1
  %v688 = vrot.slane %v656, 1
  %vm689 = vcmp.lt.s32.totalorder %v48, 7
  %v690 = vsel %vm689, %v687, %v688
  %v691 = vsel %vm689, %v686, %v687
  %v692 = vsel %vm689, %v685, %v686
  %v693 = vsel %vm689, %v684, %v685
  %v694 = vsel %vm689, %v683, %v684
  %v695 = vsel %vm689, %v682, %v683
  %v696 = vsel %vm689, %v681, %v682
  %v697 = vsel %vm689, %v680, %v681
  %v698 = vsel %vm689, %v679, %v680
  %v699 = vsel %vm689, %v678, %v679
  %v700 = vsel %vm689, %v677, %v678
  %v701 = vsel %vm689, %v676, %v677
  %v702 = vsel %vm689, %v675, %v676
  %v703 = vsel %vm689, %v674, %v675
  %v704 = vsel %vm689, %v673, %v674
  %v705 = vsel %vm689, %v672, %v673
  %v706 = vsel %vm689, %v671, %v672
  %v707 = vsel %vm689, %v670, %v671
  %v708 = vsel %vm689, %v669, %v670
  %v709 = vsel %vm689, %v668, %v669
  %v710 = vsel %vm689, %v667, %v668
  %v711 = vsel %vm689, %v666, %v667
  %v712 = vsel %vm689, %v665, %v666
  %v713 = vsel %vm689, %v664, %v665
  %v714 = vsel %vm689, %v663, %v664
  %v715 = vsel %vm689, %v662, %v663
  %v716 = vsel %vm689, %v661, %v662
  %v717 = vsel %vm689, %v660, %v661
  %v718 = vsel %vm689, %v659, %v660
  %v719 = vsel %vm689, %v658, %v659
  %v720 = vsel %vm689, %v657, %v658
  %v721 = vsel %vm689, %v688, %v657
  %v722 = vsel %vm368, %v15, 0.0
  %v723 = vsel %vm369, %v16, 0.0
  %v724 = vsel %vm370, %v17, 0.0
  %v725 = vsel %vm371, %v18, 0.0
  %v726 = vsel %vm372, %v19, 0.0
  %v727 = vsel %vm373, %v20, 0.0
  %v728 = vsel %vm374, %v21, 0.0
  %v729 = vsel %vm375, %v22, 0.0
  %v730 = vsel %vm376, %v23, 0.0
  %v731 = vsel %vm377, %v24, 0.0
  %v732 = vsel %vm378, %v25, 0.0
  %v733 = vsel %vm379, %v26, 0.0
  %v734 = vsel %vm380, %v27, 0.0
  %v735 = vsel %vm381, %v28, 0.0
  %v736 = vsel %vm382, %v29, 0.0
  %v737 = vsel %vm383, %v30, 0.0
  %v738 = vsel %vm384, %v31, 0.0
  %v739 = vsel %vm385, %v32, 0.0
  %v740 = vsel %vm386, %v33, 0.0
  %v741 = vsel %vm387, %v34, 0.0
  %v742 = vsel %vm388, %v35, 0.0
  %v743 = vsel %vm389, %v36, 0.0
  %v744 = vsel %vm390, %v37, 0.0
  %v745 = vsel %vm391, %v38, 0.0
  %v746 = vsel %vm392, %v39, 0.0
  %v747 = vsel %vm393, %v40, 0.0
  %v748 = vsel %vm394, %v41, 0.0
  %v749 = vsel %vm395, %v42, 0.0
  %v750 = vsel %vm396, %v43, 0.0
  %v751 = vsel %vm397, %v44, 0.0
  %v752 = vsel %vm398, %v45, 0.0
  %v753 = vsel %vm399, %v46, 0.0
  %v754 = vrot.slane %v722, 7
  %v755 = vrot.slane %v723, 7
  %v756 = vrot.slane %v724, 7
  %v757 = vrot.slane %v725, 7
  %v758 = vrot.slane %v726, 7
  %v759 = vrot.slane %v727, 7
  %v760 = vrot.slane %v728, 7
  %v761 = vrot.slane %v729, 7
  %v762 = vrot.slane %v730, 7
  %v763 = vrot.slane %v731, 7
  %v764 = vrot.slane %v732, 7
  %v765 = vrot.slane %v733, 7
  %v766 = vrot.slane %v734, 7
  %v767 = vrot.slane %v735, 7
  %v768 = vrot.slane %v736, 7
  %v769 = vrot.slane %v737, 7
  %v770 = vrot.slane %v738, 7
  %v771 = vrot.slane %v739, 7
  %v772 = vrot.slane %v740, 7
  %v773 = vrot.slane %v741, 7
  %v774 = vrot.slane %v742, 7
  %v775 = vrot.slane %v743, 7
  %v776 = vrot.slane %v744, 7
  %v777 = vrot.slane %v745, 7
  %v778 = vrot.slane %v746, 7
  %v779 = vrot.slane %v747, 7
  %v780 = vrot.slane %v748, 7
  %v781 = vrot.slane %v749, 7
  %v782 = vrot.slane %v750, 7
  %v783 = vrot.slane %v751, 7
  %v784 = vrot.slane %v752, 7
  %v785 = vrot.slane %v753, 7
  %v786 = vsel %vm528, %v784, %v785
  %v787 = vsel %vm528, %v783, %v784
  %v788 = vsel %vm528, %v782, %v783
  %v789 = vsel %vm528, %v781, %v782
  %v790 = vsel %vm528, %v780, %v781
  %v791 = vsel %vm528, %v779, %v780
  %v792 = vsel %vm528, %v778, %v779
  %v793 = vsel %vm528, %v777, %v778
  %v794 = vsel %vm528, %v776, %v777
  %v795 = vsel %vm528, %v775, %v776
  %v796 = vsel %vm528, %v774, %v775
  %v797 = vsel %vm528, %v773, %v774
  %v798 = vsel %vm528, %v772, %v773
  %v799 = vsel %vm528, %v771, %v772
  %v800 = vsel %vm528, %v770, %v771
  %v801 = vsel %vm528, %v769, %v770
  %v802 = vsel %vm528, %v768, %v769
  %v803 = vsel %vm528, %v767, %v768
  %v804 = vsel %vm528, %v766, %v767
  %v805 = vsel %vm528, %v765, %v766
  %v806 = vsel %vm528, %v764, %v765
  %v807 = vsel %vm528, %v763, %v764
  %v808 = vsel %vm528, %v762, %v763
  %v809 = vsel %vm528, %v761, %v762
  %v810 = vsel %vm528, %v760, %v761
  %v811 = vsel %vm528, %v759, %v760
  %v812 = vsel %vm528, %v758, %v759
  %v813 = vsel %vm528, %v757, %v758
  %v814 = vsel %vm528, %v756, %v757
  %v815 = vsel %vm528, %v755, %v756
  %v816 = vsel %vm528, %v754, %v755
  %v817 = vsel %vm528, %v785, %v754
  %v818 = vsel %vm400, %v15, 0.0
  %v819 = vsel %vm401, %v16, 0.0
  %v820 = vsel %vm402, %v17, 0.0
  %v821 = vsel %vm403, %v18, 0.0
  %v822 = vsel %vm404, %v19, 0.0
  %v823 = vsel %vm405, %v20, 0.0
  %v824 = vsel %vm406, %v21, 0.0
  %v825 = vsel %vm407, %v22, 0.0
  %v826 = vsel %vm408, %v23, 0.0
  %v827 = vsel %vm409, %v24, 0.0
  %v828 = vsel %vm410, %v25, 0.0
  %v829 = vsel %vm411, %v26, 0.0
  %v830 = vsel %vm412, %v27, 0.0
  %v831 = vsel %vm413, %v28, 0.0
  %v832 = vsel %vm414, %v29, 0.0
  %v833 = vsel %vm415, %v30, 0.0
  %v834 = vsel %vm416, %v31, 0.0
  %v835 = vsel %vm417, %v32, 0.0
  %v836 = vsel %vm418, %v33, 0.0
  %v837 = vsel %vm419, %v34, 0.0
  %v838 = vsel %vm420, %v35, 0.0
  %v839 = vsel %vm421, %v36, 0.0
  %v840 = vsel %vm422, %v37, 0.0
  %v841 = vsel %vm423, %v38, 0.0
  %v842 = vsel %vm424, %v39, 0.0
  %v843 = vsel %vm425, %v40, 0.0
  %v844 = vsel %vm426, %v41, 0.0
  %v845 = vsel %vm427, %v42, 0.0
  %v846 = vsel %vm428, %v43, 0.0
  %v847 = vsel %vm429, %v44, 0.0
  %v848 = vsel %vm430, %v45, 0.0
  %v849 = vsel %vm431, %v46, 0.0
  %v850 = vrot.slane %v818, 1
  %v851 = vrot.slane %v819, 1
  %v852 = vrot.slane %v820, 1
  %v853 = vrot.slane %v821, 1
  %v854 = vrot.slane %v822, 1
  %v855 = vrot.slane %v823, 1
  %v856 = vrot.slane %v824, 1
  %v857 = vrot.slane %v825, 1
  %v858 = vrot.slane %v826, 1
  %v859 = vrot.slane %v827, 1
  %v860 = vrot.slane %v828, 1
  %v861 = vrot.slane %v829, 1
  %v862 = vrot.slane %v830, 1
  %v863 = vrot.slane %v831, 1
  %v864 = vrot.slane %v832, 1
  %v865 = vrot.slane %v833, 1
  %v866 = vrot.slane %v834, 1
  %v867 = vrot.slane %v835, 1
  %v868 = vrot.slane %v836, 1
  %v869 = vrot.slane %v837, 1
  %v870 = vrot.slane %v838, 1
  %v871 = vrot.slane %v839, 1
  %v872 = vrot.slane %v840, 1
  %v873 = vrot.slane %v841, 1
  %v874 = vrot.slane %v842, 1
  %v875 = vrot.slane %v843, 1
  %v876 = vrot.slane %v844, 1
  %v877 = vrot.slane %v845, 1
  %v878 = vrot.slane %v846, 1
  %v879 = vrot.slane %v847, 1
  %v880 = vrot.slane %v848, 1
  %v881 = vrot.slane %v849, 1
  %v882 = vsel %vm689, %v880, %v881
  %v883 = vsel %vm689, %v879, %v880
  %v884 = vsel %vm689, %v878, %v879
  %v885 = vsel %vm689, %v877, %v878
  %v886 = vsel %vm689, %v876, %v877
  %v887 = vsel %vm689, %v875, %v876
  %v888 = vsel %vm689, %v874, %v875
  %v889 = vsel %vm689, %v873, %v874
  %v890 = vsel %vm689, %v872, %v873
  %v891 = vsel %vm689, %v871, %v872
  %v892 = vsel %vm689, %v870, %v871
  %v893 = vsel %vm689, %v869, %v870
  %v894 = vsel %vm689, %v868, %v869
  %v895 = vsel %vm689, %v867, %v868
  %v896 = vsel %vm689, %v866, %v867
  %v897 = vsel %vm689, %v865, %v866
  %v898 = vsel %vm689, %v864, %v865
  %v899 = vsel %vm689, %v863, %v864
  %v900 = vsel %vm689, %v862, %v863
  %v901 = vsel %vm689, %v861, %v862
  %v902 = vsel %vm689, %v860, %v861
  %v903 = vsel %vm689, %v859, %v860
  %v904 = vsel %vm689, %v858, %v859
  %v905 = vsel %vm689, %v857, %v858
  %v906 = vsel %vm689, %v856, %v857
  %v907 = vsel %vm689, %v855, %v856
  %v908 = vsel %vm689, %v854, %v855
  %v909 = vsel %vm689, %v853, %v854
  %v910 = vsel %vm689, %v852, %v853
  %v911 = vsel %vm689, %v851, %v852
  %v912 = vsel %vm689, %v850, %v851
  %v913 = vsel %vm689, %v881, %v850
  %vm914 = vmand %vm336, %vm368
  %vm915 = vmand %vm337, %vm369
  %vm916 = vmand %vm338, %vm370
  %vm917 = vmand %vm339, %vm371
  %vm918 = vmand %vm340, %vm372
  %vm919 = vmand %vm341, %vm373
  %vm920 = vmand %vm342, %vm374
  %vm921 = vmand %vm343, %vm375
  %vm922 = vmand %vm344, %vm376
  %vm923 = vmand %vm345, %vm377
  %vm924 = vmand %vm346, %vm378
  %vm925 = vmand %vm347, %vm379
  %vm926 = vmand %vm348, %vm380
  %vm927 = vmand %vm349, %vm381
  %vm928 = vmand %vm350, %vm382
  %vm929 = vmand %vm351, %vm383
  %vm930 = vmand %vm352, %vm384
  %vm931 = vmand %vm353, %vm385
  %vm932 = vmand %vm354, %vm386
  %vm933 = vmand %vm355, %vm387
  %vm934 = vmand %vm356, %vm388
  %vm935 = vmand %vm357, %vm389
  %vm936 = vmand %vm358, %vm390
  %vm937 = vmand %vm359, %vm391
  %vm938 = vmand %vm360, %vm392
  %vm939 = vmand %vm361, %vm393
  %vm940 = vmand %vm362, %vm394
  %vm941 = vmand %vm363, %vm395
  %vm942 = vmand %vm364, %vm396
  %vm943 = vmand %vm365, %vm397
  %vm944 = vmand %vm366, %vm398
  %vm945 = vmand %vm367, %vm399
  %v946 = vsel %vm914, %v15, 0.0
  %v947 = vsel %vm915, %v16, 0.0
  %v948 = vsel %vm916, %v17, 0.0
  %v949 = vsel %vm917, %v18, 0.0
  %v950 = vsel %vm918, %v19, 0.0
  %v951 = vsel %vm919, %v20, 0.0
  %v952 = vsel %vm920, %v21, 0.0
  %v953 = vsel %vm921, %v22, 0.0
  %v954 = vsel %vm922, %v23, 0.0
  %v955 = vsel %vm923, %v24, 0.0
  %v956 = vsel %vm924, %v25, 0.0
  %v957 = vsel %vm925, %v26, 0.0
  %v958 = vsel %vm926, %v27, 0.0
  %v959 = vsel %vm927, %v28, 0.0
  %v960 = vsel %vm928, %v29, 0.0
  %v961 = vsel %vm929, %v30, 0.0
  %v962 = vsel %vm930, %v31, 0.0
  %v963 = vsel %vm931, %v32, 0.0
  %v964 = vsel %vm932, %v33, 0.0
  %v965 = vsel %vm933, %v34, 0.0
  %v966 = vsel %vm934, %v35, 0.0
  %v967 = vsel %vm935, %v36, 0.0
  %v968 = vsel %vm936, %v37, 0.0
  %v969 = vsel %vm937, %v38, 0.0
  %v970 = vsel %vm938, %v39, 0.0
  %v971 = vsel %vm939, %v40, 0.0
  %v972 = vsel %vm940, %v41, 0.0
  %v973 = vsel %vm941, %v42, 0.0
  %v974 = vsel %vm942, %v43, 0.0
  %v975 = vsel %vm943, %v44, 0.0
  %v976 = vsel %vm944, %v45, 0.0
  %v977 = vsel %vm945, %v46, 0.0
  %v978 = vrot.slane %v946, 7
  %v979 = vrot.slane %v947, 7
  %v980 = vrot.slane %v948, 7
  %v981 = vrot.slane %v949, 7
  %v982 = vrot.slane %v950, 7
  %v983 = vrot.slane %v951, 7
  %v984 = vrot.slane %v952, 7
  %v985 = vrot.slane %v953, 7
  %v986 = vrot.slane %v954, 7
  %v987 = vrot.slane %v955, 7
  %v988 = vrot.slane %v956, 7
  %v989 = vrot.slane %v957, 7
  %v990 = vrot.slane %v958, 7
  %v991 = vrot.slane %v959, 7
  %v992 = vrot.slane %v960, 7
  %v993 = vrot.slane %v961, 7
  %v994 = vrot.slane %v962, 7
  %v995 = vrot.slane %v963, 7
  %v996 = vrot.slane %v964, 7
  %v997 = vrot.slane %v965, 7
  %v998 = vrot.slane %v966, 7
  %v999 = vrot.slane %v967, 7
  %v1000 = vrot.slane %v968, 7
  %v1001 = vrot.slane %v969, 7
  %v1002 = vrot.slane %v970, 7
  %v1003 = vrot.slane %v971, 7
  %v1004 = vrot.slane %v972, 7
  %v1005 = vrot.slane %v973, 7
  %v1006 = vrot.slane %v974, 7
  %v1007 = vrot.slane %v975, 7
  %v1008 = vrot.slane %v976, 7
  %v1009 = vrot.slane %v977, 7
  %v1010 = vsel %vm528, %v1008, %v1009
  %v1011 = vsel %vm528, %v1007, %v1008
  %v1012 = vsel %vm528, %v1006, %v1007
  %v1013 = vsel %vm528, %v1005, %v1006
  %v1014 = vsel %vm528, %v1004, %v1005
  %v1015 = vsel %vm528, %v1003, %v1004
  %v1016 = vsel %vm528, %v1002, %v1003
  %v1017 = vsel %vm528, %v1001, %v1002
  %v1018 = vsel %vm528, %v1000, %v1001
  %v1019 = vsel %vm528, %v999, %v1000
  %v1020 = vsel %vm528, %v998, %v999
  %v1021 = vsel %vm528, %v997, %v998
  %v1022 = vsel %vm528, %v996, %v997
  %v1023 = vsel %vm528, %v995, %v996
  %v1024 = vsel %vm528, %v994, %v995
  %v1025 = vsel %vm528, %v993, %v994
  %v1026 = vsel %vm528, %v992, %v993
  %v1027 = vsel %vm528, %v991, %v992
  %v1028 = vsel %vm528, %v990, %v991
  %v1029 = vsel %vm528, %v989, %v990
  %v1030 = vsel %vm528, %v988, %v989
  %v1031 = vsel %vm528, %v987, %v988
  %v1032 = vsel %vm528, %v986, %v987
  %v1033 = vsel %vm528, %v985, %v986
  %v1034 = vsel %vm528, %v984, %v985
  %v1035 = vsel %vm528, %v983, %v984
  %v1036 = vsel %vm528, %v982, %v983
  %v1037 = vsel %vm528, %v981, %v982
  %v1038 = vsel %vm528, %v980, %v981
  %v1039 = vsel %vm528, %v979, %v980
  %v1040 = vsel %vm528, %v978, %v979
  %v1041 = vsel %vm528, %v1009, %v978
  %v1042 = vsel %vm336, %v15, 0.0
  %v1043 = vsel %vm337, %v16, 0.0
  %v1044 = vsel %vm338, %v17, 0.0
  %v1045 = vsel %vm339, %v18, 0.0
  %v1046 = vsel %vm340, %v19, 0.0
  %v1047 = vsel %vm341, %v20, 0.0
  %v1048 = vsel %vm342, %v21, 0.0
  %v1049 = vsel %vm343, %v22, 0.0
  %v1050 = vsel %vm344, %v23, 0.0
  %v1051 = vsel %vm345, %v24, 0.0
  %v1052 = vsel %vm346, %v25, 0.0
  %v1053 = vsel %vm347, %v26, 0.0
  %v1054 = vsel %vm348, %v27, 0.0
  %v1055 = vsel %vm349, %v28, 0.0
  %v1056 = vsel %vm350, %v29, 0.0
  %v1057 = vsel %vm351, %v30, 0.0
  %v1058 = vsel %vm352, %v31, 0.0
  %v1059 = vsel %vm353, %v32, 0.0
  %v1060 = vsel %vm354, %v33, 0.0
  %v1061 = vsel %vm355, %v34, 0.0
  %v1062 = vsel %vm356, %v35, 0.0
  %v1063 = vsel %vm357, %v36, 0.0
  %v1064 = vsel %vm358, %v37, 0.0
  %v1065 = vsel %vm359, %v38, 0.0
  %v1066 = vsel %vm360, %v39, 0.0
  %v1067 = vsel %vm361, %v40, 0.0
  %v1068 = vsel %vm362, %v41, 0.0
  %v1069 = vsel %vm363, %v42, 0.0
  %v1070 = vsel %vm364, %v43, 0.0
  %v1071 = vsel %vm365, %v44, 0.0
  %v1072 = vsel %vm366, %v45, 0.0
  %v1073 = vsel %vm367, %v46, 0.0
  %vm1074 = vmand %vm336, %vm400
  %vm1075 = vmand %vm337, %vm401
  %vm1076 = vmand %vm338, %vm402
  %vm1077 = vmand %vm339, %vm403
  %vm1078 = vmand %vm340, %vm404
  %vm1079 = vmand %vm341, %vm405
  %vm1080 = vmand %vm342, %vm406
  %vm1081 = vmand %vm343, %vm407
  %vm1082 = vmand %vm344, %vm408
  %vm1083 = vmand %vm345, %vm409
  %vm1084 = vmand %vm346, %vm410
  %vm1085 = vmand %vm347, %vm411
  %vm1086 = vmand %vm348, %vm412
  %vm1087 = vmand %vm349, %vm413
  %vm1088 = vmand %vm350, %vm414
  %vm1089 = vmand %vm351, %vm415
  %vm1090 = vmand %vm352, %vm416
  %vm1091 = vmand %vm353, %vm417
  %vm1092 = vmand %vm354, %vm418
  %vm1093 = vmand %vm355, %vm419
  %vm1094 = vmand %vm356, %vm420
  %vm1095 = vmand %vm357, %vm421
  %vm1096 = vmand %vm358, %vm422
  %vm1097 = vmand %vm359, %vm423
  %vm1098 = vmand %vm360, %vm424
  %vm1099 = vmand %vm361, %vm425
  %vm1100 = vmand %vm362, %vm426
  %vm1101 = vmand %vm363, %vm427
  %vm1102 = vmand %vm364, %vm428
  %vm1103 = vmand %vm365, %vm429
  %vm1104 = vmand %vm366, %vm430
  %vm1105 = vmand %vm367, %vm431
  %v1106 = vsel %vm1074, %v15, 0.0
  %v1107 = vsel %vm1075, %v16, 0.0
  %v1108 = vsel %vm1076, %v17, 0.0
  %v1109 = vsel %vm1077, %v18, 0.0
  %v1110 = vsel %vm1078, %v19, 0.0
  %v1111 = vsel %vm1079, %v20, 0.0
  %v1112 = vsel %vm1080, %v21, 0.0
  %v1113 = vsel %vm1081, %v22, 0.0
  %v1114 = vsel %vm1082, %v23, 0.0
  %v1115 = vsel %vm1083, %v24, 0.0
  %v1116 = vsel %vm1084, %v25, 0.0
  %v1117 = vsel %vm1085, %v26, 0.0
  %v1118 = vsel %vm1086, %v27, 0.0
  %v1119 = vsel %vm1087, %v28, 0.0
  %v1120 = vsel %vm1088, %v29, 0.0
  %v1121 = vsel %vm1089, %v30, 0.0
  %v1122 = vsel %vm1090, %v31, 0.0
  %v1123 = vsel %vm1091, %v32, 0.0
  %v1124 = vsel %vm1092, %v33, 0.0
  %v1125 = vsel %vm1093, %v34, 0.0
  %v1126 = vsel %vm1094, %v35, 0.0
  %v1127 = vsel %vm1095, %v36, 0.0
  %v1128 = vsel %vm1096, %v37, 0.0
  %v1129 = vsel %vm1097, %v38, 0.0
  %v1130 = vsel %vm1098, %v39, 0.0
  %v1131 = vsel %vm1099, %v40, 0.0
  %v1132 = vsel %vm1100, %v41, 0.0
  %v1133 = vsel %vm1101, %v42, 0.0
  %v1134 = vsel %vm1102, %v43, 0.0
  %v1135 = vsel %vm1103, %v44, 0.0
  %v1136 = vsel %vm1104, %v45, 0.0
  %v1137 = vsel %vm1105, %v46, 0.0
  %v1138 = vrot.slane %v1106, 1
  %v1139 = vrot.slane %v1107, 1
  %v1140 = vrot.slane %v1108, 1
  %v1141 = vrot.slane %v1109, 1
  %v1142 = vrot.slane %v1110, 1
  %v1143 = vrot.slane %v1111, 1
  %v1144 = vrot.slane %v1112, 1
  %v1145 = vrot.slane %v1113, 1
  %v1146 = vrot.slane %v1114, 1
  %v1147 = vrot.slane %v1115, 1
  %v1148 = vrot.slane %v1116, 1
  %v1149 = vrot.slane %v1117, 1
  %v1150 = vrot.slane %v1118, 1
  %v1151 = vrot.slane %v1119, 1
  %v1152 = vrot.slane %v1120, 1
  %v1153 = vrot.slane %v1121, 1
  %v1154 = vrot.slane %v1122, 1
  %v1155 = vrot.slane %v1123, 1
  %v1156 = vrot.slane %v1124, 1
  %v1157 = vrot.slane %v1125, 1
  %v1158 = vrot.slane %v1126, 1
  %v1159 = vrot.slane %v1127, 1
  %v1160 = vrot.slane %v1128, 1
  %v1161 = vrot.slane %v1129, 1
  %v1162 = vrot.slane %v1130, 1
  %v1163 = vrot.slane %v1131, 1
  %v1164 = vrot.slane %v1132, 1
  %v1165 = vrot.slane %v1133, 1
  %v1166 = vrot.slane %v1134, 1
  %v1167 = vrot.slane %v1135, 1
  %v1168 = vrot.slane %v1136, 1
  %v1169 = vrot.slane %v1137, 1
  %v1170 = vsel %vm689, %v1168, %v1169
  %v1171 = vsel %vm689, %v1167, %v1168
  %v1172 = vsel %vm689, %v1166, %v1167
  %v1173 = vsel %vm689, %v1165, %v1166
  %v1174 = vsel %vm689, %v1164, %v1165
  %v1175 = vsel %vm689, %v1163, %v1164
  %v1176 = vsel %vm689, %v1162, %v1163
  %v1177 = vsel %vm689, %v1161, %v1162
  %v1178 = vsel %vm689, %v1160, %v1161
  %v1179 = vsel %vm689, %v1159, %v1160
  %v1180 = vsel %vm689, %v1158, %v1159
  %v1181 = vsel %vm689, %v1157, %v1158
  %v1182 = vsel %vm689, %v1156, %v1157
  %v1183 = vsel %vm689, %v1155, %v1156
  %v1184 = vsel %vm689, %v1154, %v1155
  %v1185 = vsel %vm689, %v1153, %v1154
  %v1186 = vsel %vm689, %v1152, %v1153
  %v1187 = vsel %vm689, %v1151, %v1152
  %v1188 = vsel %vm689, %v1150, %v1151
  %v1189 = vsel %vm689, %v1149, %v1150
  %v1190 = vsel %vm689, %v1148, %v1149
  %v1191 = vsel %vm689, %v1147, %v1148
  %v1192 = vsel %vm689, %v1146, %v1147
  %v1193 = vsel %vm689, %v1145, %v1146
  %v1194 = vsel %vm689, %v1144, %v1145
  %v1195 = vsel %vm689, %v1143, %v1144
  %v1196 = vsel %vm689, %v1142, %v1143
  %v1197 = vsel %vm689, %v1141, %v1142
  %v1198 = vsel %vm689, %v1140, %v1141
  %v1199 = vsel %vm689, %v1139, %v1140
  %v1200 = vsel %vm689, %v1138, %v1139
  %v1201 = vsel %vm689, %v1169, %v1138
  %v1202 = vpack.c.bf16 %v529, %v530
  %v1203 = vpack.c.bf16 %v592, %v591
  %v1204 = vpack.c.bf16 %v721, %v690
  %v1205 = vpack.c.bf16 %v816, %v817
  %v1206 = vpack.c.bf16 %v16, %v15
  %v1207 = vpack.c.bf16 %v911, %v912
  %v1208 = vpack.c.bf16 %v1038, %v1039
  %v1209 = vpack.c.bf16 %v1045, %v1044
  %v1210 = vpack.c.bf16 %v1197, %v1198
  %v1211 = vpack.c.bf16 %v559, %v560
  %v1212 = vpack.c.bf16 %v562, %v561
  %v1213 = vpack.c.bf16 %v719, %v720
  %v1214 = vpack.c.bf16 %v814, %v815
  %v1215 = vpack.c.bf16 %v18, %v17
  %v1216 = vpack.c.bf16 %v909, %v910
  %v1217 = vpack.c.bf16 %v1036, %v1037
  %v1218 = vpack.c.bf16 %v1047, %v1046
  %v1219 = vpack.c.bf16 %v1195, %v1196
  %v1220 = vpack.c.bf16 %v557, %v558
  %v1221 = vpack.c.bf16 %v564, %v563
  %v1222 = vpack.c.bf16 %v717, %v718
  %v1223 = vpack.c.bf16 %v812, %v813
  %v1224 = vpack.c.bf16 %v20, %v19
  %v1225 = vpack.c.bf16 %v907, %v908
  %v1226 = vpack.c.bf16 %v1034, %v1035
  %v1227 = vpack.c.bf16 %v1049, %v1048
  %v1228 = vpack.c.bf16 %v1193, %v1194
  %v1229 = vpack.c.bf16 %v555, %v556
  %v1230 = vpack.c.bf16 %v566, %v565
  %v1231 = vpack.c.bf16 %v715, %v716
  %v1232 = vpack.c.bf16 %v810, %v811
  %v1233 = vpack.c.bf16 %v22, %v21
  %v1234 = vpack.c.bf16 %v905, %v906
  %v1235 = vpack.c.bf16 %v1032, %v1033
  %v1236 = vpack.c.bf16 %v1051, %v1050
  %v1237 = vpack.c.bf16 %v1191, %v1192
  %v1238 = vpack.c.bf16 %v553, %v554
  %v1239 = vpack.c.bf16 %v568, %v567
  %v1240 = vpack.c.bf16 %v713, %v714
  %v1241 = vpack.c.bf16 %v808, %v809
  %v1242 = vpack.c.bf16 %v24, %v23
  %v1243 = vpack.c.bf16 %v903, %v904
  %v1244 = vpack.c.bf16 %v1030, %v1031
  %v1245 = vpack.c.bf16 %v1053, %v1052
  %v1246 = vpack.c.bf16 %v1189, %v1190
  %v1247 = vpack.c.bf16 %v551, %v552
  %v1248 = vpack.c.bf16 %v570, %v569
  %v1249 = vpack.c.bf16 %v711, %v712
  %v1250 = vpack.c.bf16 %v806, %v807
  %v1251 = vpack.c.bf16 %v26, %v25
  %v1252 = vpack.c.bf16 %v901, %v902
  %v1253 = vpack.c.bf16 %v1028, %v1029
  %v1254 = vpack.c.bf16 %v1055, %v1054
  %v1255 = vpack.c.bf16 %v1187, %v1188
  %v1256 = vpack.c.bf16 %v549, %v550
  %v1257 = vpack.c.bf16 %v572, %v571
  %v1258 = vpack.c.bf16 %v709, %v710
  %v1259 = vpack.c.bf16 %v804, %v805
  %v1260 = vpack.c.bf16 %v28, %v27
  %v1261 = vpack.c.bf16 %v899, %v900
  %v1262 = vpack.c.bf16 %v1026, %v1027
  %v1263 = vpack.c.bf16 %v1057, %v1056
  %v1264 = vpack.c.bf16 %v1185, %v1186
  %v1265 = vpack.c.bf16 %v547, %v548
  %v1266 = vpack.c.bf16 %v574, %v573
  %v1267 = vpack.c.bf16 %v707, %v708
  %v1268 = vpack.c.bf16 %v802, %v803
  %v1269 = vpack.c.bf16 %v30, %v29
  %v1270 = vpack.c.bf16 %v897, %v898
  %v1271 = vpack.c.bf16 %v1024, %v1025
  %v1272 = vpack.c.bf16 %v1059, %v1058
  %v1273 = vpack.c.bf16 %v1183, %v1184
  %v1274 = vpack.c.bf16 %v545, %v546
  %v1275 = vpack.c.bf16 %v576, %v575
  %v1276 = vpack.c.bf16 %v705, %v706
  %v1277 = vpack.c.bf16 %v800, %v801
  %v1278 = vpack.c.bf16 %v32, %v31
  %v1279 = vpack.c.bf16 %v895, %v896
  %v1280 = vpack.c.bf16 %v1022, %v1023
  %v1281 = vpack.c.bf16 %v1061, %v1060
  %v1282 = vpack.c.bf16 %v1181, %v1182
  %v1283 = vpack.c.bf16 %v543, %v544
  %v1284 = vpack.c.bf16 %v578, %v577
  %v1285 = vpack.c.bf16 %v703, %v704
  %v1286 = vpack.c.bf16 %v798, %v799
  %v1287 = vpack.c.bf16 %v34, %v33
  %v1288 = vpack.c.bf16 %v893, %v894
  %v1289 = vpack.c.bf16 %v1020, %v1021
  %v1290 = vpack.c.bf16 %v1063, %v1062
  %v1291 = vpack.c.bf16 %v1179, %v1180
  %v1292 = vpack.c.bf16 %v541, %v542
  %v1293 = vpack.c.bf16 %v580, %v579
  %v1294 = vpack.c.bf16 %v701, %v702
  %v1295 = vpack.c.bf16 %v796, %v797
  %v1296 = vpack.c.bf16 %v36, %v35
  %v1297 = vpack.c.bf16 %v891, %v892
  %v1298 = vpack.c.bf16 %v1018, %v1019
  %v1299 = vpack.c.bf16 %v1065, %v1064
  %v1300 = vpack.c.bf16 %v1177, %v1178
  %v1301 = vpack.c.bf16 %v539, %v540
  %v1302 = vpack.c.bf16 %v582, %v581
  %v1303 = vpack.c.bf16 %v699, %v700
  %v1304 = vpack.c.bf16 %v794, %v795
  %v1305 = vpack.c.bf16 %v38, %v37
  %v1306 = vpack.c.bf16 %v889, %v890
  %v1307 = vpack.c.bf16 %v1016, %v1017
  %v1308 = vpack.c.bf16 %v1067, %v1066
  %v1309 = vpack.c.bf16 %v1175, %v1176
  %v1310 = vpack.c.bf16 %v537, %v538
  %v1311 = vpack.c.bf16 %v584, %v583
  %v1312 = vpack.c.bf16 %v697, %v698
  %v1313 = vpack.c.bf16 %v792, %v793
  %v1314 = vpack.c.bf16 %v40, %v39
  %v1315 = vpack.c.bf16 %v887, %v888
  %v1316 = vpack.c.bf16 %v1014, %v1015
  %v1317 = vpack.c.bf16 %v1069, %v1068
  %v1318 = vpack.c.bf16 %v1173, %v1174
  %v1319 = vpack.c.bf16 %v535, %v536
  %v1320 = vpack.c.bf16 %v586, %v585
  %v1321 = vpack.c.bf16 %v695, %v696
  %v1322 = vpack.c.bf16 %v790, %v791
  %v1323 = vpack.c.bf16 %v42, %v41
  %v1324 = vpack.c.bf16 %v885, %v886
  %v1325 = vpack.c.bf16 %v1012, %v1013
  %v1326 = vpack.c.bf16 %v1071, %v1070
  %v1327 = vpack.c.bf16 %v1171, %v1172
  %v1328 = vpack.c.bf16 %v533, %v534
  %v1329 = vpack.c.bf16 %v588, %v587
  %v1330 = vpack.c.bf16 %v693, %v694
  %v1331 = vpack.c.bf16 %v788, %v789
  %v1332 = vpack.c.bf16 %v44, %v43
  %v1333 = vpack.c.bf16 %v883, %v884
  %v1334 = vpack.c.bf16 %v1010, %v1011
  %v1335 = vpack.c.bf16 %v1073, %v1072
  %v1336 = vpack.c.bf16 %v1201, %v1170
  %v1337 = vpack.c.bf16 %v531, %v532
  %v1338 = vpack.c.bf16 %v590, %v589
  %v1339 = vpack.c.bf16 %v691, %v692
  %v1340 = vpack.c.bf16 %v786, %v787
  %v1341 = vpack.c.bf16 %v46, %v45
  %v1342 = vpack.c.bf16 %v913, %v882
  %v1343 = vpack.c.bf16 %v1040, %v1041
  %v1344 = vpack.c.bf16 %v1043, %v1042
  %v1345 = vpack.c.bf16 %v1199, %v1200
  %v1346 = vld [vmem:[%s1] sm:$0xf]
  %v1347 = vld [vmem:[%s1 + $0x4] sm:$0xf]
  %v1348 = vld [vmem:[%s1 + $0x8] sm:$0xf]
  %v1349 = vld [vmem:[%s1 + $0xc] sm:$0xf]
  %v1350 = vld [vmem:[%s1 + $0x10] sm:$0xf]
  %v1351 = vld [vmem:[%s1 + $0x14] sm:$0xf]
  %v1352 = vld [vmem:[%s1 + $0x18] sm:$0xf]
  %v1353 = vld [vmem:[%s1 + $0x1c] sm:$0xf]
  %v1354 = vld [vmem:[%s1 + $0x20] sm:$0xf]
  %v1355 = vld [vmem:[%s1 + $0x24] sm:$0xf]
  %v1356 = vld [vmem:[%s1 + $0x28] sm:$0xf]
  %v1357 = vld [vmem:[%s1 + $0x2c] sm:$0xf]
  %v1358 = vld [vmem:[%s1 + $0x30] sm:$0xf]
  %v1359 = vld [vmem:[%s1 + $0x34] sm:$0xf]
  %v1360 = vld [vmem:[%s1 + $0x38] sm:$0xf]
  %v1361 = vld [vmem:[%s1 + $0x3c] sm:$0xf]
  %v1362 = vld [vmem:[%s1 + $0x40] sm:$0xf]
  %v1363 = vld [vmem:[%s1 + $0x44] sm:$0xf]
  %v1364 = vld [vmem:[%s1 + $0x48] sm:$0xf]
  %v1365 = vld [vmem:[%s1 + $0x4c] sm:$0xf]
  %v1366 = vld [vmem:[%s1 + $0x50] sm:$0xf]
  %v1367 = vld [vmem:[%s1 + $0x54] sm:$0xf]
  %v1368 = vld [vmem:[%s1 + $0x58] sm:$0xf]
  %v1369 = vld [vmem:[%s1 + $0x5c] sm:$0xf]
  %v1370 = vld [vmem:[%s1 + $0x60] sm:$0xf]
  %v1371 = vld [vmem:[%s1 + $0x64] sm:$0xf]
  %v1372 = vld [vmem:[%s1 + $0x68] sm:$0xf]
  %v1373 = vld [vmem:[%s1 + $0x6c] sm:$0xf]
  %v1374 = vld [vmem:[%s1 + $0x70] sm:$0xf]
  %v1375 = vld [vmem:[%s1 + $0x74] sm:$0xf]
  %v1376 = vld [vmem:[%s1 + $0x78] sm:$0xf]
  %v1377 = vld [vmem:[%s1 + $0x7c] sm:$0xf]
  %v1378 = vld [vmem:[%s1 + $0x80] sm:$0xf]
  %v1379 = vld [vmem:[%s1 + $0x84] sm:$0xf]
  %v1380 = vld [vmem:[%s1 + $0x88] sm:$0xf]
  %v1381 = vld [vmem:[%s1 + $0x8c] sm:$0xf]
  %v1382 = vld [vmem:[%s1 + $0x90] sm:$0xf]
  %v1383 = vld [vmem:[%s1 + $0x94] sm:$0xf]
  %v1384 = vld [vmem:[%s1 + $0x98] sm:$0xf]
  %v1385 = vld [vmem:[%s1 + $0x9c] sm:$0xf]
  %v1386 = vld [vmem:[%s1 + $0xa0] sm:$0xf]
  %v1387 = vld [vmem:[%s1 + $0xa4] sm:$0xf]
  %v1388 = vld [vmem:[%s1 + $0xa8] sm:$0xf]
  %v1389 = vld [vmem:[%s1 + $0xac] sm:$0xf]
  %v1390 = vld [vmem:[%s1 + $0xb0] sm:$0xf]
  %v1391 = vld [vmem:[%s1 + $0xb4] sm:$0xf]
  %v1392 = vld [vmem:[%s1 + $0xb8] sm:$0xf]
  %v1393 = vld [vmem:[%s1 + $0xbc] sm:$0xf]
  %v1394 = vld [vmem:[%s1 + $0xc0] sm:$0xf]
  %v1395 = vld [vmem:[%s1 + $0xc4] sm:$0xf]
  %v1396 = vld [vmem:[%s1 + $0xc8] sm:$0xf]
  %v1397 = vld [vmem:[%s1 + $0xcc] sm:$0xf]
  %v1398 = vld [vmem:[%s1 + $0xd0] sm:$0xf]
  %v1399 = vld [vmem:[%s1 + $0xd4] sm:$0xf]
  %v1400 = vld [vmem:[%s1 + $0xd8] sm:$0xf]
  %v1401 = vld [vmem:[%s1 + $0xdc] sm:$0xf]
  %v1402 = vld [vmem:[%s1 + $0xe0] sm:$0xf]
  %v1403 = vld [vmem:[%s1 + $0xe4] sm:$0xf]
  %v1404 = vld [vmem:[%s1 + $0xe8] sm:$0xf]
  %v1405 = vld [vmem:[%s1 + $0xec] sm:$0xf]
  %v1406 = vld [vmem:[%s1 + $0xf0] sm:$0xf]
  %v1407 = vld [vmem:[%s1 + $0xf4] sm:$0xf]
  %v1408 = vld [vmem:[%s1 + $0xf8] sm:$0xf]
  %v1409 = vld [vmem:[%s1 + $0xfc] sm:$0xf]
  %v1410 = vld [vmem:[%s1 + $0x100] sm:$0xf]
  %v1411 = vld [vmem:[%s1 + $0x104] sm:$0xf]
  %v1412 = vld [vmem:[%s1 + $0x108] sm:$0xf]
  %v1413 = vld [vmem:[%s1 + $0x10c] sm:$0xf]
  %v1414 = vld [vmem:[%s1 + $0x110] sm:$0xf]
  %v1415 = vld [vmem:[%s1 + $0x114] sm:$0xf]
  %v1416 = vld [vmem:[%s1 + $0x118] sm:$0xf]
  %v1417 = vld [vmem:[%s1 + $0x11c] sm:$0xf]
  %v1418 = vld [vmem:[%s1 + $0x120] sm:$0xf]
  %v1419 = vld [vmem:[%s1 + $0x124] sm:$0xf]
  %v1420 = vld [vmem:[%s1 + $0x128] sm:$0xf]
  %v1421 = vld [vmem:[%s1 + $0x12c] sm:$0xf]
  %v1422 = vld [vmem:[%s1 + $0x130] sm:$0xf]
  %v1423 = vld [vmem:[%s1 + $0x134] sm:$0xf]
  %v1424 = vld [vmem:[%s1 + $0x138] sm:$0xf]
  %v1425 = vld [vmem:[%s1 + $0x13c] sm:$0xf]
  %v1426 = vld [vmem:[%s1 + $0x140] sm:$0xf]
  %v1427 = vld [vmem:[%s1 + $0x144] sm:$0xf]
  %v1428 = vld [vmem:[%s1 + $0x148] sm:$0xf]
  %v1429 = vld [vmem:[%s1 + $0x14c] sm:$0xf]
  %v1430 = vld [vmem:[%s1 + $0x150] sm:$0xf]
  %v1431 = vld [vmem:[%s1 + $0x154] sm:$0xf]
  %v1432 = vld [vmem:[%s1 + $0x158] sm:$0xf]
  %v1433 = vld [vmem:[%s1 + $0x15c] sm:$0xf]
  %v1434 = vld [vmem:[%s1 + $0x160] sm:$0xf]
  %v1435 = vld [vmem:[%s1 + $0x164] sm:$0xf]
  %v1436 = vld [vmem:[%s1 + $0x168] sm:$0xf]
  %v1437 = vld [vmem:[%s1 + $0x16c] sm:$0xf]
  %v1438 = vld [vmem:[%s1 + $0x170] sm:$0xf]
  %v1439 = vld [vmem:[%s1 + $0x174] sm:$0xf]
  %v1440 = vld [vmem:[%s1 + $0x178] sm:$0xf]
  %v1441 = vld [vmem:[%s1 + $0x17c] sm:$0xf]
  %v1442 = vld [vmem:[%s1 + $0x180] sm:$0xf]
  %v1443 = vld [vmem:[%s1 + $0x184] sm:$0xf]
  %v1444 = vld [vmem:[%s1 + $0x188] sm:$0xf]
  %v1445 = vld [vmem:[%s1 + $0x18c] sm:$0xf]
  %v1446 = vld [vmem:[%s1 + $0x190] sm:$0xf]
  %v1447 = vld [vmem:[%s1 + $0x194] sm:$0xf]
  %v1448 = vld [vmem:[%s1 + $0x198] sm:$0xf]
  %v1449 = vld [vmem:[%s1 + $0x19c] sm:$0xf]
  %v1450 = vld [vmem:[%s1 + $0x1a0] sm:$0xf]
  %v1451 = vld [vmem:[%s1 + $0x1a4] sm:$0xf]
  %v1452 = vld [vmem:[%s1 + $0x1a8] sm:$0xf]
  %v1453 = vld [vmem:[%s1 + $0x1ac] sm:$0xf]
  %v1454 = vld [vmem:[%s1 + $0x1b0] sm:$0xf]
  %v1455 = vld [vmem:[%s1 + $0x1b4] sm:$0xf]
  %v1456 = vld [vmem:[%s1 + $0x1b8] sm:$0xf]
  %v1457 = vld [vmem:[%s1 + $0x1bc] sm:$0xf]
  %v1458 = vld [vmem:[%s1 + $0x1c0] sm:$0xf]
  %v1459 = vld [vmem:[%s1 + $0x1c4] sm:$0xf]
  %v1460 = vld [vmem:[%s1 + $0x1c8] sm:$0xf]
  %v1461 = vld [vmem:[%s1 + $0x1cc] sm:$0xf]
  %v1462 = vld [vmem:[%s1 + $0x1d0] sm:$0xf]
  %v1463 = vld [vmem:[%s1 + $0x1d4] sm:$0xf]
  %v1464 = vld [vmem:[%s1 + $0x1d8] sm:$0xf]
  %v1465 = vld [vmem:[%s1 + $0x1dc] sm:$0xf]
  %v1466 = vld [vmem:[%s1 + $0x1e0] sm:$0xf]
  %v1467 = vld [vmem:[%s1 + $0x1e4] sm:$0xf]
  %v1468 = vld [vmem:[%s1 + $0x1e8] sm:$0xf]
  %v1469 = vld [vmem:[%s1 + $0x1ec] sm:$0xf]
  %v1470 = vld [vmem:[%s1 + $0x1f0] sm:$0xf]
  %v1471 = vld [vmem:[%s1 + $0x1f4] sm:$0xf]
  %v1472 = vld [vmem:[%s1 + $0x1f8] sm:$0xf]
  %v1473 = vld [vmem:[%s1 + $0x1fc] sm:$0xf]
  %v1474 = vld [vmem:[%s1 + $0x200] sm:$0xf]
  %v1475 = vld [vmem:[%s1 + $0x204] sm:$0xf]
  %v1476 = vld [vmem:[%s1 + $0x208] sm:$0xf]
  %v1477 = vld [vmem:[%s1 + $0x20c] sm:$0xf]
  %v1478 = vld [vmem:[%s1 + $0x210] sm:$0xf]
  %v1479 = vld [vmem:[%s1 + $0x214] sm:$0xf]
  %v1480 = vld [vmem:[%s1 + $0x218] sm:$0xf]
  %v1481 = vld [vmem:[%s1 + $0x21c] sm:$0xf]
  %v1482 = vld [vmem:[%s1 + $0x220] sm:$0xf]
  %v1483 = vld [vmem:[%s1 + $0x224] sm:$0xf]
  %v1484 = vld [vmem:[%s1 + $0x228] sm:$0xf]
  %v1485 = vld [vmem:[%s1 + $0x22c] sm:$0xf]
  %v1486 = vld [vmem:[%s1 + $0x230] sm:$0xf]
  %v1487 = vld [vmem:[%s1 + $0x234] sm:$0xf]
  %v1488 = vld [vmem:[%s1 + $0x238] sm:$0xf]
  %v1489 = vld [vmem:[%s1 + $0x23c] sm:$0xf]
  %v1634 = vunpack.c.l.b16 %v1346
  %v1635 = vunpack.c.l.b16 %v1347
  %v1636 = vunpack.c.l.b16 %v1348
  %v1637 = vunpack.c.l.b16 %v1349
  %v1638 = vunpack.c.l.b16 %v1350
  %v1639 = vunpack.c.l.b16 %v1351
  %v1640 = vunpack.c.l.b16 %v1352
  %v1641 = vunpack.c.l.b16 %v1353
  %v1642 = vunpack.c.l.b16 %v1354
  %v1643 = vunpack.c.l.b16 %v1355
  %v1644 = vunpack.c.l.b16 %v1356
  %v1645 = vunpack.c.l.b16 %v1357
  %v1646 = vunpack.c.l.b16 %v1358
  %v1647 = vunpack.c.l.b16 %v1359
  %v1648 = vunpack.c.l.b16 %v1360
  %v1649 = vunpack.c.l.b16 %v1361
  %v1650 = vunpack.c.l.b16 %v1362
  %v1651 = vunpack.c.l.b16 %v1363
  %v1652 = vunpack.c.l.b16 %v1364
  %v1653 = vunpack.c.l.b16 %v1365
  %v1654 = vunpack.c.l.b16 %v1366
  %v1655 = vunpack.c.l.b16 %v1367
  %v1656 = vunpack.c.l.b16 %v1368
  %v1657 = vunpack.c.l.b16 %v1369
  %v1658 = vunpack.c.l.b16 %v1370
  %v1659 = vunpack.c.l.b16 %v1371
  %v1660 = vunpack.c.l.b16 %v1372
  %v1661 = vunpack.c.l.b16 %v1373
  %v1662 = vunpack.c.l.b16 %v1374
  %v1663 = vunpack.c.l.b16 %v1375
  %v1664 = vunpack.c.l.b16 %v1376
  %v1665 = vunpack.c.l.b16 %v1377
  %v1666 = vunpack.c.l.b16 %v1378
  %v1667 = vunpack.c.l.b16 %v1379
  %v1668 = vunpack.c.l.b16 %v1380
  %v1669 = vunpack.c.l.b16 %v1381
  %v1670 = vunpack.c.l.b16 %v1382
  %v1671 = vunpack.c.l.b16 %v1383
  %v1672 = vunpack.c.l.b16 %v1384
  %v1673 = vunpack.c.l.b16 %v1385
  %v1674 = vunpack.c.l.b16 %v1386
  %v1675 = vunpack.c.l.b16 %v1387
  %v1676 = vunpack.c.l.b16 %v1388
  %v1677 = vunpack.c.l.b16 %v1389
  %v1678 = vunpack.c.l.b16 %v1390
  %v1679 = vunpack.c.l.b16 %v1391
  %v1680 = vunpack.c.l.b16 %v1392
  %v1681 = vunpack.c.l.b16 %v1393
  %v1682 = vunpack.c.l.b16 %v1394
  %v1683 = vunpack.c.l.b16 %v1395
  %v1684 = vunpack.c.l.b16 %v1396
  %v1685 = vunpack.c.l.b16 %v1397
  %v1686 = vunpack.c.l.b16 %v1398
  %v1687 = vunpack.c.l.b16 %v1399
  %v1688 = vunpack.c.l.b16 %v1400
  %v1689 = vunpack.c.l.b16 %v1401
  %v1690 = vunpack.c.l.b16 %v1402
  %v1691 = vunpack.c.l.b16 %v1403
  %v1692 = vunpack.c.l.b16 %v1404
  %v1693 = vunpack.c.l.b16 %v1405
  %v1694 = vunpack.c.l.b16 %v1406
  %v1695 = vunpack.c.l.b16 %v1407
  %v1696 = vunpack.c.l.b16 %v1408
  %v1697 = vunpack.c.l.b16 %v1409
  %v1698 = vunpack.c.l.b16 %v1410
  %v1699 = vunpack.c.l.b16 %v1411
  %v1700 = vunpack.c.l.b16 %v1412
  %v1701 = vunpack.c.l.b16 %v1413
  %v1702 = vunpack.c.l.b16 %v1414
  %v1703 = vunpack.c.l.b16 %v1415
  %v1704 = vunpack.c.l.b16 %v1416
  %v1705 = vunpack.c.l.b16 %v1417
  %v1706 = vunpack.c.l.b16 %v1418
  %v1707 = vunpack.c.l.b16 %v1419
  %v1708 = vunpack.c.l.b16 %v1420
  %v1709 = vunpack.c.l.b16 %v1421
  %v1710 = vunpack.c.l.b16 %v1422
  %v1711 = vunpack.c.l.b16 %v1423
  %v1712 = vunpack.c.l.b16 %v1424
  %v1713 = vunpack.c.l.b16 %v1425
  %v1714 = vunpack.c.l.b16 %v1426
  %v1715 = vunpack.c.l.b16 %v1427
  %v1716 = vunpack.c.l.b16 %v1428
  %v1717 = vunpack.c.l.b16 %v1429
  %v1718 = vunpack.c.l.b16 %v1430
  %v1719 = vunpack.c.l.b16 %v1431
  %v1720 = vunpack.c.l.b16 %v1432
  %v1721 = vunpack.c.l.b16 %v1433
  %v1722 = vunpack.c.l.b16 %v1434
  %v1723 = vunpack.c.l.b16 %v1435
  %v1724 = vunpack.c.l.b16 %v1436
  %v1725 = vunpack.c.l.b16 %v1437
  %v1726 = vunpack.c.l.b16 %v1438
  %v1727 = vunpack.c.l.b16 %v1439
  %v1728 = vunpack.c.l.b16 %v1440
  %v1729 = vunpack.c.l.b16 %v1441
  %v1730 = vunpack.c.l.b16 %v1442
  %v1731 = vunpack.c.l.b16 %v1443
  %v1732 = vunpack.c.l.b16 %v1444
  %v1733 = vunpack.c.l.b16 %v1445
  %v1734 = vunpack.c.l.b16 %v1446
  %v1735 = vunpack.c.l.b16 %v1447
  %v1736 = vunpack.c.l.b16 %v1448
  %v1737 = vunpack.c.l.b16 %v1449
  %v1738 = vunpack.c.l.b16 %v1450
  %v1739 = vunpack.c.l.b16 %v1451
  %v1740 = vunpack.c.l.b16 %v1452
  %v1741 = vunpack.c.l.b16 %v1453
  %v1742 = vunpack.c.l.b16 %v1454
  %v1743 = vunpack.c.l.b16 %v1455
  %v1744 = vunpack.c.l.b16 %v1456
  %v1745 = vunpack.c.l.b16 %v1457
  %v1746 = vunpack.c.l.b16 %v1458
  %v1747 = vunpack.c.l.b16 %v1459
  %v1748 = vunpack.c.l.b16 %v1460
  %v1749 = vunpack.c.l.b16 %v1461
  %v1750 = vunpack.c.l.b16 %v1462
  %v1751 = vunpack.c.l.b16 %v1463
  %v1752 = vunpack.c.l.b16 %v1464
  %v1753 = vunpack.c.l.b16 %v1465
  %v1754 = vunpack.c.l.b16 %v1466
  %v1755 = vunpack.c.l.b16 %v1467
  %v1756 = vunpack.c.l.b16 %v1468
  %v1757 = vunpack.c.l.b16 %v1469
  %v1758 = vunpack.c.l.b16 %v1470
  %v1759 = vunpack.c.l.b16 %v1471
  %v1760 = vunpack.c.l.b16 %v1472
  %v1761 = vunpack.c.l.b16 %v1473
  %v1762 = vunpack.c.l.b16 %v1474
  %v1763 = vunpack.c.l.b16 %v1475
  %v1764 = vunpack.c.l.b16 %v1476
  %v1765 = vunpack.c.l.b16 %v1477
  %v1766 = vunpack.c.l.b16 %v1478
  %v1767 = vunpack.c.l.b16 %v1479
  %v1768 = vunpack.c.l.b16 %v1480
  %v1769 = vunpack.c.l.b16 %v1481
  %v1770 = vunpack.c.l.b16 %v1482
  %v1771 = vunpack.c.l.b16 %v1483
  %v1772 = vunpack.c.l.b16 %v1484
  %v1773 = vunpack.c.l.b16 %v1485
  %v1774 = vunpack.c.l.b16 %v1486
  %v1775 = vunpack.c.l.b16 %v1487
  %v1776 = vunpack.c.l.b16 %v1488
  %v1777 = vunpack.c.l.b16 %v1489
  %v1778 = vpack.c.b16 %v1635, %v1634
  %v1779 = vpack.c.b16 %v1637, %v1636
  %v1780 = vpack.c.b16 %v1639, %v1638
  %v1781 = vpack.c.b16 %v1641, %v1640
  %v1782 = vpack.c.b16 %v1643, %v1642
  %v1783 = vpack.c.b16 %v1645, %v1644
  %v1784 = vpack.c.b16 %v1647, %v1646
  %v1785 = vpack.c.b16 %v1649, %v1648
  %v1786 = vpack.c.b16 %v1651, %v1650
  %v1787 = vpack.c.b16 %v1653, %v1652
  %v1788 = vpack.c.b16 %v1655, %v1654
  %v1789 = vpack.c.b16 %v1657, %v1656
  %v1790 = vpack.c.b16 %v1659, %v1658
  %v1791 = vpack.c.b16 %v1661, %v1660
  %v1792 = vpack.c.b16 %v1663, %v1662
  %v1793 = vpack.c.b16 %v1665, %v1664
  %v1794 = vpack.c.b16 %v1667, %v1666
  %v1795 = vpack.c.b16 %v1669, %v1668
  %v1796 = vpack.c.b16 %v1671, %v1670
  %v1797 = vpack.c.b16 %v1673, %v1672
  %v1798 = vpack.c.b16 %v1675, %v1674
  %v1799 = vpack.c.b16 %v1677, %v1676
  %v1800 = vpack.c.b16 %v1679, %v1678
  %v1801 = vpack.c.b16 %v1681, %v1680
  %v1802 = vpack.c.b16 %v1683, %v1682
  %v1803 = vpack.c.b16 %v1685, %v1684
  %v1804 = vpack.c.b16 %v1687, %v1686
  %v1805 = vpack.c.b16 %v1689, %v1688
  %v1806 = vpack.c.b16 %v1691, %v1690
  %v1807 = vpack.c.b16 %v1693, %v1692
  %v1808 = vpack.c.b16 %v1695, %v1694
  %v1809 = vpack.c.b16 %v1697, %v1696
  %v1810 = vpack.c.b16 %v1699, %v1698
  %v1811 = vpack.c.b16 %v1701, %v1700
  %v1812 = vpack.c.b16 %v1703, %v1702
  %v1813 = vpack.c.b16 %v1705, %v1704
  %v1814 = vpack.c.b16 %v1707, %v1706
  %v1815 = vpack.c.b16 %v1709, %v1708
  %v1816 = vpack.c.b16 %v1711, %v1710
  %v1817 = vpack.c.b16 %v1713, %v1712
  %v1818 = vpack.c.b16 %v1715, %v1714
  %v1819 = vpack.c.b16 %v1717, %v1716
  %v1820 = vpack.c.b16 %v1719, %v1718
  %v1821 = vpack.c.b16 %v1721, %v1720
  %v1822 = vpack.c.b16 %v1723, %v1722
  %v1823 = vpack.c.b16 %v1725, %v1724
  %v1824 = vpack.c.b16 %v1727, %v1726
  %v1825 = vpack.c.b16 %v1729, %v1728
  %v1826 = vpack.c.b16 %v1731, %v1730
  %v1827 = vpack.c.b16 %v1733, %v1732
  %v1828 = vpack.c.b16 %v1735, %v1734
  %v1829 = vpack.c.b16 %v1737, %v1736
  %v1830 = vpack.c.b16 %v1739, %v1738
  %v1831 = vpack.c.b16 %v1741, %v1740
  %v1832 = vpack.c.b16 %v1743, %v1742
  %v1833 = vpack.c.b16 %v1745, %v1744
  %v1834 = vpack.c.b16 %v1747, %v1746
  %v1835 = vpack.c.b16 %v1749, %v1748
  %v1836 = vpack.c.b16 %v1751, %v1750
  %v1837 = vpack.c.b16 %v1753, %v1752
  %v1838 = vpack.c.b16 %v1755, %v1754
  %v1839 = vpack.c.b16 %v1757, %v1756
  %v1840 = vpack.c.b16 %v1759, %v1758
  %v1841 = vpack.c.b16 %v1761, %v1760
  %v1842 = vpack.c.b16 %v1763, %v1762
  %v1843 = vpack.c.b16 %v1765, %v1764
  %v1844 = vpack.c.b16 %v1767, %v1766
  %v1845 = vpack.c.b16 %v1769, %v1768
  %v1846 = vpack.c.b16 %v1771, %v1770
  %v1847 = vpack.c.b16 %v1773, %v1772
  %v1848 = vpack.c.b16 %v1775, %v1774
  %v1849 = vpack.c.b16 %v1777, %v1776
  %1922 = vmatprep.subr.bf16.mxu0 0
  %1923 = vmatpush1.bf16.msra.mxu0 %v1778
  %1924 = vmatprep.subr.bf16.mxu0 0
  %1925 = vmatpush1.bf16.msra.mxu0 %v1779
  %1926 = vmatprep.subr.bf16.mxu0 0
  %1927 = vmatpush1.bf16.msra.mxu0 %v1780
  %1928 = vmatprep.subr.bf16.mxu0 0
  %1929 = vmatpush1.bf16.msra.mxu0 %v1781
  %1930 = vmatprep.subr.bf16.mxu0 0
  %1931 = vmatpush1.bf16.msra.mxu0 %v1782
  %1932 = vmatprep.subr.bf16.mxu0 0
  %1933 = vmatpush1.bf16.msra.mxu0 %v1783
  %1934 = vmatprep.subr.bf16.mxu0 0
  %1935 = vmatpush1.bf16.msra.mxu0 %v1784
  %1936 = vmatprep.subr.bf16.mxu0 0
  %1937 = vmatpush1.bf16.msra.mxu0 %v1785
  %1938 = vmatprep.subr.bf16.mxu0 0
  %1939 = vmatpush1.bf16.msra.mxu0 %v1786
  %1940 = vmatprep.subr.bf16.mxu0 0
  %1941 = vmatpush1.bf16.msra.mxu0 %v1787
  %1942 = vmatprep.subr.bf16.mxu0 0
  %1943 = vmatpush1.bf16.msra.mxu0 %v1788
  %1944 = vmatprep.subr.bf16.mxu0 0
  %1945 = vmatpush1.bf16.msra.mxu0 %v1789
  %1946 = vmatprep.subr.bf16.mxu0 0
  %1947 = vmatpush1.bf16.msra.mxu0 %v1790
  %1948 = vmatprep.subr.bf16.mxu0 0
  %1949 = vmatpush1.bf16.msra.mxu0 %v1791
  %1950 = vmatprep.subr.bf16.mxu0 0
  %1951 = vmatpush1.bf16.msra.mxu0 %v1792
  %1952 = vmatprep.subr.bf16.mxu0 0
  %1953 = vmatpush1.bf16.msra.mxu0 %v1793
  %1954 = vmatprep.mubr.bf16.mxu0 %v1203
  %1955 = vmatmul.mubr.bf16.gmra.mrb[0].mxu0 %v1202
  %v1956 = vpop.f32.mrb[0].mxu0
  %v1957 = vadd.f32 0.0, %v1956
  %v1958 = vpop.f32.mrb[0].mxu0
  %v1959 = vpop.f32.mrb[0].mxu0
  %v1960 = vadd.f32 0.0, %v1959
  %v1961 = vpop.f32.mrb[0].mxu0
  %1962 = vmatprep.mubr.bf16.mxu0 %v1212
  %1963 = vmatmul.mubr.bf16.gmra.mrb[0].mxu0 %v1211
  %v1964 = vpop.f32.mrb[0].mxu0
  %v1965 = vadd.f32 0.0, %v1964
  %v1966 = vpop.f32.mrb[0].mxu0
  %v1967 = vpop.f32.mrb[0].mxu0
  %v1968 = vadd.f32 0.0, %v1967
  %v1969 = vpop.f32.mrb[0].mxu0
  %1970 = vmatprep.mubr.bf16.mxu0 %v1221
  %1971 = vmatmul.mubr.bf16.gmra.mrb[0].mxu0 %v1220
  %v1972 = vpop.f32.mrb[0].mxu0
  %v1973 = vadd.f32 0.0, %v1972
  %v1974 = vpop.f32.mrb[0].mxu0
  %v1975 = vpop.f32.mrb[0].mxu0
  %v1976 = vadd.f32 0.0, %v1975
  %v1977 = vpop.f32.mrb[0].mxu0
  %1978 = vmatprep.mubr.bf16.mxu0 %v1230
  %1979 = vmatmul.mubr.bf16.gmra.mrb[0].mxu0 %v1229
  %v1980 = vpop.f32.mrb[0].mxu0
  %v1981 = vadd.f32 0.0, %v1980
  %v1982 = vpop.f32.mrb[0].mxu0
  %v1983 = vpop.f32.mrb[0].mxu0
  %v1984 = vadd.f32 0.0, %v1983
  %v1985 = vpop.f32.mrb[0].mxu0
  %1986 = vmatprep.mubr.bf16.mxu0 %v1239
  %1987 = vmatmul.mubr.bf16.gmra.mrb[0].mxu0 %v1238
  %v1988 = vpop.f32.mrb[0].mxu0
  %v1989 = vadd.f32 0.0, %v1988
  %v1990 = vpop.f32.mrb[0].mxu0
  %v1991 = vpop.f32.mrb[0].mxu0
  %v1992 = vadd.f32 0.0, %v1991
  %v1993 = vpop.f32.mrb[0].mxu0
  %1994 = vmatprep.mubr.bf16.mxu0 %v1248
  %1995 = vmatmul.mubr.bf16.gmra.mrb[0].mxu0 %v1247
  %v1996 = vpop.f32.mrb[0].mxu0
  %v1997 = vadd.f32 0.0, %v1996
  %v1998 = vpop.f32.mrb[0].mxu0
  %v1999 = vpop.f32.mrb[0].mxu0
  %v2000 = vadd.f32 0.0, %v1999
  %v2001 = vpop.f32.mrb[0].mxu0
  %2002 = vmatprep.mubr.bf16.mxu0 %v1257
  %2003 = vmatmul.mubr.bf16.gmra.mrb[0].mxu0 %v1256
  %v2004 = vpop.f32.mrb[0].mxu0
  %v2005 = vadd.f32 0.0, %v2004
  %v2006 = vpop.f32.mrb[0].mxu0
  %v2007 = vpop.f32.mrb[0].mxu0
  %v2008 = vadd.f32 0.0, %v2007
  %v2009 = vpop.f32.mrb[0].mxu0
  %2010 = vmatprep.mubr.bf16.mxu0 %v1266
  %2011 = vmatmul.mubr.bf16.gmra.mrb[0].mxu0 %v1265
  %v2012 = vpop.f32.mrb[0].mxu0
  %v2013 = vadd.f32 0.0, %v2012
  %v2014 = vpop.f32.mrb[0].mxu0
  %v2015 = vpop.f32.mrb[0].mxu0
  %v2016 = vadd.f32 0.0, %v2015
  %v2017 = vpop.f32.mrb[0].mxu0
  %2018 = vmatprep.mubr.bf16.mxu0 %v1275
  %2019 = vmatmul.mubr.bf16.gmra.mrb[0].mxu0 %v1274
  %v2020 = vpop.f32.mrb[0].mxu0
  %v2021 = vadd.f32 0.0, %v2020
  %v2022 = vpop.f32.mrb[0].mxu0
  %v2023 = vpop.f32.mrb[0].mxu0
  %v2024 = vadd.f32 0.0, %v2023
  %v2025 = vpop.f32.mrb[0].mxu0
  %2026 = vmatprep.mubr.bf16.mxu0 %v1284
  %2027 = vmatmul.mubr.bf16.gmra.mrb[0].mxu0 %v1283
  %v2028 = vpop.f32.mrb[0].mxu0
  %v2029 = vadd.f32 0.0, %v2028
  %v2030 = vpop.f32.mrb[0].mxu0
  %v2031 = vpop.f32.mrb[0].mxu0
  %v2032 = vadd.f32 0.0, %v2031
  %v2033 = vpop.f32.mrb[0].mxu0
  %2034 = vmatprep.mubr.bf16.mxu0 %v1293
  %2035 = vmatmul.mubr.bf16.gmra.mrb[0].mxu0 %v1292
  %v2036 = vpop.f32.mrb[0].mxu0
  %v2037 = vadd.f32 0.0, %v2036
  %v2038 = vpop.f32.mrb[0].mxu0
  %v2039 = vpop.f32.mrb[0].mxu0
  %v2040 = vadd.f32 0.0, %v2039
  %v2041 = vpop.f32.mrb[0].mxu0
  %2042 = vmatprep.mubr.bf16.mxu0 %v1302
  %2043 = vmatmul.mubr.bf16.gmra.mrb[0].mxu0 %v1301
  %v2044 = vpop.f32.mrb[0].mxu0
  %v2045 = vadd.f32 0.0, %v2044
  %v2046 = vpop.f32.mrb[0].mxu0
  %v2047 = vpop.f32.mrb[0].mxu0
  %v2048 = vadd.f32 0.0, %v2047
  %v2049 = vpop.f32.mrb[0].mxu0
  %2050 = vmatprep.mubr.bf16.mxu0 %v1311
  %2051 = vmatmul.mubr.bf16.gmra.mrb[0].mxu0 %v1310
  %v2052 = vpop.f32.mrb[0].mxu0
  %v2053 = vadd.f32 0.0, %v2052
  %v2054 = vpop.f32.mrb[0].mxu0
  %v2055 = vpop.f32.mrb[0].mxu0
  %v2056 = vadd.f32 0.0, %v2055
  %v2057 = vpop.f32.mrb[0].mxu0
  %2058 = vmatprep.mubr.bf16.mxu0 %v1320
  %2059 = vmatmul.mubr.bf16.gmra.mrb[0].mxu0 %v1319
  %v2060 = vpop.f32.mrb[0].mxu0
  %v2061 = vadd.f32 0.0, %v2060
  %v2062 = vpop.f32.mrb[0].mxu0
  %v2063 = vpop.f32.mrb[0].mxu0
  %v2064 = vadd.f32 0.0, %v2063
  %v2065 = vpop.f32.mrb[0].mxu0
  %2066 = vmatprep.mubr.bf16.mxu0 %v1329
  %2067 = vmatmul.mubr.bf16.gmra.mrb[0].mxu0 %v1328
  %v2068 = vpop.f32.mrb[0].mxu0
  %v2069 = vadd.f32 0.0, %v2068
  %v2070 = vpop.f32.mrb[0].mxu0
  %v2071 = vpop.f32.mrb[0].mxu0
  %v2072 = vadd.f32 0.0, %v2071
  %v2073 = vpop.f32.mrb[0].mxu0
  %2074 = vmatprep.mubr.bf16.mxu0 %v1338
  %2075 = vmatmul.mubr.bf16.gmra.mrb[0].mxu0 %v1337
  %v2076 = vpop.f32.mrb[0].mxu0
  %v2077 = vadd.f32 0.0, %v2076
  %v2078 = vpop.f32.mrb[0].mxu0
  %v2079 = vpop.f32.mrb[0].mxu0
  %v2080 = vadd.f32 0.0, %v2079
  %v2081 = vpop.f32.mrb[0].mxu0
  %2082 = vdwg.mxu0
  %2083 = vmatprep.subr.bf16.mxu0 0
  %2084 = vmatpush1.bf16.msra.mxu0 %v1794
  %2085 = vmatprep.subr.bf16.mxu0 0
  %2086 = vmatpush1.bf16.msra.mxu0 %v1795
  %2087 = vmatprep.subr.bf16.mxu0 0
  %2088 = vmatpush1.bf16.msra.mxu0 %v1796
  %2089 = vmatprep.subr.bf16.mxu0 0
  %2090 = vmatpush1.bf16.msra.mxu0 %v1797
  %2091 = vmatprep.subr.bf16.mxu0 0
  %2092 = vmatpush1.bf16.msra.mxu0 %v1798
  %2093 = vmatprep.subr.bf16.mxu0 0
  %2094 = vmatpush1.bf16.msra.mxu0 %v1799
  %2095 = vmatprep.subr.bf16.mxu0 0
  %2096 = vmatpush1.bf16.msra.mxu0 %v1800
  %2097 = vmatprep.subr.bf16.mxu0 0
  %2098 = vmatpush1.bf16.msra.mxu0 %v1801
  %2099 = vmatprep.subr.bf16.mxu0 0
  %2100 = vmatpush1.bf16.msra.mxu0 %v1802
  %2101 = vmatprep.subr.bf16.mxu0 0
  %2102 = vmatpush1.bf16.msra.mxu0 %v1803
  %2103 = vmatprep.subr.bf16.mxu0 0
  %2104 = vmatpush1.bf16.msra.mxu0 %v1804
  %2105 = vmatprep.subr.bf16.mxu0 0
  %2106 = vmatpush1.bf16.msra.mxu0 %v1805
  %2107 = vmatprep.subr.bf16.mxu0 0
  %2108 = vmatpush1.bf16.msra.mxu0 %v1806
  %2109 = vmatprep.subr.bf16.mxu0 0
  %2110 = vmatpush1.bf16.msra.mxu0 %v1807
  %2111 = vmatprep.subr.bf16.mxu0 0
  %2112 = vmatpush1.bf16.msra.mxu0 %v1808
  %2113 = vmatprep.subr.bf16.mxu0 0
  %2114 = vmatpush1.bf16.msra.mxu0 %v1809
  %2115 = vmatprep.mubr.bf16.mxu0 %v1205
  %2116 = vmatmul.mubr.bf16.gmra.mrb[0].mxu0 %v1204
  %v2117 = vpop.f32.mrb[0].mxu0
  %v2118 = vadd.f32 %v1957, %v2117
  %v2119 = vpop.f32.mrb[0].mxu0
  %v2120 = vpop.f32.mrb[0].mxu0
  %v2121 = vadd.f32 %v1960, %v2120
  %v2122 = vpop.f32.mrb[0].mxu0
  %2123 = vmatprep.mubr.bf16.mxu0 %v1214
  %2124 = vmatmul.mubr.bf16.gmra.mrb[0].mxu0 %v1213
  %v2125 = vpop.f32.mrb[0].mxu0
  %v2126 = vadd.f32 %v1965, %v2125
  %v2127 = vpop.f32.mrb[0].mxu0
  %v2128 = vpop.f32.mrb[0].mxu0
  %v2129 = vadd.f32 %v1968, %v2128
  %v2130 = vpop.f32.mrb[0].mxu0
  %2131 = vmatprep.mubr.bf16.mxu0 %v1223
  %2132 = vmatmul.mubr.bf16.gmra.mrb[0].mxu0 %v1222
  %v2133 = vpop.f32.mrb[0].mxu0
  %v2134 = vadd.f32 %v1973, %v2133
  %v2135 = vpop.f32.mrb[0].mxu0
  %v2136 = vpop.f32.mrb[0].mxu0
  %v2137 = vadd.f32 %v1976, %v2136
  %v2138 = vpop.f32.mrb[0].mxu0
  %2139 = vmatprep.mubr.bf16.mxu0 %v1232
  %2140 = vmatmul.mubr.bf16.gmra.mrb[0].mxu0 %v1231
  %v2141 = vpop.f32.mrb[0].mxu0
  %v2142 = vadd.f32 %v1981, %v2141
  %v2143 = vpop.f32.mrb[0].mxu0
  %v2144 = vpop.f32.mrb[0].mxu0
  %v2145 = vadd.f32 %v1984, %v2144
  %v2146 = vpop.f32.mrb[0].mxu0
  %2147 = vmatprep.mubr.bf16.mxu0 %v1241
  %2148 = vmatmul.mubr.bf16.gmra.mrb[0].mxu0 %v1240
  %v2149 = vpop.f32.mrb[0].mxu0
  %v2150 = vadd.f32 %v1989, %v2149
  %v2151 = vpop.f32.mrb[0].mxu0
  %v2152 = vpop.f32.mrb[0].mxu0
  %v2153 = vadd.f32 %v1992, %v2152
  %v2154 = vpop.f32.mrb[0].mxu0
  %2155 = vmatprep.mubr.bf16.mxu0 %v1250
  %2156 = vmatmul.mubr.bf16.gmra.mrb[0].mxu0 %v1249
  %v2157 = vpop.f32.mrb[0].mxu0
  %v2158 = vadd.f32 %v1997, %v2157
  %v2159 = vpop.f32.mrb[0].mxu0
  %v2160 = vpop.f32.mrb[0].mxu0
  %v2161 = vadd.f32 %v2000, %v2160
  %v2162 = vpop.f32.mrb[0].mxu0
  %2163 = vmatprep.mubr.bf16.mxu0 %v1259
  %2164 = vmatmul.mubr.bf16.gmra.mrb[0].mxu0 %v1258
  %v2165 = vpop.f32.mrb[0].mxu0
  %v2166 = vadd.f32 %v2005, %v2165
  %v2167 = vpop.f32.mrb[0].mxu0
  %v2168 = vpop.f32.mrb[0].mxu0
  %v2169 = vadd.f32 %v2008, %v2168
  %v2170 = vpop.f32.mrb[0].mxu0
  %2171 = vmatprep.mubr.bf16.mxu0 %v1268
  %2172 = vmatmul.mubr.bf16.gmra.mrb[0].mxu0 %v1267
  %v2173 = vpop.f32.mrb[0].mxu0
  %v2174 = vadd.f32 %v2013, %v2173
  %v2175 = vpop.f32.mrb[0].mxu0
  %v2176 = vpop.f32.mrb[0].mxu0
  %v2177 = vadd.f32 %v2016, %v2176
  %v2178 = vpop.f32.mrb[0].mxu0
  %2179 = vmatprep.mubr.bf16.mxu0 %v1277
  %2180 = vmatmul.mubr.bf16.gmra.mrb[0].mxu0 %v1276
  %v2181 = vpop.f32.mrb[0].mxu0
  %v2182 = vadd.f32 %v2021, %v2181
  %v2183 = vpop.f32.mrb[0].mxu0
  %v2184 = vpop.f32.mrb[0].mxu0
  %v2185 = vadd.f32 %v2024, %v2184
  %v2186 = vpop.f32.mrb[0].mxu0
  %2187 = vmatprep.mubr.bf16.mxu0 %v1286
  %2188 = vmatmul.mubr.bf16.gmra.mrb[0].mxu0 %v1285
  %v2189 = vpop.f32.mrb[0].mxu0
  %v2190 = vadd.f32 %v2029, %v2189
  %v2191 = vpop.f32.mrb[0].mxu0
  %v2192 = vpop.f32.mrb[0].mxu0
  %v2193 = vadd.f32 %v2032, %v2192
  %v2194 = vpop.f32.mrb[0].mxu0
  %2195 = vmatprep.mubr.bf16.mxu0 %v1295
  %2196 = vmatmul.mubr.bf16.gmra.mrb[0].mxu0 %v1294
  %v2197 = vpop.f32.mrb[0].mxu0
  %v2198 = vadd.f32 %v2037, %v2197
  %v2199 = vpop.f32.mrb[0].mxu0
  %v2200 = vpop.f32.mrb[0].mxu0
  %v2201 = vadd.f32 %v2040, %v2200
  %v2202 = vpop.f32.mrb[0].mxu0
  %2203 = vmatprep.mubr.bf16.mxu0 %v1304
  %2204 = vmatmul.mubr.bf16.gmra.mrb[0].mxu0 %v1303
  %v2205 = vpop.f32.mrb[0].mxu0
  %v2206 = vadd.f32 %v2045, %v2205
  %v2207 = vpop.f32.mrb[0].mxu0
  %v2208 = vpop.f32.mrb[0].mxu0
  %v2209 = vadd.f32 %v2048, %v2208
  %v2210 = vpop.f32.mrb[0].mxu0
  %2211 = vmatprep.mubr.bf16.mxu0 %v1313
  %2212 = vmatmul.mubr.bf16.gmra.mrb[0].mxu0 %v1312
  %v2213 = vpop.f32.mrb[0].mxu0
  %v2214 = vadd.f32 %v2053, %v2213
  %v2215 = vpop.f32.mrb[0].mxu0
  %v2216 = vpop.f32.mrb[0].mxu0
  %v2217 = vadd.f32 %v2056, %v2216
  %v2218 = vpop.f32.mrb[0].mxu0
  %2219 = vmatprep.mubr.bf16.mxu0 %v1322
  %2220 = vmatmul.mubr.bf16.gmra.mrb[0].mxu0 %v1321
  %v2221 = vpop.f32.mrb[0].mxu0
  %v2222 = vadd.f32 %v2061, %v2221
  %v2223 = vpop.f32.mrb[0].mxu0
  %v2224 = vpop.f32.mrb[0].mxu0
  %v2225 = vadd.f32 %v2064, %v2224
  %v2226 = vpop.f32.mrb[0].mxu0
  %2227 = vmatprep.mubr.bf16.mxu0 %v1331
  %2228 = vmatmul.mubr.bf16.gmra.mrb[0].mxu0 %v1330
  %v2229 = vpop.f32.mrb[0].mxu0
  %v2230 = vadd.f32 %v2069, %v2229
  %v2231 = vpop.f32.mrb[0].mxu0
  %v2232 = vpop.f32.mrb[0].mxu0
  %v2233 = vadd.f32 %v2072, %v2232
  %v2234 = vpop.f32.mrb[0].mxu0
  %2235 = vmatprep.mubr.bf16.mxu0 %v1340
  %2236 = vmatmul.mubr.bf16.gmra.mrb[0].mxu0 %v1339
  %v2237 = vpop.f32.mrb[0].mxu0
  %v2238 = vadd.f32 %v2077, %v2237
  %v2239 = vpop.f32.mrb[0].mxu0
  %v2240 = vpop.f32.mrb[0].mxu0
  %v2241 = vadd.f32 %v2080, %v2240
  %v2242 = vpop.f32.mrb[0].mxu0
  %2243 = vdwg.mxu0
  %2244 = vmatprep.subr.bf16.mxu0 0
  %2245 = vmatpush1.bf16.msra.mxu0 %v1810
  %2246 = vmatprep.subr.bf16.mxu0 0
  %2247 = vmatpush1.bf16.msra.mxu0 %v1811
  %2248 = vmatprep.subr.bf16.mxu0 0
  %2249 = vmatpush1.bf16.msra.mxu0 %v1812
  %2250 = vmatprep.subr.bf16.mxu0 0
  %2251 = vmatpush1.bf16.msra.mxu0 %v1813
  %2252 = vmatprep.subr.bf16.mxu0 0
  %2253 = vmatpush1.bf16.msra.mxu0 %v1814
  %2254 = vmatprep.subr.bf16.mxu0 0
  %2255 = vmatpush1.bf16.msra.mxu0 %v1815
  %2256 = vmatprep.subr.bf16.mxu0 0
  %2257 = vmatpush1.bf16.msra.mxu0 %v1816
  %2258 = vmatprep.subr.bf16.mxu0 0
  %2259 = vmatpush1.bf16.msra.mxu0 %v1817
  %2260 = vmatprep.subr.bf16.mxu0 0
  %2261 = vmatpush1.bf16.msra.mxu0 %v1818
  %2262 = vmatprep.subr.bf16.mxu0 0
  %2263 = vmatpush1.bf16.msra.mxu0 %v1819
  %2264 = vmatprep.subr.bf16.mxu0 0
  %2265 = vmatpush1.bf16.msra.mxu0 %v1820
  %2266 = vmatprep.subr.bf16.mxu0 0
  %2267 = vmatpush1.bf16.msra.mxu0 %v1821
  %2268 = vmatprep.subr.bf16.mxu0 0
  %2269 = vmatpush1.bf16.msra.mxu0 %v1822
  %2270 = vmatprep.subr.bf16.mxu0 0
  %2271 = vmatpush1.bf16.msra.mxu0 %v1823
  %2272 = vmatprep.subr.bf16.mxu0 0
  %2273 = vmatpush1.bf16.msra.mxu0 %v1824
  %2274 = vmatprep.subr.bf16.mxu0 0
  %2275 = vmatpush1.bf16.msra.mxu0 %v1825
  %2276 = vmatprep.mubr.bf16.mxu0 %v1207
  %2277 = vmatmul.mubr.bf16.gmra.mrb[0].mxu0 %v1206
  %v2278 = vpop.f32.mrb[0].mxu0
  %v2279 = vadd.f32 %v2118, %v2278
  %v2280 = vpop.f32.mrb[0].mxu0
  %v2281 = vpop.f32.mrb[0].mxu0
  %v2282 = vadd.f32 %v2121, %v2281
  %v2283 = vpop.f32.mrb[0].mxu0
  %2284 = vmatprep.mubr.bf16.mxu0 %v1216
  %2285 = vmatmul.mubr.bf16.gmra.mrb[0].mxu0 %v1215
  %v2286 = vpop.f32.mrb[0].mxu0
  %v2287 = vadd.f32 %v2126, %v2286
  %v2288 = vpop.f32.mrb[0].mxu0
  %v2289 = vpop.f32.mrb[0].mxu0
  %v2290 = vadd.f32 %v2129, %v2289
  %v2291 = vpop.f32.mrb[0].mxu0
  %2292 = vmatprep.mubr.bf16.mxu0 %v1225
  %2293 = vmatmul.mubr.bf16.gmra.mrb[0].mxu0 %v1224
  %v2294 = vpop.f32.mrb[0].mxu0
  %v2295 = vadd.f32 %v2134, %v2294
  %v2296 = vpop.f32.mrb[0].mxu0
  %v2297 = vpop.f32.mrb[0].mxu0
  %v2298 = vadd.f32 %v2137, %v2297
  %v2299 = vpop.f32.mrb[0].mxu0
  %2300 = vmatprep.mubr.bf16.mxu0 %v1234
  %2301 = vmatmul.mubr.bf16.gmra.mrb[0].mxu0 %v1233
  %v2302 = vpop.f32.mrb[0].mxu0
  %v2303 = vadd.f32 %v2142, %v2302
  %v2304 = vpop.f32.mrb[0].mxu0
  %v2305 = vpop.f32.mrb[0].mxu0
  %v2306 = vadd.f32 %v2145, %v2305
  %v2307 = vpop.f32.mrb[0].mxu0
  %2308 = vmatprep.mubr.bf16.mxu0 %v1243
  %2309 = vmatmul.mubr.bf16.gmra.mrb[0].mxu0 %v1242
  %v2310 = vpop.f32.mrb[0].mxu0
  %v2311 = vadd.f32 %v2150, %v2310
  %v2312 = vpop.f32.mrb[0].mxu0
  %v2313 = vpop.f32.mrb[0].mxu0
  %v2314 = vadd.f32 %v2153, %v2313
  %v2315 = vpop.f32.mrb[0].mxu0
  %2316 = vmatprep.mubr.bf16.mxu0 %v1252
  %2317 = vmatmul.mubr.bf16.gmra.mrb[0].mxu0 %v1251
  %v2318 = vpop.f32.mrb[0].mxu0
  %v2319 = vadd.f32 %v2158, %v2318
  %v2320 = vpop.f32.mrb[0].mxu0
  %v2321 = vpop.f32.mrb[0].mxu0
  %v2322 = vadd.f32 %v2161, %v2321
  %v2323 = vpop.f32.mrb[0].mxu0
  %2324 = vmatprep.mubr.bf16.mxu0 %v1261
  %2325 = vmatmul.mubr.bf16.gmra.mrb[0].mxu0 %v1260
  %v2326 = vpop.f32.mrb[0].mxu0
  %v2327 = vadd.f32 %v2166, %v2326
  %v2328 = vpop.f32.mrb[0].mxu0
  %v2329 = vpop.f32.mrb[0].mxu0
  %v2330 = vadd.f32 %v2169, %v2329
  %v2331 = vpop.f32.mrb[0].mxu0
  %2332 = vmatprep.mubr.bf16.mxu0 %v1270
  %2333 = vmatmul.mubr.bf16.gmra.mrb[0].mxu0 %v1269
  %v2334 = vpop.f32.mrb[0].mxu0
  %v2335 = vadd.f32 %v2174, %v2334
  %v2336 = vpop.f32.mrb[0].mxu0
  %v2337 = vpop.f32.mrb[0].mxu0
  %v2338 = vadd.f32 %v2177, %v2337
  %v2339 = vpop.f32.mrb[0].mxu0
  %2340 = vmatprep.mubr.bf16.mxu0 %v1279
  %2341 = vmatmul.mubr.bf16.gmra.mrb[0].mxu0 %v1278
  %v2342 = vpop.f32.mrb[0].mxu0
  %v2343 = vadd.f32 %v2182, %v2342
  %v2344 = vpop.f32.mrb[0].mxu0
  %v2345 = vpop.f32.mrb[0].mxu0
  %v2346 = vadd.f32 %v2185, %v2345
  %v2347 = vpop.f32.mrb[0].mxu0
  %2348 = vmatprep.mubr.bf16.mxu0 %v1288
  %2349 = vmatmul.mubr.bf16.gmra.mrb[0].mxu0 %v1287
  %v2350 = vpop.f32.mrb[0].mxu0
  %v2351 = vadd.f32 %v2190, %v2350
  %v2352 = vpop.f32.mrb[0].mxu0
  %v2353 = vpop.f32.mrb[0].mxu0
  %v2354 = vadd.f32 %v2193, %v2353
  %v2355 = vpop.f32.mrb[0].mxu0
  %2356 = vmatprep.mubr.bf16.mxu0 %v1297
  %2357 = vmatmul.mubr.bf16.gmra.mrb[0].mxu0 %v1296
  %v2358 = vpop.f32.mrb[0].mxu0
  %v2359 = vadd.f32 %v2198, %v2358
  %v2360 = vpop.f32.mrb[0].mxu0
  %v2361 = vpop.f32.mrb[0].mxu0
  %v2362 = vadd.f32 %v2201, %v2361
  %v2363 = vpop.f32.mrb[0].mxu0
  %2364 = vmatprep.mubr.bf16.mxu0 %v1306
  %2365 = vmatmul.mubr.bf16.gmra.mrb[0].mxu0 %v1305
  %v2366 = vpop.f32.mrb[0].mxu0
  %v2367 = vadd.f32 %v2206, %v2366
  %v2368 = vpop.f32.mrb[0].mxu0
  %v2369 = vpop.f32.mrb[0].mxu0
  %v2370 = vadd.f32 %v2209, %v2369
  %v2371 = vpop.f32.mrb[0].mxu0
  %2372 = vmatprep.mubr.bf16.mxu0 %v1315
  %2373 = vmatmul.mubr.bf16.gmra.mrb[0].mxu0 %v1314
  %v2374 = vpop.f32.mrb[0].mxu0
  %v2375 = vadd.f32 %v2214, %v2374
  %v2376 = vpop.f32.mrb[0].mxu0
  %v2377 = vpop.f32.mrb[0].mxu0
  %v2378 = vadd.f32 %v2217, %v2377
  %v2379 = vpop.f32.mrb[0].mxu0
  %2380 = vmatprep.mubr.bf16.mxu0 %v1324
  %2381 = vmatmul.mubr.bf16.gmra.mrb[0].mxu0 %v1323
  %v2382 = vpop.f32.mrb[0].mxu0
  %v2383 = vadd.f32 %v2222, %v2382
  %v2384 = vpop.f32.mrb[0].mxu0
  %v2385 = vpop.f32.mrb[0].mxu0
  %v2386 = vadd.f32 %v2225, %v2385
  %v2387 = vpop.f32.mrb[0].mxu0
  %2388 = vmatprep.mubr.bf16.mxu0 %v1333
  %2389 = vmatmul.mubr.bf16.gmra.mrb[0].mxu0 %v1332
  %v2390 = vpop.f32.mrb[0].mxu0
  %v2391 = vadd.f32 %v2230, %v2390
  %v2392 = vpop.f32.mrb[0].mxu0
  %v2393 = vpop.f32.mrb[0].mxu0
  %v2394 = vadd.f32 %v2233, %v2393
  %v2395 = vpop.f32.mrb[0].mxu0
  %2396 = vmatprep.mubr.bf16.mxu0 %v1342
  %2397 = vmatmul.mubr.bf16.gmra.mrb[0].mxu0 %v1341
  %v2398 = vpop.f32.mrb[0].mxu0
  %v2399 = vadd.f32 %v2238, %v2398
  %v2400 = vpop.f32.mrb[0].mxu0
  %v2401 = vpop.f32.mrb[0].mxu0
  %v2402 = vadd.f32 %v2241, %v2401
  %v2403 = vpop.f32.mrb[0].mxu0
  %2404 = vdwg.mxu0
  %2405 = vmatprep.subr.bf16.mxu0 0
  %2406 = vmatpush1.bf16.msra.mxu0 %v1826
  %2407 = vmatprep.subr.bf16.mxu0 0
  %2408 = vmatpush1.bf16.msra.mxu0 %v1827
  %2409 = vmatprep.subr.bf16.mxu0 0
  %2410 = vmatpush1.bf16.msra.mxu0 %v1828
  %2411 = vmatprep.subr.bf16.mxu0 0
  %2412 = vmatpush1.bf16.msra.mxu0 %v1829
  %2413 = vmatprep.subr.bf16.mxu0 0
  %2414 = vmatpush1.bf16.msra.mxu0 %v1830
  %2415 = vmatprep.subr.bf16.mxu0 0
  %2416 = vmatpush1.bf16.msra.mxu0 %v1831
  %2417 = vmatprep.subr.bf16.mxu0 0
  %2418 = vmatpush1.bf16.msra.mxu0 %v1832
  %2419 = vmatprep.subr.bf16.mxu0 0
  %2420 = vmatpush1.bf16.msra.mxu0 %v1833
  %2421 = vmatprep.subr.bf16.mxu0 0
  %2422 = vmatpush1.bf16.msra.mxu0 %v1834
  %2423 = vmatprep.subr.bf16.mxu0 0
  %2424 = vmatpush1.bf16.msra.mxu0 %v1835
  %2425 = vmatprep.subr.bf16.mxu0 0
  %2426 = vmatpush1.bf16.msra.mxu0 %v1836
  %2427 = vmatprep.subr.bf16.mxu0 0
  %2428 = vmatpush1.bf16.msra.mxu0 %v1837
  %2429 = vmatprep.subr.bf16.mxu0 0
  %2430 = vmatpush1.bf16.msra.mxu0 %v1838
  %2431 = vmatprep.subr.bf16.mxu0 0
  %2432 = vmatpush1.bf16.msra.mxu0 %v1839
  %2433 = vmatprep.subr.bf16.mxu0 0
  %2434 = vmatpush1.bf16.msra.mxu0 %v1840
  %2435 = vmatprep.subr.bf16.mxu0 0
  %2436 = vmatpush1.bf16.msra.mxu0 %v1841
  %2437 = vmatprep.mubr.bf16.mxu0 %v1209
  %2438 = vmatmul.mubr.bf16.gmra.mrb[0].mxu0 %v1208
  %v2439 = vpop.f32.mrb[0].mxu0
  %v2440 = vadd.f32 %v2279, %v2439
  %v2441 = vpop.f32.mrb[0].mxu0
  %v2442 = vpop.f32.mrb[0].mxu0
  %v2443 = vadd.f32 %v2282, %v2442
  %v2444 = vpop.f32.mrb[0].mxu0
  %2445 = vmatprep.mubr.bf16.mxu0 %v1218
  %2446 = vmatmul.mubr.bf16.gmra.mrb[0].mxu0 %v1217
  %v2447 = vpop.f32.mrb[0].mxu0
  %v2448 = vadd.f32 %v2287, %v2447
  %v2449 = vpop.f32.mrb[0].mxu0
  %v2450 = vpop.f32.mrb[0].mxu0
  %v2451 = vadd.f32 %v2290, %v2450
  %v2452 = vpop.f32.mrb[0].mxu0
  %2453 = vmatprep.mubr.bf16.mxu0 %v1227
  %2454 = vmatmul.mubr.bf16.gmra.mrb[0].mxu0 %v1226
  %v2455 = vpop.f32.mrb[0].mxu0
  %v2456 = vadd.f32 %v2295, %v2455
  %v2457 = vpop.f32.mrb[0].mxu0
  %v2458 = vpop.f32.mrb[0].mxu0
  %v2459 = vadd.f32 %v2298, %v2458
  %v2460 = vpop.f32.mrb[0].mxu0
  %2461 = vmatprep.mubr.bf16.mxu0 %v1236
  %2462 = vmatmul.mubr.bf16.gmra.mrb[0].mxu0 %v1235
  %v2463 = vpop.f32.mrb[0].mxu0
  %v2464 = vadd.f32 %v2303, %v2463
  %v2465 = vpop.f32.mrb[0].mxu0
  %v2466 = vpop.f32.mrb[0].mxu0
  %v2467 = vadd.f32 %v2306, %v2466
  %v2468 = vpop.f32.mrb[0].mxu0
  %2469 = vmatprep.mubr.bf16.mxu0 %v1245
  %2470 = vmatmul.mubr.bf16.gmra.mrb[0].mxu0 %v1244
  %v2471 = vpop.f32.mrb[0].mxu0
  %v2472 = vadd.f32 %v2311, %v2471
  %v2473 = vpop.f32.mrb[0].mxu0
  %v2474 = vpop.f32.mrb[0].mxu0
  %v2475 = vadd.f32 %v2314, %v2474
  %v2476 = vpop.f32.mrb[0].mxu0
  %2477 = vmatprep.mubr.bf16.mxu0 %v1254
  %2478 = vmatmul.mubr.bf16.gmra.mrb[0].mxu0 %v1253
  %v2479 = vpop.f32.mrb[0].mxu0
  %v2480 = vadd.f32 %v2319, %v2479
  %v2481 = vpop.f32.mrb[0].mxu0
  %v2482 = vpop.f32.mrb[0].mxu0
  %v2483 = vadd.f32 %v2322, %v2482
  %v2484 = vpop.f32.mrb[0].mxu0
  %2485 = vmatprep.mubr.bf16.mxu0 %v1263
  %2486 = vmatmul.mubr.bf16.gmra.mrb[0].mxu0 %v1262
  %v2487 = vpop.f32.mrb[0].mxu0
  %v2488 = vadd.f32 %v2327, %v2487
  %v2489 = vpop.f32.mrb[0].mxu0
  %v2490 = vpop.f32.mrb[0].mxu0
  %v2491 = vadd.f32 %v2330, %v2490
  %v2492 = vpop.f32.mrb[0].mxu0
  %2493 = vmatprep.mubr.bf16.mxu0 %v1272
  %2494 = vmatmul.mubr.bf16.gmra.mrb[0].mxu0 %v1271
  %v2495 = vpop.f32.mrb[0].mxu0
  %v2496 = vadd.f32 %v2335, %v2495
  %v2497 = vpop.f32.mrb[0].mxu0
  %v2498 = vpop.f32.mrb[0].mxu0
  %v2499 = vadd.f32 %v2338, %v2498
  %v2500 = vpop.f32.mrb[0].mxu0
  %2501 = vmatprep.mubr.bf16.mxu0 %v1281
  %2502 = vmatmul.mubr.bf16.gmra.mrb[0].mxu0 %v1280
  %v2503 = vpop.f32.mrb[0].mxu0
  %v2504 = vadd.f32 %v2343, %v2503
  %v2505 = vpop.f32.mrb[0].mxu0
  %v2506 = vpop.f32.mrb[0].mxu0
  %v2507 = vadd.f32 %v2346, %v2506
  %v2508 = vpop.f32.mrb[0].mxu0
  %2509 = vmatprep.mubr.bf16.mxu0 %v1290
  %2510 = vmatmul.mubr.bf16.gmra.mrb[0].mxu0 %v1289
  %v2511 = vpop.f32.mrb[0].mxu0
  %v2512 = vadd.f32 %v2351, %v2511
  %v2513 = vpop.f32.mrb[0].mxu0
  %v2514 = vpop.f32.mrb[0].mxu0
  %v2515 = vadd.f32 %v2354, %v2514
  %v2516 = vpop.f32.mrb[0].mxu0
  %2517 = vmatprep.mubr.bf16.mxu0 %v1299
  %2518 = vmatmul.mubr.bf16.gmra.mrb[0].mxu0 %v1298
  %v2519 = vpop.f32.mrb[0].mxu0
  %v2520 = vadd.f32 %v2359, %v2519
  %v2521 = vpop.f32.mrb[0].mxu0
  %v2522 = vpop.f32.mrb[0].mxu0
  %v2523 = vadd.f32 %v2362, %v2522
  %v2524 = vpop.f32.mrb[0].mxu0
  %2525 = vmatprep.mubr.bf16.mxu0 %v1308
  %2526 = vmatmul.mubr.bf16.gmra.mrb[0].mxu0 %v1307
  %v2527 = vpop.f32.mrb[0].mxu0
  %v2528 = vadd.f32 %v2367, %v2527
  %v2529 = vpop.f32.mrb[0].mxu0
  %v2530 = vpop.f32.mrb[0].mxu0
  %v2531 = vadd.f32 %v2370, %v2530
  %v2532 = vpop.f32.mrb[0].mxu0
  %2533 = vmatprep.mubr.bf16.mxu0 %v1317
  %2534 = vmatmul.mubr.bf16.gmra.mrb[0].mxu0 %v1316
  %v2535 = vpop.f32.mrb[0].mxu0
  %v2536 = vadd.f32 %v2375, %v2535
  %v2537 = vpop.f32.mrb[0].mxu0
  %v2538 = vpop.f32.mrb[0].mxu0
  %v2539 = vadd.f32 %v2378, %v2538
  %v2540 = vpop.f32.mrb[0].mxu0
  %2541 = vmatprep.mubr.bf16.mxu0 %v1326
  %2542 = vmatmul.mubr.bf16.gmra.mrb[0].mxu0 %v1325
  %v2543 = vpop.f32.mrb[0].mxu0
  %v2544 = vadd.f32 %v2383, %v2543
  %v2545 = vpop.f32.mrb[0].mxu0
  %v2546 = vpop.f32.mrb[0].mxu0
  %v2547 = vadd.f32 %v2386, %v2546
  %v2548 = vpop.f32.mrb[0].mxu0
  %2549 = vmatprep.mubr.bf16.mxu0 %v1335
  %2550 = vmatmul.mubr.bf16.gmra.mrb[0].mxu0 %v1334
  %v2551 = vpop.f32.mrb[0].mxu0
  %v2552 = vadd.f32 %v2391, %v2551
  %v2553 = vpop.f32.mrb[0].mxu0
  %v2554 = vpop.f32.mrb[0].mxu0
  %v2555 = vadd.f32 %v2394, %v2554
  %v2556 = vpop.f32.mrb[0].mxu0
  %2557 = vmatprep.mubr.bf16.mxu0 %v1344
  %2558 = vmatmul.mubr.bf16.gmra.mrb[0].mxu0 %v1343
  %v2559 = vpop.f32.mrb[0].mxu0
  %v2560 = vadd.f32 %v2399, %v2559
  %v2561 = vpop.f32.mrb[0].mxu0
  %v2562 = vpop.f32.mrb[0].mxu0
  %v2563 = vadd.f32 %v2402, %v2562
  %v2564 = vpop.f32.mrb[0].mxu0
  %2565 = vdwg.mxu0
  %2566 = vmatprep.subr.bf16.mxu0 0
  %2567 = vmatpush1.bf16.msra.mxu0 %v1842
  %2568 = vmatprep.subr.bf16.mxu0 0
  %2569 = vmatpush1.bf16.msra.mxu0 %v1843
  %2570 = vmatprep.subr.bf16.mxu0 0
  %2571 = vmatpush1.bf16.msra.mxu0 %v1844
  %2572 = vmatprep.subr.bf16.mxu0 0
  %2573 = vmatpush1.bf16.msra.mxu0 %v1845
  %2574 = vmatprep.subr.bf16.mxu0 0
  %2575 = vmatpush1.bf16.msra.mxu0 %v1846
  %2576 = vmatprep.subr.bf16.mxu0 0
  %2577 = vmatpush1.bf16.msra.mxu0 %v1847
  %2578 = vmatprep.subr.bf16.mxu0 0
  %2579 = vmatpush1.bf16.msra.mxu0 %v1848
  %2580 = vmatprep.subr.bf16.mxu0 0
  %2581 = vmatpush1.bf16.msra.mxu0 %v1849
  %2582 = vmatprep.subr.bf16.mxu0 0
  %2583 = vmatpush1.bf16.msra.mxu0 0
  %2584 = vmatprep.subr.bf16.mxu0 0
  %2585 = vmatpush1.bf16.msra.mxu0 0
  %2586 = vmatprep.subr.bf16.mxu0 0
  %2587 = vmatpush1.bf16.msra.mxu0 0
  %2588 = vmatprep.subr.bf16.mxu0 0
  %2589 = vmatpush1.bf16.msra.mxu0 0
  %2590 = vmatprep.subr.bf16.mxu0 0
  %2591 = vmatpush1.bf16.msra.mxu0 0
  %2592 = vmatprep.subr.bf16.mxu0 0
  %2593 = vmatpush1.bf16.msra.mxu0 0
  %2594 = vmatprep.subr.bf16.mxu0 0
  %2595 = vmatpush1.bf16.msra.mxu0 0
  %2596 = vmatprep.subr.bf16.mxu0 0
  %2597 = vmatpush1.bf16.msra.mxu0 0
  %2598 = vmatprep.mubr.bf16.mxu0 0
  %2599 = vmatmul.mubr.bf16.gmra.mrb[0].mxu0 %v1210
  %v2600 = vpop.f32.mrb[0].mxu0
  %v2601 = vadd.f32 %v2440, %v2600
  %v2602 = vpop.f32.mrb[0].mxu0
  %v2603 = vpop.f32.mrb[0].mxu0
  %v2604 = vadd.f32 %v2443, %v2603
  %v2605 = vpop.f32.mrb[0].mxu0
  %2606 = vmatprep.mubr.bf16.mxu0 0
  %2607 = vmatmul.mubr.bf16.gmra.mrb[0].mxu0 %v1219
  %v2608 = vpop.f32.mrb[0].mxu0
  %v2609 = vadd.f32 %v2448, %v2608
  %v2610 = vpop.f32.mrb[0].mxu0
  %v2611 = vpop.f32.mrb[0].mxu0
  %v2612 = vadd.f32 %v2451, %v2611
  %v2613 = vpop.f32.mrb[0].mxu0
  %2614 = vmatprep.mubr.bf16.mxu0 0
  %2615 = vmatmul.mubr.bf16.gmra.mrb[0].mxu0 %v1228
  %v2616 = vpop.f32.mrb[0].mxu0
  %v2617 = vadd.f32 %v2456, %v2616
  %v2618 = vpop.f32.mrb[0].mxu0
  %v2619 = vpop.f32.mrb[0].mxu0
  %v2620 = vadd.f32 %v2459, %v2619
  %v2621 = vpop.f32.mrb[0].mxu0
  %2622 = vmatprep.mubr.bf16.mxu0 0
  %2623 = vmatmul.mubr.bf16.gmra.mrb[0].mxu0 %v1237
  %v2624 = vpop.f32.mrb[0].mxu0
  %v2625 = vadd.f32 %v2464, %v2624
  %v2626 = vpop.f32.mrb[0].mxu0
  %v2627 = vpop.f32.mrb[0].mxu0
  %v2628 = vadd.f32 %v2467, %v2627
  %v2629 = vpop.f32.mrb[0].mxu0
  %2630 = vmatprep.mubr.bf16.mxu0 0
  %2631 = vmatmul.mubr.bf16.gmra.mrb[0].mxu0 %v1246
  %v2632 = vpop.f32.mrb[0].mxu0
  %v2633 = vadd.f32 %v2472, %v2632
  %v2634 = vpop.f32.mrb[0].mxu0
  %v2635 = vpop.f32.mrb[0].mxu0
  %v2636 = vadd.f32 %v2475, %v2635
  %v2637 = vpop.f32.mrb[0].mxu0
  %2638 = vmatprep.mubr.bf16.mxu0 0
  %2639 = vmatmul.mubr.bf16.gmra.mrb[0].mxu0 %v1255
  %v2640 = vpop.f32.mrb[0].mxu0
  %v2641 = vadd.f32 %v2480, %v2640
  %v2642 = vpop.f32.mrb[0].mxu0
  %v2643 = vpop.f32.mrb[0].mxu0
  %v2644 = vadd.f32 %v2483, %v2643
  %v2645 = vpop.f32.mrb[0].mxu0
  %2646 = vmatprep.mubr.bf16.mxu0 0
  %2647 = vmatmul.mubr.bf16.gmra.mrb[0].mxu0 %v1264
  %v2648 = vpop.f32.mrb[0].mxu0
  %v2649 = vadd.f32 %v2488, %v2648
  %v2650 = vpop.f32.mrb[0].mxu0
  %v2651 = vpop.f32.mrb[0].mxu0
  %v2652 = vadd.f32 %v2491, %v2651
  %v2653 = vpop.f32.mrb[0].mxu0
  %2654 = vmatprep.mubr.bf16.mxu0 0
  %2655 = vmatmul.mubr.bf16.gmra.mrb[0].mxu0 %v1273
  %v2656 = vpop.f32.mrb[0].mxu0
  %v2657 = vadd.f32 %v2496, %v2656
  %v2658 = vpop.f32.mrb[0].mxu0
  %v2659 = vpop.f32.mrb[0].mxu0
  %v2660 = vadd.f32 %v2499, %v2659
  %v2661 = vpop.f32.mrb[0].mxu0
  %2662 = vmatprep.mubr.bf16.mxu0 0
  %2663 = vmatmul.mubr.bf16.gmra.mrb[0].mxu0 %v1282
  %v2664 = vpop.f32.mrb[0].mxu0
  %v2665 = vadd.f32 %v2504, %v2664
  %v2666 = vpop.f32.mrb[0].mxu0
  %v2667 = vpop.f32.mrb[0].mxu0
  %v2668 = vadd.f32 %v2507, %v2667
  %v2669 = vpop.f32.mrb[0].mxu0
  %2670 = vmatprep.mubr.bf16.mxu0 0
  %2671 = vmatmul.mubr.bf16.gmra.mrb[0].mxu0 %v1291
  %v2672 = vpop.f32.mrb[0].mxu0
  %v2673 = vadd.f32 %v2512, %v2672
  %v2674 = vpop.f32.mrb[0].mxu0
  %v2675 = vpop.f32.mrb[0].mxu0
  %v2676 = vadd.f32 %v2515, %v2675
  %v2677 = vpop.f32.mrb[0].mxu0
  %2678 = vmatprep.mubr.bf16.mxu0 0
  %2679 = vmatmul.mubr.bf16.gmra.mrb[0].mxu0 %v1300
  %v2680 = vpop.f32.mrb[0].mxu0
  %v2681 = vadd.f32 %v2520, %v2680
  %v2682 = vpop.f32.mrb[0].mxu0
  %v2683 = vpop.f32.mrb[0].mxu0
  %v2684 = vadd.f32 %v2523, %v2683
  %v2685 = vpop.f32.mrb[0].mxu0
  %2686 = vmatprep.mubr.bf16.mxu0 0
  %2687 = vmatmul.mubr.bf16.gmra.mrb[0].mxu0 %v1309
  %v2688 = vpop.f32.mrb[0].mxu0
  %v2689 = vadd.f32 %v2528, %v2688
  %v2690 = vpop.f32.mrb[0].mxu0
  %v2691 = vpop.f32.mrb[0].mxu0
  %v2692 = vadd.f32 %v2531, %v2691
  %v2693 = vpop.f32.mrb[0].mxu0
  %2694 = vmatprep.mubr.bf16.mxu0 0
  %2695 = vmatmul.mubr.bf16.gmra.mrb[0].mxu0 %v1318
  %v2696 = vpop.f32.mrb[0].mxu0
  %v2697 = vadd.f32 %v2536, %v2696
  %v2698 = vpop.f32.mrb[0].mxu0
  %v2699 = vpop.f32.mrb[0].mxu0
  %v2700 = vadd.f32 %v2539, %v2699
  %v2701 = vpop.f32.mrb[0].mxu0
  %2702 = vmatprep.mubr.bf16.mxu0 0
  %2703 = vmatmul.mubr.bf16.gmra.mrb[0].mxu0 %v1327
  %v2704 = vpop.f32.mrb[0].mxu0
  %v2705 = vadd.f32 %v2544, %v2704
  %v2706 = vpop.f32.mrb[0].mxu0
  %v2707 = vpop.f32.mrb[0].mxu0
  %v2708 = vadd.f32 %v2547, %v2707
  %v2709 = vpop.f32.mrb[0].mxu0
  %2710 = vmatprep.mubr.bf16.mxu0 0
  %2711 = vmatmul.mubr.bf16.gmra.mrb[0].mxu0 %v1336
  %v2712 = vpop.f32.mrb[0].mxu0
  %v2713 = vadd.f32 %v2552, %v2712
  %v2714 = vpop.f32.mrb[0].mxu0
  %v2715 = vpop.f32.mrb[0].mxu0
  %v2716 = vadd.f32 %v2555, %v2715
  %v2717 = vpop.f32.mrb[0].mxu0
  %2718 = vmatprep.mubr.bf16.mxu0 0
  %2719 = vmatmul.mubr.bf16.gmra.mrb[0].mxu0 %v1345
  %v2720 = vpop.f32.mrb[0].mxu0
  %v2721 = vadd.f32 %v2560, %v2720
  %v2722 = vpop.f32.mrb[0].mxu0
  %v2723 = vpop.f32.mrb[0].mxu0
  %v2724 = vadd.f32 %v2563, %v2723
  %v2725 = vpop.f32.mrb[0].mxu0
  %2726 = vdwg.mxu0
  %v2727 = vmax.f32 %v2601, %v2617
  %v2728 = vmax.f32 %v2604, %v2620
  %v2729 = vmax.f32 %v2609, %v2625
  %v2730 = vmax.f32 %v2612, %v2628
  %v2731 = vmax.f32 %v2727, %v2633
  %v2732 = vmax.f32 %v2728, %v2636
  %v2733 = vmax.f32 %v2729, %v2641
  %v2734 = vmax.f32 %v2730, %v2644
  %v2735 = vmax.f32 %v2731, %v2649
  %v2736 = vmax.f32 %v2732, %v2652
  %v2737 = vmax.f32 %v2733, %v2657
  %v2738 = vmax.f32 %v2734, %v2660
  %v2739 = vmax.f32 %v2735, %v2665
  %v2740 = vmax.f32 %v2736, %v2668
  %v2741 = vmax.f32 %v2737, %v2673
  %v2742 = vmax.f32 %v2738, %v2676
  %v2743 = vmax.f32 %v2739, %v2681
  %v2744 = vmax.f32 %v2740, %v2684
  %v2745 = vmax.f32 %v2741, %v2689
  %v2746 = vmax.f32 %v2742, %v2692
  %v2747 = vmax.f32 %v2743, %v2697
  %v2748 = vmax.f32 %v2744, %v2700
  %v2749 = vmax.f32 %v2745, %v2705
  %v2750 = vmax.f32 %v2746, %v2708
  %v2751 = vmax.f32 %v2747, %v2713
  %v2752 = vmax.f32 %v2748, %v2716
  %v2753 = vmax.f32 %v2749, %v2721
  %v2754 = vmax.f32 %v2750, %v2724
  %v2755 = vmax.f32 %v2751, %v2752
  %v2756 = vmax.f32 %v2753, %v2754
  %v2757 = vmax.f32 %v2755, %v2756
  %v2758 = vrot.slane %v2757, 4
  %v2759 = vmax.f32 %v2757, %v2758
  %v2760 = vrot.slane %v2759, 2
  %v2761 = vmax.f32 %v2759, %v2760
  %v2762 = vrot.slane %v2761, 1
  %v2763 = vmax.f32 %v2761, %v2762
  %v2764 = vadd.f32 %v2601, %v2604
  %v2765 = vadd.f32 %v2764, %v2609
  %v2766 = vadd.f32 %v2765, %v2612
  %v2767 = vadd.f32 %v2766, %v2617
  %v2768 = vadd.f32 %v2767, %v2620
  %v2769 = vadd.f32 %v2768, %v2625
  %v2770 = vadd.f32 %v2769, %v2628
  %v2771 = vadd.f32 %v2770, %v2633
  %v2772 = vadd.f32 %v2771, %v2636
  %v2773 = vadd.f32 %v2772, %v2641
  %v2774 = vadd.f32 %v2773, %v2644
  %v2775 = vadd.f32 %v2774, %v2649
  %v2776 = vadd.f32 %v2775, %v2652
  %v2777 = vadd.f32 %v2776, %v2657
  %v2778 = vadd.f32 %v2777, %v2660
  %v2779 = vadd.f32 %v2778, %v2665
  %v2780 = vadd.f32 %v2779, %v2668
  %v2781 = vadd.f32 %v2780, %v2673
  %v2782 = vadd.f32 %v2781, %v2676
  %v2783 = vadd.f32 %v2782, %v2681
  %v2784 = vadd.f32 %v2783, %v2684
  %v2785 = vadd.f32 %v2784, %v2689
  %v2786 = vadd.f32 %v2785, %v2692
  %v2787 = vadd.f32 %v2786, %v2697
  %v2788 = vadd.f32 %v2787, %v2700
  %v2789 = vadd.f32 %v2788, %v2705
  %v2790 = vadd.f32 %v2789, %v2708
  %v2791 = vadd.f32 %v2790, %v2713
  %v2792 = vadd.f32 %v2791, %v2716
  %v2793 = vadd.f32 %v2792, %v2721
  %v2794 = vadd.f32 %v2793, %v2724
  %v2795 = vrot.slane %v2794, 4
  %v2796 = vadd.f32 %v2794, %v2795
  %v2797 = vrot.slane %v2796, 2
  %v2798 = vadd.f32 %v2796, %v2797
  %v2799 = vrot.slane %v2798, 1
  %v2800 = vadd.f32 %v2798, %v2799
  %v2801 = vmul.f32 %v2800, 0.00390625
  %v2802 = vld [vmem:[%s2] sm:$0xff]
  %v2803 = vld [vmem:[%s2 + $0x8] sm:$0xff]
  %v2804 = vld [vmem:[%s2 + $0x10] sm:$0xff]
  %v2805 = vld [vmem:[%s2 + $0x18] sm:$0xff]
  %v2806 = vld [vmem:[%s2 + $0x20] sm:$0xff]
  %v2807 = vld [vmem:[%s2 + $0x28] sm:$0xff]
  %v2808 = vld [vmem:[%s2 + $0x30] sm:$0xff]
  %v2809 = vld [vmem:[%s2 + $0x38] sm:$0xff]
  %v2810 = vld [vmem:[%s2 + $0x40] sm:$0xff]
  %v2811 = vld [vmem:[%s2 + $0x48] sm:$0xff]
  %v2812 = vld [vmem:[%s2 + $0x50] sm:$0xff]
  %v2813 = vld [vmem:[%s2 + $0x58] sm:$0xff]
  %v2814 = vld [vmem:[%s2 + $0x60] sm:$0xff]
  %v2815 = vld [vmem:[%s2 + $0x68] sm:$0xff]
  %v2816 = vld [vmem:[%s2 + $0x70] sm:$0xff]
  %v2817 = vld [vmem:[%s2 + $0x78] sm:$0xff]
  %v2818 = vld [vmem:[%s2 + $0x80] sm:$0xff]
  %v2819 = vld [vmem:[%s2 + $0x88] sm:$0xff]
  %v2820 = vld [vmem:[%s2 + $0x90] sm:$0xff]
  %v2821 = vld [vmem:[%s2 + $0x98] sm:$0xff]
  %v2822 = vld [vmem:[%s2 + $0xa0] sm:$0xff]
  %v2823 = vld [vmem:[%s2 + $0xa8] sm:$0xff]
  %v2824 = vld [vmem:[%s2 + $0xb0] sm:$0xff]
  %v2825 = vld [vmem:[%s2 + $0xb8] sm:$0xff]
  %v2826 = vld [vmem:[%s2 + $0xc0] sm:$0xff]
  %v2827 = vld [vmem:[%s2 + $0xc8] sm:$0xff]
  %v2828 = vld [vmem:[%s2 + $0xd0] sm:$0xff]
  %v2829 = vld [vmem:[%s2 + $0xd8] sm:$0xff]
  %v2830 = vld [vmem:[%s2 + $0xe0] sm:$0xff]
  %v2831 = vld [vmem:[%s2 + $0xe8] sm:$0xff]
  %v2832 = vld [vmem:[%s2 + $0xf0] sm:$0xff]
  %v2833 = vld [vmem:[%s2 + $0xf8] sm:$0xff]
  %2834 = vmatprep.subr.mxu0 0.0
  %2835 = vmatpush1.msra.mxu0 %v2802
  %2836 = vmatprep.subr.mxu0 0.0
  %2837 = vmatpush1.msra.mxu0 %v2803
  %2838 = vmatprep.subr.mxu0 0.0
  %2839 = vmatpush1.msra.mxu0 %v2804
  %2840 = vmatprep.subr.mxu0 0.0
  %2841 = vmatpush1.msra.mxu0 %v2805
  %2842 = vmatprep.subr.mxu0 0.0
  %2843 = vmatpush1.msra.mxu0 %v2806
  %2844 = vmatprep.subr.mxu0 0.0
  %2845 = vmatpush1.msra.mxu0 %v2807
  %2846 = vmatprep.subr.mxu0 0.0
  %2847 = vmatpush1.msra.mxu0 %v2808
  %2848 = vmatprep.subr.mxu0 0.0
  %2849 = vmatpush1.msra.mxu0 %v2809
  %2850 = vmatprep.subr.mxu0 0.0
  %2851 = vmatpush1.msra.mxu0 %v2810
  %2852 = vmatprep.subr.mxu0 0.0
  %2853 = vmatpush1.msra.mxu0 %v2811
  %2854 = vmatprep.subr.mxu0 0.0
  %2855 = vmatpush1.msra.mxu0 %v2812
  %2856 = vmatprep.subr.mxu0 0.0
  %2857 = vmatpush1.msra.mxu0 %v2813
  %2858 = vmatprep.subr.mxu0 0.0
  %2859 = vmatpush1.msra.mxu0 %v2814
  %2860 = vmatprep.subr.mxu0 0.0
  %2861 = vmatpush1.msra.mxu0 %v2815
  %2862 = vmatprep.subr.mxu0 0.0
  %2863 = vmatpush1.msra.mxu0 %v2816
  %2864 = vmatprep.subr.mxu0 0.0
  %2865 = vmatpush1.msra.mxu0 %v2817
  %2866 = vmatprep.subr.mxu0 0.0
  %2867 = vmatpush1.msra.mxu0 %v2818
  %2868 = vmatprep.subr.mxu0 0.0
  %2869 = vmatpush1.msra.mxu0 %v2819
  %2870 = vmatprep.subr.mxu0 0.0
  %2871 = vmatpush1.msra.mxu0 %v2820
  %2872 = vmatprep.subr.mxu0 0.0
  %2873 = vmatpush1.msra.mxu0 %v2821
  %2874 = vmatprep.subr.mxu0 0.0
  %2875 = vmatpush1.msra.mxu0 %v2822
  %2876 = vmatprep.subr.mxu0 0.0
  %2877 = vmatpush1.msra.mxu0 %v2823
  %2878 = vmatprep.subr.mxu0 0.0
  %2879 = vmatpush1.msra.mxu0 %v2824
  %2880 = vmatprep.subr.mxu0 0.0
  %2881 = vmatpush1.msra.mxu0 %v2825
  %2882 = vmatprep.subr.mxu0 0.0
  %2883 = vmatpush1.msra.mxu0 %v2826
  %2884 = vmatprep.subr.mxu0 0.0
  %2885 = vmatpush1.msra.mxu0 %v2827
  %2886 = vmatprep.subr.mxu0 0.0
  %2887 = vmatpush1.msra.mxu0 %v2828
  %2888 = vmatprep.subr.mxu0 0.0
  %2889 = vmatpush1.msra.mxu0 %v2829
  %2890 = vmatprep.subr.mxu0 0.0
  %2891 = vmatpush1.msra.mxu0 %v2830
  %2892 = vmatprep.subr.mxu0 0.0
  %2893 = vmatpush1.msra.mxu0 %v2831
  %2894 = vmatprep.subr.mxu0 0.0
  %2895 = vmatpush1.msra.mxu0 %v2832
  %2896 = vmatprep.subr.mxu0 0.0
  %2897 = vmatpush1.msra.mxu0 %v2833
  %2898 = vmatprep.mubr.f32.mxu0 %v2801
  %2899 = vmatmul.mubr.f32.gmra.mrb[0].mxu0 %v2763
  %v2900 = vpop.f32.mrb[0].mxu0
  %v2901 = vadd.f32 0.0, %v2900
  %v2902 = vpop.f32.mrb[0].mxu0
  %2903 = vdwg.mxu0
  %v2904 = vxor.u32 %v2901, 2147483648
  %v2905 = vmul.f32 %v2904, 1.442695
  %v2906 = vpow.pop %v2905
  %v2907 = vadd.f32 %v2906, 1.0
  %v2908 = vrcp.pop %v2907
  %v2909 = vmul.f32 1.0, %v2908
  %v2910 = vlaneseq
  %v2911 = vshrl.u32 %v2910, 7
  %v2912 = vsub.s32 0, %v2911
  %v2913 = vrot.slane %v2909, %v2912
  %v2914 = vmul.f32 %v15, %v2913
  %v2915 = vmul.f32 %v16, %v2913
  %v2916 = vmul.f32 %v17, %v2913
  %v2917 = vmul.f32 %v18, %v2913
  %v2918 = vmul.f32 %v19, %v2913
  %v2919 = vmul.f32 %v20, %v2913
  %v2920 = vmul.f32 %v21, %v2913
  %v2921 = vmul.f32 %v22, %v2913
  %v2922 = vmul.f32 %v23, %v2913
  %v2923 = vmul.f32 %v24, %v2913
  %v2924 = vmul.f32 %v25, %v2913
  %v2925 = vmul.f32 %v26, %v2913
  %v2926 = vmul.f32 %v27, %v2913
  %v2927 = vmul.f32 %v28, %v2913
  %v2928 = vmul.f32 %v29, %v2913
  %v2929 = vmul.f32 %v30, %v2913
  %v2930 = vmul.f32 %v31, %v2913
  %v2931 = vmul.f32 %v32, %v2913
  %v2932 = vmul.f32 %v33, %v2913
  %v2933 = vmul.f32 %v34, %v2913
  %v2934 = vmul.f32 %v35, %v2913
  %v2935 = vmul.f32 %v36, %v2913
  %v2936 = vmul.f32 %v37, %v2913
  %v2937 = vmul.f32 %v38, %v2913
  %v2938 = vmul.f32 %v39, %v2913
  %v2939 = vmul.f32 %v40, %v2913
  %v2940 = vmul.f32 %v41, %v2913
  %v2941 = vmul.f32 %v42, %v2913
  %v2942 = vmul.f32 %v43, %v2913
  %v2943 = vmul.f32 %v44, %v2913
  %v2944 = vmul.f32 %v45, %v2913
  %v2945 = vmul.f32 %v46, %v2913
  %2946 = vst [vmem:[%s3] sm:$0xff] %v2914
  %2947 = vst [vmem:[%s3 + $0x8] sm:$0xff] %v2915
  %2948 = vst [vmem:[%s3 + $0x10] sm:$0xff] %v2916
  %2949 = vst [vmem:[%s3 + $0x18] sm:$0xff] %v2917
  %2950 = vst [vmem:[%s3 + $0x20] sm:$0xff] %v2918
  %2951 = vst [vmem:[%s3 + $0x28] sm:$0xff] %v2919
  %2952 = vst [vmem:[%s3 + $0x30] sm:$0xff] %v2920
  %2953 = vst [vmem:[%s3 + $0x38] sm:$0xff] %v2921
  %2954 = vst [vmem:[%s3 + $0x40] sm:$0xff] %v2922
  %2955 = vst [vmem:[%s3 + $0x48] sm:$0xff] %v2923
  %2956 = vst [vmem:[%s3 + $0x50] sm:$0xff] %v2924
  %2957 = vst [vmem:[%s3 + $0x58] sm:$0xff] %v2925
  %2958 = vst [vmem:[%s3 + $0x60] sm:$0xff] %v2926
  %2959 = vst [vmem:[%s3 + $0x68] sm:$0xff] %v2927
  %2960 = vst [vmem:[%s3 + $0x70] sm:$0xff] %v2928
  %2961 = vst [vmem:[%s3 + $0x78] sm:$0xff] %v2929
  %2962 = vst [vmem:[%s3 + $0x80] sm:$0xff] %v2930
  %2963 = vst [vmem:[%s3 + $0x88] sm:$0xff] %v2931
  %2964 = vst [vmem:[%s3 + $0x90] sm:$0xff] %v2932
  %2965 = vst [vmem:[%s3 + $0x98] sm:$0xff] %v2933
  %2966 = vst [vmem:[%s3 + $0xa0] sm:$0xff] %v2934
  %2967 = vst [vmem:[%s3 + $0xa8] sm:$0xff] %v2935
  %2968 = vst [vmem:[%s3 + $0xb0] sm:$0xff] %v2936
  %2969 = vst [vmem:[%s3 + $0xb8] sm:$0xff] %v2937
  %2970 = vst [vmem:[%s3 + $0xc0] sm:$0xff] %v2938
  %2971 = vst [vmem:[%s3 + $0xc8] sm:$0xff] %v2939
  %2972 = vst [vmem:[%s3 + $0xd0] sm:$0xff] %v2940
  %2973 = vst [vmem:[%s3 + $0xd8] sm:$0xff] %v2941
  %2974 = vst [vmem:[%s3 + $0xe0] sm:$0xff] %v2942
  %2975 = vst [vmem:[%s3 + $0xe8] sm:$0xff] %v2943
  %2976 = vst [vmem:[%s3 + $0xf0] sm:$0xff] %v2944
  %2977 = vst [vmem:[%s3 + $0xf8] sm:$0xff] %v2945
  // Predicated region
  $region14: #{lca_forward.1} parent=0 // pred_check
    _
  $region15: #{lca_forward.1} parent=0 // pred_check_branch
    %2979 = sbr.rel (0) target = $region17
  $region16: #{lca_forward.1} parent=0 // pred_region
    _
  $region17: #{lca_forward.1} parent=0 // pred_fallthru
    _
  // Predicated region
  $region18: #{lca_forward.1} parent=0 // pred_check
    _
  $region19: #{lca_forward.1} parent=0 // pred_check_branch
    %2981 = sbr.rel (0) target = $region21
  $region20: #{lca_forward.1} parent=0 // pred_region
    _
  $region21: #{lca_forward.1} parent=0 // pred_fallthru
    _

</llo_original>
